<compile_context>
chip_gen: v5e
topology: v5e:2x2
jax: 0.10.0
libtpu: 0.0.40
codegen_flags: <defaults>
</compile_context>

<pallas_src>
import jax
import jax.numpy as jnp
from jax.experimental import pallas as pl
from jax.experimental.pallas import tpu as pltpu

IMG_SIZE = 28
IN_DIM = IMG_SIZE * IMG_SIZE      # 784
IN_PAD = 896                      # 7 * 128 (zero-padded contraction dim)
H1 = 1024
H2 = 512
OUT_DIM = 10
OUT_PAD = 128                     # lane-dense output width
TB_MAX = 256                      # batch tile (sized comfortably for v7x's 64 MiB VMEM)


def _round_up(x, m):
    return (x + m - 1) // m * m


def mlp_kernel(x_ref, w1_ref, b1_ref, w2_ref, b2_ref, w3_ref, b3_ref, o_ref):
    # fc1 + ReLU (bf16 operands, f32 accumulation on the MXU)
    h1 = jnp.dot(x_ref[...], w1_ref[...], preferred_element_type=jnp.float32)
    h1 = jnp.maximum(h1 + b1_ref[...], 0.0).astype(jnp.bfloat16)
    # fc2 + ReLU
    h2 = jnp.dot(h1, w2_ref[...], preferred_element_type=jnp.float32)
    h2 = jnp.maximum(h2 + b2_ref[...], 0.0).astype(jnp.bfloat16)
    # fc3 (no activation) — lane-dense (128-wide) store; padded cols are exact zeros.
    o_ref[...] = jnp.dot(h2, w3_ref[...], preferred_element_type=jnp.float32) + b3_ref[...]


@jax.jit
def net_forward(x, params):
    """x: (B, 1, 28, 28) (or anything flattening to (B, 784)). Returns (B, 10) f32 logits."""
    w1, b1, w2, b2, w3, b3 = params
    x2d = x.reshape(-1, IN_DIM)
    B = x2d.shape[0]

    # Batch tile: multiple of 8 sublanes, capped at TB_MAX; pad B up to a whole grid.
    TB = min(TB_MAX, _round_up(B, 8))
    B_pad = _round_up(B, TB)

    # Cast activations to bf16 once; zero-pad rows to B_pad and cols 784 -> 896.
    xp = jnp.pad(x2d.astype(jnp.bfloat16), ((0, B_pad - B), (0, IN_PAD - IN_DIM)))

    grid = (B_pad // TB,)

    flops = 2 * B_pad * (IN_PAD * H1 + H1 * H2 + H2 * OUT_PAD)
    bytes_accessed = (
        xp.size * xp.dtype.itemsize
        + w1.size * w1.dtype.itemsize + w2.size * w2.dtype.itemsize
        + w3.size * w3.dtype.itemsize
        + b1.size * b1.dtype.itemsize + b2.size * b2.dtype.itemsize
        + b3.size * b3.dtype.itemsize
        + B_pad * OUT_PAD * 4
    )

    out = pl.pallas_call(
        mlp_kernel,
        out_shape=jax.ShapeDtypeStruct((B_pad, OUT_PAD), jnp.float32),
        grid=grid,
        in_specs=[
            pl.BlockSpec((TB, IN_PAD), lambda i: (i, 0)),    # x tile: pipelined per step
            pl.BlockSpec((IN_PAD, H1), lambda i: (0, 0)),    # weights/biases: VMEM-resident
            pl.BlockSpec((1, H1), lambda i: (0, 0)),
            pl.BlockSpec((H1, H2), lambda i: (0, 0)),
            pl.BlockSpec((1, H2), lambda i: (0, 0)),
            pl.BlockSpec((H2, OUT_PAD), lambda i: (0, 0)),
            pl.BlockSpec((1, OUT_PAD), lambda i: (0, 0)),
        ],
        out_specs=pl.BlockSpec((TB, OUT_PAD), lambda i: (i, 0)),
        compiler_params=pltpu.CompilerParams(
            dimension_semantics=("parallel",),
            vmem_limit_bytes=32 << 20,
        ),
        cost_estimate=pl.CostEstimate(
            flops=flops, transcendentals=0, bytes_accessed=bytes_accessed
        ),
    )(xp, w1, b1, w2, b2, w3, b3)

    return out[:B, :OUT_DIM]


def init_params(key):
    """nn.Linear-style uniform(-1/sqrt(fan_in), 1/sqrt(fan_in)) init.

    Weights are stored (in, out), zero-padded to MXU-friendly shapes, and cast to
    bf16 once here (not per call). Biases stay f32 (tiny, added post-accumulation).
    """
    keys = jax.random.split(key, 6)

    def linear(kw, kb, fan_in, fan_out, pad_in, pad_out):
        bound = 1.0 / jnp.sqrt(jnp.float32(fan_in))
        w = jax.random.uniform(kw, (fan_in, fan_out), jnp.float32, -bound, bound)
        b = jax.random.uniform(kb, (1, fan_out), jnp.float32, -bound, bound)
        wp = jnp.zeros((pad_in, pad_out), jnp.float32).at[:fan_in, :fan_out].set(w)
        bp = jnp.zeros((1, pad_out), jnp.float32).at[:, :fan_out].set(b)
        return wp.astype(jnp.bfloat16), bp

    w1, b1 = linear(keys[0], keys[1], IN_DIM, H1, IN_PAD, H1)
    w2, b2 = linear(keys[2], keys[3], H1, H2, H1, H2)
    w3, b3 = linear(keys[4], keys[5], H2, OUT_DIM, H2, OUT_PAD)
    return (w1, b1, w2, b2, w3, b3)


if __name__ == "__main__":
    key = jax.random.PRNGKey(0)
    k_x, k_p = jax.random.split(key)

    B = 8
    x = jax.random.normal(k_x, (B, 1, IMG_SIZE, IMG_SIZE), jnp.float32)  # NCHW, like PyTorch
    params = init_params(k_p)

    out = net_forward(x, params)
    out = jax.block_until_ready(out)

    # Reference check (plain JAX, replicating the bf16-weight / f32-accumulate math).
    w1, b1, w2, b2, w3, b3 = params
    x2d = x.reshape(-1, IN_DIM).astype(jnp.bfloat16)
    xp = jnp.zeros((B, IN_PAD), jnp.bfloat16).at[:, :IN_DIM].set(x2d)
    h = jnp.maximum(jnp.dot(xp, w1, preferred_element_type=jnp.float32) + b1, 0.0).astype(jnp.bfloat16)
    h = jnp.maximum(jnp.dot(h, w2, preferred_element_type=jnp.float32) + b2, 0.0).astype(jnp.bfloat16)
    ref = (jnp.dot(h, w3, preferred_element_type=jnp.float32) + b3)[:, :OUT_DIM]

    assert out.shape == (B, OUT_DIM)
    assert jnp.allclose(out, ref, atol=1e-2, rtol=1e-2), (
        f"max abs diff {jnp.max(jnp.abs(out - ref))}"
    )

    print("KERNEL_OK")
</pallas_src>

<mosaic_0001>
module attributes {stable_mosaic.version = 11 : i64} {
  func.func @mlp_kernel(%arg0: i32, %arg1: memref<8x896xbf16, #tpu.memory_space<vmem>>, %arg2: memref<896x1024xbf16, #tpu.memory_space<vmem>>, %arg3: memref<1x1024xf32, #tpu.memory_space<vmem>>, %arg4: memref<1024x512xbf16, #tpu.memory_space<vmem>>, %arg5: memref<1x512xf32, #tpu.memory_space<vmem>>, %arg6: memref<512x128xbf16, #tpu.memory_space<vmem>>, %arg7: memref<1x128xf32, #tpu.memory_space<vmem>>, %arg8: memref<8x128xf32, #tpu.memory_space<vmem>>) attributes {dimension_semantics = [#tpu.dimension_semantics<parallel>], iteration_bounds = array<i64: 1>, scalar_prefetch = 0 : i64, scratch_operands = 0 : i64, tpu.core_type = #tpu.core_type<tc>, window_params = [{transform_indices = @transform_0, window_bounds = array<i64: 8, 896>}, {pipeline_mode = #tpu.pipeline_mode<synchronous>, transform_indices = @transform_1, window_bounds = array<i64: 896, 1024>}, {pipeline_mode = #tpu.pipeline_mode<synchronous>, transform_indices = @transform_2, window_bounds = array<i64: 1, 1024>}, {pipeline_mode = #tpu.pipeline_mode<synchronous>, transform_indices = @transform_3, window_bounds = array<i64: 1024, 512>}, {pipeline_mode = #tpu.pipeline_mode<synchronous>, transform_indices = @transform_4, window_bounds = array<i64: 1, 512>}, {pipeline_mode = #tpu.pipeline_mode<synchronous>, transform_indices = @transform_5, window_bounds = array<i64: 512, 128>}, {pipeline_mode = #tpu.pipeline_mode<synchronous>, transform_indices = @transform_6, window_bounds = array<i64: 1, 128>}, {transform_indices = @transform_7, window_bounds = array<i64: 8, 128>}]} {
    %c0 = arith.constant 0 : index
    %c0_0 = arith.constant 0 : index
    %0 = vector.load %arg1[%c0, %c0_0] : memref<8x896xbf16, #tpu.memory_space<vmem>>, vector<8x896xbf16>
    %c0_1 = arith.constant 0 : index
    %c0_2 = arith.constant 0 : index
    %1 = vector.load %arg2[%c0_1, %c0_2] : memref<896x1024xbf16, #tpu.memory_space<vmem>>, vector<896x1024xbf16>
    %cst = arith.constant dense<0.000000e+00> : vector<8x1024xf32>
    %2 = tpu.matmul %0, %1, %cst {dimension_numbers = #tpu.dot_dimension_numbers<[1], [0], [0], [1], [0, 0, 1, 1], [], []>} : vector<8x896xbf16>, vector<896x1024xbf16>, vector<8x1024xf32> -> vector<8x1024xf32>
    %c0_3 = arith.constant 0 : index
    %c0_4 = arith.constant 0 : index
    %3 = vector.load %arg3[%c0_3, %c0_4] : memref<1x1024xf32, #tpu.memory_space<vmem>>, vector<1x1024xf32>
    %4 = vector.broadcast %3 : vector<1x1024xf32> to vector<8x1024xf32>
    %5 = arith.addf %2, %4 : vector<8x1024xf32>
    %cst_5 = arith.constant 0.000000e+00 : f32
    %6 = vector.broadcast %cst_5 : f32 to vector<8x1024xf32>
    %7 = arith.maximumf %5, %6 : vector<8x1024xf32>
    %8 = arith.truncf %7 : vector<8x1024xf32> to vector<8x1024xbf16>
    %c0_6 = arith.constant 0 : index
    %c0_7 = arith.constant 0 : index
    %9 = vector.load %arg4[%c0_6, %c0_7] : memref<1024x512xbf16, #tpu.memory_space<vmem>>, vector<1024x512xbf16>
    %cst_8 = arith.constant dense<0.000000e+00> : vector<8x512xf32>
    %10 = tpu.matmul %8, %9, %cst_8 {dimension_numbers = #tpu.dot_dimension_numbers<[1], [0], [0], [1], [0, 0, 1, 1], [], []>} : vector<8x1024xbf16>, vector<1024x512xbf16>, vector<8x512xf32> -> vector<8x512xf32>
    %c0_9 = arith.constant 0 : index
    %c0_10 = arith.constant 0 : index
    %11 = vector.load %arg5[%c0_9, %c0_10] : memref<1x512xf32, #tpu.memory_space<vmem>>, vector<1x512xf32>
    %12 = vector.broadcast %11 : vector<1x512xf32> to vector<8x512xf32>
    %13 = arith.addf %10, %12 : vector<8x512xf32>
    %cst_11 = arith.constant 0.000000e+00 : f32
    %14 = vector.broadcast %cst_11 : f32 to vector<8x512xf32>
    %15 = arith.maximumf %13, %14 : vector<8x512xf32>
    %16 = arith.truncf %15 : vector<8x512xf32> to vector<8x512xbf16>
    %c0_12 = arith.constant 0 : index
    %c0_13 = arith.constant 0 : index
    %17 = vector.load %arg6[%c0_12, %c0_13] : memref<512x128xbf16, #tpu.memory_space<vmem>>, vector<512x128xbf16>
    %cst_14 = arith.constant dense<0.000000e+00> : vector<8x128xf32>
    %18 = tpu.matmul %16, %17, %cst_14 {dimension_numbers = #tpu.dot_dimension_numbers<[1], [0], [0], [1], [0, 0, 1, 1], [], []>} : vector<8x512xbf16>, vector<512x128xbf16>, vector<8x128xf32> -> vector<8x128xf32>
    %c0_15 = arith.constant 0 : index
    %c0_16 = arith.constant 0 : index
    %19 = vector.load %arg7[%c0_15, %c0_16] : memref<1x128xf32, #tpu.memory_space<vmem>>, vector<1x128xf32>
    %20 = vector.broadcast %19 : vector<1x128xf32> to vector<8x128xf32>
    %21 = arith.addf %18, %20 : vector<8x128xf32>
    %c0_17 = arith.constant 0 : index
    %c0_18 = arith.constant 0 : index
    %22 = vector.load %arg8[%c0_17, %c0_18] : memref<8x128xf32, #tpu.memory_space<vmem>>, vector<8x128xf32>
    tpu.vector_store %arg8[%c0_17, %c0_18], %21 {strides = array<i32>} : memref<8x128xf32, #tpu.memory_space<vmem>>, vector<8x128xf32>,
    return
  }
  func.func @transform_0(%arg0: i32) -> (i32, i32) {
    %c0_i32 = arith.constant 0 : i32
    %c0_i32_0 = arith.constant 0 : i32
    return %arg0, %c0_i32 : i32, i32
  }
  func.func @transform_1(%arg0: i32) -> (i32, i32) {
    %c0_i32 = arith.constant 0 : i32
    %c0_i32_0 = arith.constant 0 : i32
    %c0_i32_1 = arith.constant 0 : i32
    return %c0_i32, %c0_i32_0 : i32, i32
  }
  func.func @transform_2(%arg0: i32) -> (i32, i32) {
    %c0_i32 = arith.constant 0 : i32
    %c0_i32_0 = arith.constant 0 : i32
    %c0_i32_1 = arith.constant 0 : i32
    return %c0_i32, %c0_i32_0 : i32, i32
  }
  func.func @transform_3(%arg0: i32) -> (i32, i32) {
    %c0_i32 = arith.constant 0 : i32
    %c0_i32_0 = arith.constant 0 : i32
    %c0_i32_1 = arith.constant 0 : i32
    return %c0_i32, %c0_i32_0 : i32, i32
  }
  func.func @transform_4(%arg0: i32) -> (i32, i32) {
    %c0_i32 = arith.constant 0 : i32
    %c0_i32_0 = arith.constant 0 : i32
    %c0_i32_1 = arith.constant 0 : i32
    return %c0_i32, %c0_i32_0 : i32, i32
  }
  func.func @transform_5(%arg0: i32) -> (i32, i32) {
    %c0_i32 = arith.constant 0 : i32
    %c0_i32_0 = arith.constant 0 : i32
    %c0_i32_1 = arith.constant 0 : i32
    return %c0_i32, %c0_i32_0 : i32, i32
  }
  func.func @transform_6(%arg0: i32) -> (i32, i32) {
    %c0_i32 = arith.constant 0 : i32
    %c0_i32_0 = arith.constant 0 : i32
    %c0_i32_1 = arith.constant 0 : i32
    return %c0_i32, %c0_i32_0 : i32, i32
  }
  func.func @transform_7(%arg0: i32) -> (i32, i32) {
    %c0_i32 = arith.constant 0 : i32
    %c0_i32_0 = arith.constant 0 : i32
    return %arg0, %c0_i32 : i32, i32
  }
}

</mosaic_0001>

<llo_original>
// kernel: net_forward.1
$region0: #{net_forward.1}
  #allocation0 [shape = 'u32[]', space=smem, size = 0x4, offset = 0x4, fixed_abs, tag = 'smem constant byte address 0x4 - core index']
  #allocation1 [shape = 'u32[72,128]{1,0:T(1,128)}', space=vmem, size = 0x9000, scoped, tag = 'internal scratch']
  %s0 = inlined_call_operand.vmem [shape: bf16[8,896], index: 0, kind: input, shape index: {}]
  %s1 = inlined_call_operand.hbm [shape: bf16[896,1024], index: 1, kind: input, shape index: {}]
  %s2 = inlined_call_operand.hbm [shape: f32[1,1024], index: 2, kind: input, shape index: {}]
  %s3 = inlined_call_operand.hbm [shape: bf16[1024,512], index: 3, kind: input, shape index: {}]
  %s4 = inlined_call_operand.hbm [shape: f32[1,512], index: 4, kind: input, shape index: {}]
  %s5 = inlined_call_operand.hbm [shape: bf16[512,128], index: 5, kind: input, shape index: {}]
  %s6 = inlined_call_operand.hbm [shape: f32[1,128], index: 6, kind: input, shape index: {}]
  %s7 = inlined_call_operand.hbm [shape: f32[8,128], index: 7, kind: output, shape index: {}]
  %s8 = sld [smem:[#allocation0]]
  $region62: #{net_forward.1} parent=0
    _
  %s10 = ssub.s32 1, %s8
  %s11 = scalar_select 0, %s10, %s8
  $region1: #{net_forward.1} parent=0
    #allocation2 [shape = 'u8[1835008]{0}', space=vmem, size = 0x1c0000, scoped, tag = 'input window, operand 1, single buffered']
    #allocation3 [shape = 's32[1]{0}', space=sflag, size = 0x4, scoped, tag = 'scoped memory for net_forward.1']
    #allocation4 [shape = 's32[1]{0}', space=sflag, size = 0x4, scoped, tag = 'scoped memory for net_forward.1']
    #allocation5 [shape = 'u8[4096]{0}', space=vmem, size = 0x1000, scoped, tag = 'input window, operand 2, single buffered']
    #allocation6 [shape = 's32[1]{0}', space=sflag, size = 0x4, scoped, tag = 'scoped memory for net_forward.1']
    #allocation7 [shape = 'u8[1048576]{0}', space=vmem, size = 0x100000, scoped, tag = 'input window, operand 3, single buffered']
    #allocation8 [shape = 'u8[2048]{0}', space=vmem, size = 0x800, scoped, tag = 'input window, operand 4, single buffered']
    #allocation9 [shape = 's32[1]{0}', space=sflag, size = 0x4, scoped, tag = 'scoped memory for net_forward.1']
    #allocation10 [shape = 'u8[131072]{0}', space=vmem, size = 0x20000, scoped, tag = 'input window, operand 5, single buffered']
    #allocation11 [shape = 'u8[512]{0}', space=vmem, size = 0x400, scoped, tag = 'input window, operand 6, single buffered']
    #allocation12 [shape = 's32[1]{0}', space=sflag, size = 0x4, scoped, tag = 'scoped memory for net_forward.1']
    #allocation13 [shape = 'u8[4096]{0}', space=vmem, size = 0x1000, scoped, tag = 'output window, operand 0, single buffered']
    %12 = vsyncpa [#allocation3], 0
    %13 = vsyncpa [#allocation6], 0
    %14 = vsyncpa [#allocation9], 0
    %15 = vsyncpa [#allocation12], 0
    %16 = vsyncpa [#allocation4], 0
    // Predicated region
    $region2: #{net_forward.1} parent=1 // pred_check
      _
    $region3: #{net_forward.1} parent=1 // pred_check_branch
      %18 = sbr.rel (0) target = $region5
    $region4: #{net_forward.1} parent=1 // pred_region
      _
    $region5: #{net_forward.1} parent=1 // pred_fallthru
      _
    // Predicated region
    $region6: #{net_forward.1} parent=1 // pred_check
      _
    $region7: #{net_forward.1} parent=1 // pred_check_branch
      %20 = sbr.rel (0) target = $region9
    $region8: #{net_forward.1} parent=1 // pred_region
      %22 = vsyncadd [#allocation3], 0
      %s23 = sshll.u32 %s1, 4
      %s24 = int_to_ptr.hbm [resolvable:$true] %s23
      %s25 = sshll.u32 [#allocation2], 4
      %s26 = int_to_ptr.vmem [resolvable:$true] %s25
      %31 = dma.hbm_to_vmem [thread:$0]  %s24, 57344, %s26, [#allocation3], 512, 512, 32
    $region9: #{net_forward.1} parent=1 // pred_fallthru
      _
    // Predicated region
    $region10: #{net_forward.1} parent=1 // pred_check
      _
    $region11: #{net_forward.1} parent=1 // pred_check_branch
      %33 = sbr.rel (0) target = $region13
    $region12: #{net_forward.1} parent=1 // pred_region
      %35 = vsyncadd [#allocation6], 0
      %s37 = sshll.u32 %s2, 4
      %s38 = int_to_ptr.hbm [resolvable:$true] %s37
      %s39 = sshll.u32 [#allocation5], 4
      %s40 = int_to_ptr.vmem [resolvable:$true] %s39
      %42 = dma.hbm_to_vmem [thread:$0]  %s38, 128, %s40, [#allocation6]
    $region13: #{net_forward.1} parent=1 // pred_fallthru
      _
    // Predicated region
    $region14: #{net_forward.1} parent=1 // pred_check
      _
    $region15: #{net_forward.1} parent=1 // pred_check_branch
      %44 = sbr.rel (0) target = $region17
    $region16: #{net_forward.1} parent=1 // pred_region
      %46 = vsyncadd [#allocation6], 0
      %s47 = sshll.u32 %s3, 4
      %s48 = int_to_ptr.hbm [resolvable:$true] %s47
      %s49 = sshll.u32 [#allocation7], 4
      %s50 = int_to_ptr.vmem [resolvable:$true] %s49
      %55 = dma.hbm_to_vmem [thread:$0]  %s48, 32768, %s50, [#allocation6], 256, 256, 16
    $region17: #{net_forward.1} parent=1 // pred_fallthru
      _
    // Predicated region
    $region18: #{net_forward.1} parent=1 // pred_check
      _
    $region19: #{net_forward.1} parent=1 // pred_check_branch
      %57 = sbr.rel (0) target = $region21
    $region20: #{net_forward.1} parent=1 // pred_region
      %59 = vsyncadd [#allocation9], 0
      %s61 = sshll.u32 %s4, 4
      %s62 = int_to_ptr.hbm [resolvable:$true] %s61
      %s63 = sshll.u32 [#allocation8], 4
      %s64 = int_to_ptr.vmem [resolvable:$true] %s63
      %66 = dma.hbm_to_vmem [thread:$0]  %s62, 64, %s64, [#allocation9]
    $region21: #{net_forward.1} parent=1 // pred_fallthru
      _
    // Predicated region
    $region22: #{net_forward.1} parent=1 // pred_check
      _
    $region23: #{net_forward.1} parent=1 // pred_check_branch
      %68 = sbr.rel (0) target = $region25
    $region24: #{net_forward.1} parent=1 // pred_region
      %70 = vsyncadd [#allocation9], 0
      %s71 = sshll.u32 %s5, 4
      %s72 = int_to_ptr.hbm [resolvable:$true] %s71
      %s73 = sshll.u32 [#allocation10], 4
      %s74 = int_to_ptr.vmem [resolvable:$true] %s73
      %79 = dma.hbm_to_vmem [thread:$0]  %s72, 4096, %s74, [#allocation9], 64, 64, 4
    $region25: #{net_forward.1} parent=1 // pred_fallthru
      _
    // Predicated region
    $region26: #{net_forward.1} parent=1 // pred_check
      _
    $region27: #{net_forward.1} parent=1 // pred_check_branch
      %81 = sbr.rel (0) target = $region29
    $region28: #{net_forward.1} parent=1 // pred_region
      %83 = vsyncadd [#allocation12], 0
      %s85 = sshll.u32 %s6, 4
      %s86 = int_to_ptr.hbm [resolvable:$true] %s85
      %s87 = sshll.u32 [#allocation11], 4
      %s88 = int_to_ptr.vmem [resolvable:$true] %s87
      %90 = dma.hbm_to_vmem [thread:$0]  %s86, 16, %s88, [#allocation12]
    $region29: #{net_forward.1} parent=1 // pred_fallthru
      _
    // Predicated region
    $region30: #{net_forward.1} parent=1 // pred_check
      _
    $region31: #{net_forward.1} parent=1 // pred_check_branch
      %92 = sbr.rel (0) target = $region33
    $region32: #{net_forward.1} parent=1 // pred_region
      %94 = dma.done [#allocation3], 57344
    $region33: #{net_forward.1} parent=1 // pred_fallthru
      _
    // Predicated region
    $region34: #{net_forward.1} parent=1 // pred_check
      _
    $region35: #{net_forward.1} parent=1 // pred_check_branch
      %96 = sbr.rel (0) target = $region37
    $region36: #{net_forward.1} parent=1 // pred_region
      %98 = dma.done [#allocation6], 128
    $region37: #{net_forward.1} parent=1 // pred_fallthru
      _
    // Predicated region
    $region38: #{net_forward.1} parent=1 // pred_check
      _
    $region39: #{net_forward.1} parent=1 // pred_check_branch
      %100 = sbr.rel (0) target = $region41
    $region40: #{net_forward.1} parent=1 // pred_region
      %102 = dma.done [#allocation6], 32768
    $region41: #{net_forward.1} parent=1 // pred_fallthru
      _
    // Predicated region
    $region42: #{net_forward.1} parent=1 // pred_check
      _
    $region43: #{net_forward.1} parent=1 // pred_check_branch
      %104 = sbr.rel (0) target = $region45
    $region44: #{net_forward.1} parent=1 // pred_region
      %106 = dma.done [#allocation9], 64
    $region45: #{net_forward.1} parent=1 // pred_fallthru
      _
    // Predicated region
    $region46: #{net_forward.1} parent=1 // pred_check
      _
    $region47: #{net_forward.1} parent=1 // pred_check_branch
      %108 = sbr.rel (0) target = $region49
    $region48: #{net_forward.1} parent=1 // pred_region
      %110 = dma.done [#allocation9], 4096
    $region49: #{net_forward.1} parent=1 // pred_fallthru
      _
    // Predicated region
    $region50: #{net_forward.1} parent=1 // pred_check
      _
    $region51: #{net_forward.1} parent=1 // pred_check_branch
      %112 = sbr.rel (0) target = $region53
    $region52: #{net_forward.1} parent=1 // pred_region
      %114 = dma.done [#allocation12], 16
    $region53: #{net_forward.1} parent=1 // pred_fallthru
      _
    %v115 = vld [vmem:[%s0] sm:$0xff]
    %v116 = vld [vmem:[%s0 + $0x8] sm:$0xff]
    %v117 = vld [vmem:[%s0 + $0x10] sm:$0xff]
    %v118 = vld [vmem:[%s0 + $0x18] sm:$0xf]
    %v119 = vld [vmem:[#allocation2] sm:$0xff]
    %v120 = vld [vmem:[#allocation2 + $0x8] sm:$0xff]
    %v121 = vld [vmem:[#allocation2 + $0x10] sm:$0xff]
    %v122 = vld [vmem:[#allocation2 + $0x18] sm:$0xff]
    %v123 = vld [vmem:[#allocation2 + $0x20] sm:$0xff]
    %v124 = vld [vmem:[#allocation2 + $0x28] sm:$0xff]
    %v125 = vld [vmem:[#allocation2 + $0x30] sm:$0xff]
    %v126 = vld [vmem:[#allocation2 + $0x38] sm:$0xff]
    %v127 = vld [vmem:[#allocation2 + $0x40] sm:$0xff]
    %v128 = vld [vmem:[#allocation2 + $0x48] sm:$0xff]
    %v129 = vld [vmem:[#allocation2 + $0x50] sm:$0xff]
    %v130 = vld [vmem:[#allocation2 + $0x58] sm:$0xff]
    %v131 = vld [vmem:[#allocation2 + $0x60] sm:$0xff]
    %v132 = vld [vmem:[#allocation2 + $0x68] sm:$0xff]
    %v133 = vld [vmem:[#allocation2 + $0x70] sm:$0xff]
    %v134 = vld [vmem:[#allocation2 + $0x78] sm:$0xff]
    %v135 = vld [vmem:[#allocation2 + $0x80] sm:$0xff]
    %v136 = vld [vmem:[#allocation2 + $0x88] sm:$0xff]
    %v137 = vld [vmem:[#allocation2 + $0x90] sm:$0xff]
    %v138 = vld [vmem:[#allocation2 + $0x98] sm:$0xff]
    %v139 = vld [vmem:[#allocation2 + $0xa0] sm:$0xff]
    %v140 = vld [vmem:[#allocation2 + $0xa8] sm:$0xff]
    %v141 = vld [vmem:[#allocation2 + $0xb0] sm:$0xff]
    %v142 = vld [vmem:[#allocation2 + $0xb8] sm:$0xff]
    %v143 = vld [vmem:[#allocation2 + $0xc0] sm:$0xff]
    %v144 = vld [vmem:[#allocation2 + $0xc8] sm:$0xff]
    %v145 = vld [vmem:[#allocation2 + $0xd0] sm:$0xff]
    %v146 = vld [vmem:[#allocation2 + $0xd8] sm:$0xff]
    %v147 = vld [vmem:[#allocation2 + $0xe0] sm:$0xff]
    %v148 = vld [vmem:[#allocation2 + $0xe8] sm:$0xff]
    %v149 = vld [vmem:[#allocation2 + $0xf0] sm:$0xff]
    %v150 = vld [vmem:[#allocation2 + $0xf8] sm:$0xff]
    %v151 = vld [vmem:[#allocation2 + $0x100] sm:$0xff]
    %v152 = vld [vmem:[#allocation2 + $0x108] sm:$0xff]
    %v153 = vld [vmem:[#allocation2 + $0x110] sm:$0xff]
    %v154 = vld [vmem:[#allocation2 + $0x118] sm:$0xff]
    %v155 = vld [vmem:[#allocation2 + $0x120] sm:$0xff]
    %v156 = vld [vmem:[#allocation2 + $0x128] sm:$0xff]
    %v157 = vld [vmem:[#allocation2 + $0x130] sm:$0xff]
    %v158 = vld [vmem:[#allocation2 + $0x138] sm:$0xff]
    %v159 = vld [vmem:[#allocation2 + $0x140] sm:$0xff]
    %v160 = vld [vmem:[#allocation2 + $0x148] sm:$0xff]
    %v161 = vld [vmem:[#allocation2 + $0x150] sm:$0xff]
    %v162 = vld [vmem:[#allocation2 + $0x158] sm:$0xff]
    %v163 = vld [vmem:[#allocation2 + $0x160] sm:$0xff]
    %v164 = vld [vmem:[#allocation2 + $0x168] sm:$0xff]
    %v165 = vld [vmem:[#allocation2 + $0x170] sm:$0xff]
    %v166 = vld [vmem:[#allocation2 + $0x178] sm:$0xff]
    %v167 = vld [vmem:[#allocation2 + $0x180] sm:$0xff]
    %v168 = vld [vmem:[#allocation2 + $0x188] sm:$0xff]
    %v169 = vld [vmem:[#allocation2 + $0x190] sm:$0xff]
    %v170 = vld [vmem:[#allocation2 + $0x198] sm:$0xff]
    %v171 = vld [vmem:[#allocation2 + $0x1a0] sm:$0xff]
    %v172 = vld [vmem:[#allocation2 + $0x1a8] sm:$0xff]
    %v173 = vld [vmem:[#allocation2 + $0x1b0] sm:$0xff]
    %v174 = vld [vmem:[#allocation2 + $0x1b8] sm:$0xff]
    %v175 = vld [vmem:[#allocation2 + $0x1c0] sm:$0xff]
    %v176 = vld [vmem:[#allocation2 + $0x1c8] sm:$0xff]
    %v177 = vld [vmem:[#allocation2 + $0x1d0] sm:$0xff]
    %v178 = vld [vmem:[#allocation2 + $0x1d8] sm:$0xff]
    %v179 = vld [vmem:[#allocation2 + $0x1e0] sm:$0xff]
    %v180 = vld [vmem:[#allocation2 + $0x1e8] sm:$0xff]
    %v181 = vld [vmem:[#allocation2 + $0x1f0] sm:$0xff]
    %v182 = vld [vmem:[#allocation2 + $0x1f8] sm:$0xff]
    %v183 = vld [vmem:[#allocation2 + $0x200] sm:$0xff]
    %v184 = vld [vmem:[#allocation2 + $0x208] sm:$0xff]
    %v185 = vld [vmem:[#allocation2 + $0x210] sm:$0xff]
    %v186 = vld [vmem:[#allocation2 + $0x218] sm:$0xff]
    %v187 = vld [vmem:[#allocation2 + $0x220] sm:$0xff]
    %v188 = vld [vmem:[#allocation2 + $0x228] sm:$0xff]
    %v189 = vld [vmem:[#allocation2 + $0x230] sm:$0xff]
    %v190 = vld [vmem:[#allocation2 + $0x238] sm:$0xff]
    %v191 = vld [vmem:[#allocation2 + $0x240] sm:$0xff]
    %v192 = vld [vmem:[#allocation2 + $0x248] sm:$0xff]
    %v193 = vld [vmem:[#allocation2 + $0x250] sm:$0xff]
    %v194 = vld [vmem:[#allocation2 + $0x258] sm:$0xff]
    %v195 = vld [vmem:[#allocation2 + $0x260] sm:$0xff]
    %v196 = vld [vmem:[#allocation2 + $0x268] sm:$0xff]
    %v197 = vld [vmem:[#allocation2 + $0x270] sm:$0xff]
    %v198 = vld [vmem:[#allocation2 + $0x278] sm:$0xff]
    %v199 = vld [vmem:[#allocation2 + $0x280] sm:$0xff]
    %v200 = vld [vmem:[#allocation2 + $0x288] sm:$0xff]
    %v201 = vld [vmem:[#allocation2 + $0x290] sm:$0xff]
    %v202 = vld [vmem:[#allocation2 + $0x298] sm:$0xff]
    %v203 = vld [vmem:[#allocation2 + $0x2a0] sm:$0xff]
    %v204 = vld [vmem:[#allocation2 + $0x2a8] sm:$0xff]
    %v205 = vld [vmem:[#allocation2 + $0x2b0] sm:$0xff]
    %v206 = vld [vmem:[#allocation2 + $0x2b8] sm:$0xff]
    %v207 = vld [vmem:[#allocation2 + $0x2c0] sm:$0xff]
    %v208 = vld [vmem:[#allocation2 + $0x2c8] sm:$0xff]
    %v209 = vld [vmem:[#allocation2 + $0x2d0] sm:$0xff]
    %v210 = vld [vmem:[#allocation2 + $0x2d8] sm:$0xff]
    %v211 = vld [vmem:[#allocation2 + $0x2e0] sm:$0xff]
    %v212 = vld [vmem:[#allocation2 + $0x2e8] sm:$0xff]
    %v213 = vld [vmem:[#allocation2 + $0x2f0] sm:$0xff]
    %v214 = vld [vmem:[#allocation2 + $0x2f8] sm:$0xff]
    %v215 = vld [vmem:[#allocation2 + $0x300] sm:$0xff]
    %v216 = vld [vmem:[#allocation2 + $0x308] sm:$0xff]
    %v217 = vld [vmem:[#allocation2 + $0x310] sm:$0xff]
    %v218 = vld [vmem:[#allocation2 + $0x318] sm:$0xff]
    %v219 = vld [vmem:[#allocation2 + $0x320] sm:$0xff]
    %v220 = vld [vmem:[#allocation2 + $0x328] sm:$0xff]
    %v221 = vld [vmem:[#allocation2 + $0x330] sm:$0xff]
    %v222 = vld [vmem:[#allocation2 + $0x338] sm:$0xff]
    %v223 = vld [vmem:[#allocation2 + $0x340] sm:$0xff]
    %v224 = vld [vmem:[#allocation2 + $0x348] sm:$0xff]
    %v225 = vld [vmem:[#allocation2 + $0x350] sm:$0xff]
    %v226 = vld [vmem:[#allocation2 + $0x358] sm:$0xff]
    %v227 = vld [vmem:[#allocation2 + $0x360] sm:$0xff]
    %v228 = vld [vmem:[#allocation2 + $0x368] sm:$0xff]
    %v229 = vld [vmem:[#allocation2 + $0x370] sm:$0xff]
    %v230 = vld [vmem:[#allocation2 + $0x378] sm:$0xff]
    %v231 = vld [vmem:[#allocation2 + $0x380] sm:$0xff]
    %v232 = vld [vmem:[#allocation2 + $0x388] sm:$0xff]
    %v233 = vld [vmem:[#allocation2 + $0x390] sm:$0xff]
    %v234 = vld [vmem:[#allocation2 + $0x398] sm:$0xff]
    %v235 = vld [vmem:[#allocation2 + $0x3a0] sm:$0xff]
    %v236 = vld [vmem:[#allocation2 + $0x3a8] sm:$0xff]
    %v237 = vld [vmem:[#allocation2 + $0x3b0] sm:$0xff]
    %v238 = vld [vmem:[#allocation2 + $0x3b8] sm:$0xff]
    %v239 = vld [vmem:[#allocation2 + $0x3c0] sm:$0xff]
    %v240 = vld [vmem:[#allocation2 + $0x3c8] sm:$0xff]
    %v241 = vld [vmem:[#allocation2 + $0x3d0] sm:$0xff]
    %v242 = vld [vmem:[#allocation2 + $0x3d8] sm:$0xff]
    %v243 = vld [vmem:[#allocation2 + $0x3e0] sm:$0xff]
    %v244 = vld [vmem:[#allocation2 + $0x3e8] sm:$0xff]
    %v245 = vld [vmem:[#allocation2 + $0x3f0] sm:$0xff]
    %v246 = vld [vmem:[#allocation2 + $0x3f8] sm:$0xff]
    %v247 = vld [vmem:[#allocation2 + $0x400] sm:$0xff]
    %v248 = vld [vmem:[#allocation2 + $0x408] sm:$0xff]
    %v249 = vld [vmem:[#allocation2 + $0x410] sm:$0xff]
    %v250 = vld [vmem:[#allocation2 + $0x418] sm:$0xff]
    %v251 = vld [vmem:[#allocation2 + $0x420] sm:$0xff]
    %v252 = vld [vmem:[#allocation2 + $0x428] sm:$0xff]
    %v253 = vld [vmem:[#allocation2 + $0x430] sm:$0xff]
    %v254 = vld [vmem:[#allocation2 + $0x438] sm:$0xff]
    %v255 = vld [vmem:[#allocation2 + $0x440] sm:$0xff]
    %v256 = vld [vmem:[#allocation2 + $0x448] sm:$0xff]
    %v257 = vld [vmem:[#allocation2 + $0x450] sm:$0xff]
    %v258 = vld [vmem:[#allocation2 + $0x458] sm:$0xff]
    %v259 = vld [vmem:[#allocation2 + $0x460] sm:$0xff]
    %v260 = vld [vmem:[#allocation2 + $0x468] sm:$0xff]
    %v261 = vld [vmem:[#allocation2 + $0x470] sm:$0xff]
    %v262 = vld [vmem:[#allocation2 + $0x478] sm:$0xff]
    %v263 = vld [vmem:[#allocation2 + $0x480] sm:$0xff]
    %v264 = vld [vmem:[#allocation2 + $0x488] sm:$0xff]
    %v265 = vld [vmem:[#allocation2 + $0x490] sm:$0xff]
    %v266 = vld [vmem:[#allocation2 + $0x498] sm:$0xff]
    %v267 = vld [vmem:[#allocation2 + $0x4a0] sm:$0xff]
    %v268 = vld [vmem:[#allocation2 + $0x4a8] sm:$0xff]
    %v269 = vld [vmem:[#allocation2 + $0x4b0] sm:$0xff]
    %v270 = vld [vmem:[#allocation2 + $0x4b8] sm:$0xff]
    %v271 = vld [vmem:[#allocation2 + $0x4c0] sm:$0xff]
    %v272 = vld [vmem:[#allocation2 + $0x4c8] sm:$0xff]
    %v273 = vld [vmem:[#allocation2 + $0x4d0] sm:$0xff]
    %v274 = vld [vmem:[#allocation2 + $0x4d8] sm:$0xff]
    %v275 = vld [vmem:[#allocation2 + $0x4e0] sm:$0xff]
    %v276 = vld [vmem:[#allocation2 + $0x4e8] sm:$0xff]
    %v277 = vld [vmem:[#allocation2 + $0x4f0] sm:$0xff]
    %v278 = vld [vmem:[#allocation2 + $0x4f8] sm:$0xff]
    %v279 = vld [vmem:[#allocation2 + $0x500] sm:$0xff]
    %v280 = vld [vmem:[#allocation2 + $0x508] sm:$0xff]
    %v281 = vld [vmem:[#allocation2 + $0x510] sm:$0xff]
    %v282 = vld [vmem:[#allocation2 + $0x518] sm:$0xff]
    %v283 = vld [vmem:[#allocation2 + $0x520] sm:$0xff]
    %v284 = vld [vmem:[#allocation2 + $0x528] sm:$0xff]
    %v285 = vld [vmem:[#allocation2 + $0x530] sm:$0xff]
    %v286 = vld [vmem:[#allocation2 + $0x538] sm:$0xff]
    %v287 = vld [vmem:[#allocation2 + $0x540] sm:$0xff]
    %v288 = vld [vmem:[#allocation2 + $0x548] sm:$0xff]
    %v289 = vld [vmem:[#allocation2 + $0x550] sm:$0xff]
    %v290 = vld [vmem:[#allocation2 + $0x558] sm:$0xff]
    %v291 = vld [vmem:[#allocation2 + $0x560] sm:$0xff]
    %v292 = vld [vmem:[#allocation2 + $0x568] sm:$0xff]
    %v293 = vld [vmem:[#allocation2 + $0x570] sm:$0xff]
    %v294 = vld [vmem:[#allocation2 + $0x578] sm:$0xff]
    %v295 = vld [vmem:[#allocation2 + $0x580] sm:$0xff]
    %v296 = vld [vmem:[#allocation2 + $0x588] sm:$0xff]
    %v297 = vld [vmem:[#allocation2 + $0x590] sm:$0xff]
    %v298 = vld [vmem:[#allocation2 + $0x598] sm:$0xff]
    %v299 = vld [vmem:[#allocation2 + $0x5a0] sm:$0xff]
    %v300 = vld [vmem:[#allocation2 + $0x5a8] sm:$0xff]
    %v301 = vld [vmem:[#allocation2 + $0x5b0] sm:$0xff]
    %v302 = vld [vmem:[#allocation2 + $0x5b8] sm:$0xff]
    %v303 = vld [vmem:[#allocation2 + $0x5c0] sm:$0xff]
    %v304 = vld [vmem:[#allocation2 + $0x5c8] sm:$0xff]
    %v305 = vld [vmem:[#allocation2 + $0x5d0] sm:$0xff]
    %v306 = vld [vmem:[#allocation2 + $0x5d8] sm:$0xff]
    %v307 = vld [vmem:[#allocation2 + $0x5e0] sm:$0xff]
    %v308 = vld [vmem:[#allocation2 + $0x5e8] sm:$0xff]
    %v309 = vld [vmem:[#allocation2 + $0x5f0] sm:$0xff]
    %v310 = vld [vmem:[#allocation2 + $0x5f8] sm:$0xff]
    %v311 = vld [vmem:[#allocation2 + $0x600] sm:$0xff]
    %v312 = vld [vmem:[#allocation2 + $0x608] sm:$0xff]
    %v313 = vld [vmem:[#allocation2 + $0x610] sm:$0xff]
    %v314 = vld [vmem:[#allocation2 + $0x618] sm:$0xff]
    %v315 = vld [vmem:[#allocation2 + $0x620] sm:$0xff]
    %v316 = vld [vmem:[#allocation2 + $0x628] sm:$0xff]
    %v317 = vld [vmem:[#allocation2 + $0x630] sm:$0xff]
    %v318 = vld [vmem:[#allocation2 + $0x638] sm:$0xff]
    %v319 = vld [vmem:[#allocation2 + $0x640] sm:$0xff]
    %v320 = vld [vmem:[#allocation2 + $0x648] sm:$0xff]
    %v321 = vld [vmem:[#allocation2 + $0x650] sm:$0xff]
    %v322 = vld [vmem:[#allocation2 + $0x658] sm:$0xff]
    %v323 = vld [vmem:[#allocation2 + $0x660] sm:$0xff]
    %v324 = vld [vmem:[#allocation2 + $0x668] sm:$0xff]
    %v325 = vld [vmem:[#allocation2 + $0x670] sm:$0xff]
    %v326 = vld [vmem:[#allocation2 + $0x678] sm:$0xff]
    %v327 = vld [vmem:[#allocation2 + $0x680] sm:$0xff]
    %v328 = vld [vmem:[#allocation2 + $0x688] sm:$0xff]
    %v329 = vld [vmem:[#allocation2 + $0x690] sm:$0xff]
    %v330 = vld [vmem:[#allocation2 + $0x698] sm:$0xff]
    %v331 = vld [vmem:[#allocation2 + $0x6a0] sm:$0xff]
    %v332 = vld [vmem:[#allocation2 + $0x6a8] sm:$0xff]
    %v333 = vld [vmem:[#allocation2 + $0x6b0] sm:$0xff]
    %v334 = vld [vmem:[#allocation2 + $0x6b8] sm:$0xff]
    %v335 = vld [vmem:[#allocation2 + $0x6c0] sm:$0xff]
    %v336 = vld [vmem:[#allocation2 + $0x6c8] sm:$0xff]
    %v337 = vld [vmem:[#allocation2 + $0x6d0] sm:$0xff]
    %v338 = vld [vmem:[#allocation2 + $0x6d8] sm:$0xff]
    %v339 = vld [vmem:[#allocation2 + $0x6e0] sm:$0xff]
    %v340 = vld [vmem:[#allocation2 + $0x6e8] sm:$0xff]
    %v341 = vld [vmem:[#allocation2 + $0x6f0] sm:$0xff]
    %v342 = vld [vmem:[#allocation2 + $0x6f8] sm:$0xff]
    %v343 = vld [vmem:[#allocation2 + $0x700] sm:$0xff]
    %v344 = vld [vmem:[#allocation2 + $0x708] sm:$0xff]
    %v345 = vld [vmem:[#allocation2 + $0x710] sm:$0xff]
    %v346 = vld [vmem:[#allocation2 + $0x718] sm:$0xff]
    %v347 = vld [vmem:[#allocation2 + $0x720] sm:$0xff]
    %v348 = vld [vmem:[#allocation2 + $0x728] sm:$0xff]
    %v349 = vld [vmem:[#allocation2 + $0x730] sm:$0xff]
    %v350 = vld [vmem:[#allocation2 + $0x738] sm:$0xff]
    %v351 = vld [vmem:[#allocation2 + $0x740] sm:$0xff]
    %v352 = vld [vmem:[#allocation2 + $0x748] sm:$0xff]
    %v353 = vld [vmem:[#allocation2 + $0x750] sm:$0xff]
    %v354 = vld [vmem:[#allocation2 + $0x758] sm:$0xff]
    %v355 = vld [vmem:[#allocation2 + $0x760] sm:$0xff]
    %v356 = vld [vmem:[#allocation2 + $0x768] sm:$0xff]
    %v357 = vld [vmem:[#allocation2 + $0x770] sm:$0xff]
    %v358 = vld [vmem:[#allocation2 + $0x778] sm:$0xff]
    %v359 = vld [vmem:[#allocation2 + $0x780] sm:$0xff]
    %v360 = vld [vmem:[#allocation2 + $0x788] sm:$0xff]
    %v361 = vld [vmem:[#allocation2 + $0x790] sm:$0xff]
    %v362 = vld [vmem:[#allocation2 + $0x798] sm:$0xff]
    %v363 = vld [vmem:[#allocation2 + $0x7a0] sm:$0xff]
    %v364 = vld [vmem:[#allocation2 + $0x7a8] sm:$0xff]
    %v365 = vld [vmem:[#allocation2 + $0x7b0] sm:$0xff]
    %v366 = vld [vmem:[#allocation2 + $0x7b8] sm:$0xff]
    %v367 = vld [vmem:[#allocation2 + $0x7c0] sm:$0xff]
    %v368 = vld [vmem:[#allocation2 + $0x7c8] sm:$0xff]
    %v369 = vld [vmem:[#allocation2 + $0x7d0] sm:$0xff]
    %v370 = vld [vmem:[#allocation2 + $0x7d8] sm:$0xff]
    %v371 = vld [vmem:[#allocation2 + $0x7e0] sm:$0xff]
    %v372 = vld [vmem:[#allocation2 + $0x7e8] sm:$0xff]
    %v373 = vld [vmem:[#allocation2 + $0x7f0] sm:$0xff]
    %v374 = vld [vmem:[#allocation2 + $0x7f8] sm:$0xff]
    %v375 = vld [vmem:[#allocation2 + $0x800] sm:$0xff]
    %v376 = vld [vmem:[#allocation2 + $0x808] sm:$0xff]
    %v377 = vld [vmem:[#allocation2 + $0x810] sm:$0xff]
    %v378 = vld [vmem:[#allocation2 + $0x818] sm:$0xff]
    %v379 = vld [vmem:[#allocation2 + $0x820] sm:$0xff]
    %v380 = vld [vmem:[#allocation2 + $0x828] sm:$0xff]
    %v381 = vld [vmem:[#allocation2 + $0x830] sm:$0xff]
    %v382 = vld [vmem:[#allocation2 + $0x838] sm:$0xff]
    %v383 = vld [vmem:[#allocation2 + $0x840] sm:$0xff]
    %v384 = vld [vmem:[#allocation2 + $0x848] sm:$0xff]
    %v385 = vld [vmem:[#allocation2 + $0x850] sm:$0xff]
    %v386 = vld [vmem:[#allocation2 + $0x858] sm:$0xff]
    %v387 = vld [vmem:[#allocation2 + $0x860] sm:$0xff]
    %v388 = vld [vmem:[#allocation2 + $0x868] sm:$0xff]
    %v389 = vld [vmem:[#allocation2 + $0x870] sm:$0xff]
    %v390 = vld [vmem:[#allocation2 + $0x878] sm:$0xff]
    %v391 = vld [vmem:[#allocation2 + $0x880] sm:$0xff]
    %v392 = vld [vmem:[#allocation2 + $0x888] sm:$0xff]
    %v393 = vld [vmem:[#allocation2 + $0x890] sm:$0xff]
    %v394 = vld [vmem:[#allocation2 + $0x898] sm:$0xff]
    %v395 = vld [vmem:[#allocation2 + $0x8a0] sm:$0xff]
    %v396 = vld [vmem:[#allocation2 + $0x8a8] sm:$0xff]
    %v397 = vld [vmem:[#allocation2 + $0x8b0] sm:$0xff]
    %v398 = vld [vmem:[#allocation2 + $0x8b8] sm:$0xff]
    %v399 = vld [vmem:[#allocation2 + $0x8c0] sm:$0xff]
    %v400 = vld [vmem:[#allocation2 + $0x8c8] sm:$0xff]
    %v401 = vld [vmem:[#allocation2 + $0x8d0] sm:$0xff]
    %v402 = vld [vmem:[#allocation2 + $0x8d8] sm:$0xff]
    %v403 = vld [vmem:[#allocation2 + $0x8e0] sm:$0xff]
    %v404 = vld [vmem:[#allocation2 + $0x8e8] sm:$0xff]
    %v405 = vld [vmem:[#allocation2 + $0x8f0] sm:$0xff]
    %v406 = vld [vmem:[#allocation2 + $0x8f8] sm:$0xff]
    %v407 = vld [vmem:[#allocation2 + $0x900] sm:$0xff]
    %v408 = vld [vmem:[#allocation2 + $0x908] sm:$0xff]
    %v409 = vld [vmem:[#allocation2 + $0x910] sm:$0xff]
    %v410 = vld [vmem:[#allocation2 + $0x918] sm:$0xff]
    %v411 = vld [vmem:[#allocation2 + $0x920] sm:$0xff]
    %v412 = vld [vmem:[#allocation2 + $0x928] sm:$0xff]
    %v413 = vld [vmem:[#allocation2 + $0x930] sm:$0xff]
    %v414 = vld [vmem:[#allocation2 + $0x938] sm:$0xff]
    %v415 = vld [vmem:[#allocation2 + $0x940] sm:$0xff]
    %v416 = vld [vmem:[#allocation2 + $0x948] sm:$0xff]
    %v417 = vld [vmem:[#allocation2 + $0x950] sm:$0xff]
    %v418 = vld [vmem:[#allocation2 + $0x958] sm:$0xff]
    %v419 = vld [vmem:[#allocation2 + $0x960] sm:$0xff]
    %v420 = vld [vmem:[#allocation2 + $0x968] sm:$0xff]
    %v421 = vld [vmem:[#allocation2 + $0x970] sm:$0xff]
    %v422 = vld [vmem:[#allocation2 + $0x978] sm:$0xff]
    %v423 = vld [vmem:[#allocation2 + $0x980] sm:$0xff]
    %v424 = vld [vmem:[#allocation2 + $0x988] sm:$0xff]
    %v425 = vld [vmem:[#allocation2 + $0x990] sm:$0xff]
    %v426 = vld [vmem:[#allocation2 + $0x998] sm:$0xff]
    %v427 = vld [vmem:[#allocation2 + $0x9a0] sm:$0xff]
    %v428 = vld [vmem:[#allocation2 + $0x9a8] sm:$0xff]
    %v429 = vld [vmem:[#allocation2 + $0x9b0] sm:$0xff]
    %v430 = vld [vmem:[#allocation2 + $0x9b8] sm:$0xff]
    %v431 = vld [vmem:[#allocation2 + $0x9c0] sm:$0xff]
    %v432 = vld [vmem:[#allocation2 + $0x9c8] sm:$0xff]
    %v433 = vld [vmem:[#allocation2 + $0x9d0] sm:$0xff]
    %v434 = vld [vmem:[#allocation2 + $0x9d8] sm:$0xff]
    %v435 = vld [vmem:[#allocation2 + $0x9e0] sm:$0xff]
    %v436 = vld [vmem:[#allocation2 + $0x9e8] sm:$0xff]
    %v437 = vld [vmem:[#allocation2 + $0x9f0] sm:$0xff]
    %v438 = vld [vmem:[#allocation2 + $0x9f8] sm:$0xff]
    %v439 = vld [vmem:[#allocation2 + $0xa00] sm:$0xff]
    %v440 = vld [vmem:[#allocation2 + $0xa08] sm:$0xff]
    %v441 = vld [vmem:[#allocation2 + $0xa10] sm:$0xff]
    %v442 = vld [vmem:[#allocation2 + $0xa18] sm:$0xff]
    %v443 = vld [vmem:[#allocation2 + $0xa20] sm:$0xff]
    %v444 = vld [vmem:[#allocation2 + $0xa28] sm:$0xff]
    %v445 = vld [vmem:[#allocation2 + $0xa30] sm:$0xff]
    %v446 = vld [vmem:[#allocation2 + $0xa38] sm:$0xff]
    %v447 = vld [vmem:[#allocation2 + $0xa40] sm:$0xff]
    %v448 = vld [vmem:[#allocation2 + $0xa48] sm:$0xff]
    %v449 = vld [vmem:[#allocation2 + $0xa50] sm:$0xff]
    %v450 = vld [vmem:[#allocation2 + $0xa58] sm:$0xff]
    %v451 = vld [vmem:[#allocation2 + $0xa60] sm:$0xff]
    %v452 = vld [vmem:[#allocation2 + $0xa68] sm:$0xff]
    %v453 = vld [vmem:[#allocation2 + $0xa70] sm:$0xff]
    %v454 = vld [vmem:[#allocation2 + $0xa78] sm:$0xff]
    %v455 = vld [vmem:[#allocation2 + $0xa80] sm:$0xff]
    %v456 = vld [vmem:[#allocation2 + $0xa88] sm:$0xff]
    %v457 = vld [vmem:[#allocation2 + $0xa90] sm:$0xff]
    %v458 = vld [vmem:[#allocation2 + $0xa98] sm:$0xff]
    %v459 = vld [vmem:[#allocation2 + $0xaa0] sm:$0xff]
    %v460 = vld [vmem:[#allocation2 + $0xaa8] sm:$0xff]
    %v461 = vld [vmem:[#allocation2 + $0xab0] sm:$0xff]
    %v462 = vld [vmem:[#allocation2 + $0xab8] sm:$0xff]
    %v463 = vld [vmem:[#allocation2 + $0xac0] sm:$0xff]
    %v464 = vld [vmem:[#allocation2 + $0xac8] sm:$0xff]
    %v465 = vld [vmem:[#allocation2 + $0xad0] sm:$0xff]
    %v466 = vld [vmem:[#allocation2 + $0xad8] sm:$0xff]
    %v467 = vld [vmem:[#allocation2 + $0xae0] sm:$0xff]
    %v468 = vld [vmem:[#allocation2 + $0xae8] sm:$0xff]
    %v469 = vld [vmem:[#allocation2 + $0xaf0] sm:$0xff]
    %v470 = vld [vmem:[#allocation2 + $0xaf8] sm:$0xff]
    %v471 = vld [vmem:[#allocation2 + $0xb00] sm:$0xff]
    %v472 = vld [vmem:[#allocation2 + $0xb08] sm:$0xff]
    %v473 = vld [vmem:[#allocation2 + $0xb10] sm:$0xff]
    %v474 = vld [vmem:[#allocation2 + $0xb18] sm:$0xff]
    %v475 = vld [vmem:[#allocation2 + $0xb20] sm:$0xff]
    %v476 = vld [vmem:[#allocation2 + $0xb28] sm:$0xff]
    %v477 = vld [vmem:[#allocation2 + $0xb30] sm:$0xff]
    %v478 = vld [vmem:[#allocation2 + $0xb38] sm:$0xff]
    %v479 = vld [vmem:[#allocation2 + $0xb40] sm:$0xff]
    %v480 = vld [vmem:[#allocation2 + $0xb48] sm:$0xff]
    %v481 = vld [vmem:[#allocation2 + $0xb50] sm:$0xff]
    %v482 = vld [vmem:[#allocation2 + $0xb58] sm:$0xff]
    %v483 = vld [vmem:[#allocation2 + $0xb60] sm:$0xff]
    %v484 = vld [vmem:[#allocation2 + $0xb68] sm:$0xff]
    %v485 = vld [vmem:[#allocation2 + $0xb70] sm:$0xff]
    %v486 = vld [vmem:[#allocation2 + $0xb78] sm:$0xff]
    %v487 = vld [vmem:[#allocation2 + $0xb80] sm:$0xff]
    %v488 = vld [vmem:[#allocation2 + $0xb88] sm:$0xff]
    %v489 = vld [vmem:[#allocation2 + $0xb90] sm:$0xff]
    %v490 = vld [vmem:[#allocation2 + $0xb98] sm:$0xff]
    %v491 = vld [vmem:[#allocation2 + $0xba0] sm:$0xff]
    %v492 = vld [vmem:[#allocation2 + $0xba8] sm:$0xff]
    %v493 = vld [vmem:[#allocation2 + $0xbb0] sm:$0xff]
    %v494 = vld [vmem:[#allocation2 + $0xbb8] sm:$0xff]
    %v495 = vld [vmem:[#allocation2 + $0xbc0] sm:$0xff]
    %v496 = vld [vmem:[#allocation2 + $0xbc8] sm:$0xff]
    %v497 = vld [vmem:[#allocation2 + $0xbd0] sm:$0xff]
    %v498 = vld [vmem:[#allocation2 + $0xbd8] sm:$0xff]
    %v499 = vld [vmem:[#allocation2 + $0xbe0] sm:$0xff]
    %v500 = vld [vmem:[#allocation2 + $0xbe8] sm:$0xff]
    %v501 = vld [vmem:[#allocation2 + $0xbf0] sm:$0xff]
    %v502 = vld [vmem:[#allocation2 + $0xbf8] sm:$0xff]
    %v503 = vld [vmem:[#allocation2 + $0xc00] sm:$0xff]
    %v504 = vld [vmem:[#allocation2 + $0xc08] sm:$0xff]
    %v505 = vld [vmem:[#allocation2 + $0xc10] sm:$0xff]
    %v506 = vld [vmem:[#allocation2 + $0xc18] sm:$0xff]
    %v507 = vld [vmem:[#allocation2 + $0xc20] sm:$0xff]
    %v508 = vld [vmem:[#allocation2 + $0xc28] sm:$0xff]
    %v509 = vld [vmem:[#allocation2 + $0xc30] sm:$0xff]
    %v510 = vld [vmem:[#allocation2 + $0xc38] sm:$0xff]
    %v511 = vld [vmem:[#allocation2 + $0xc40] sm:$0xff]
    %v512 = vld [vmem:[#allocation2 + $0xc48] sm:$0xff]
    %v513 = vld [vmem:[#allocation2 + $0xc50] sm:$0xff]
    %v514 = vld [vmem:[#allocation2 + $0xc58] sm:$0xff]
    %v515 = vld [vmem:[#allocation2 + $0xc60] sm:$0xff]
    %v516 = vld [vmem:[#allocation2 + $0xc68] sm:$0xff]
    %v517 = vld [vmem:[#allocation2 + $0xc70] sm:$0xff]
    %v518 = vld [vmem:[#allocation2 + $0xc78] sm:$0xff]
    %v519 = vld [vmem:[#allocation2 + $0xc80] sm:$0xff]
    %v520 = vld [vmem:[#allocation2 + $0xc88] sm:$0xff]
    %v521 = vld [vmem:[#allocation2 + $0xc90] sm:$0xff]
    %v522 = vld [vmem:[#allocation2 + $0xc98] sm:$0xff]
    %v523 = vld [vmem:[#allocation2 + $0xca0] sm:$0xff]
    %v524 = vld [vmem:[#allocation2 + $0xca8] sm:$0xff]
    %v525 = vld [vmem:[#allocation2 + $0xcb0] sm:$0xff]
    %v526 = vld [vmem:[#allocation2 + $0xcb8] sm:$0xff]
    %v527 = vld [vmem:[#allocation2 + $0xcc0] sm:$0xff]
    %v528 = vld [vmem:[#allocation2 + $0xcc8] sm:$0xff]
    %v529 = vld [vmem:[#allocation2 + $0xcd0] sm:$0xff]
    %v530 = vld [vmem:[#allocation2 + $0xcd8] sm:$0xff]
    %v531 = vld [vmem:[#allocation2 + $0xce0] sm:$0xff]
    %v532 = vld [vmem:[#allocation2 + $0xce8] sm:$0xff]
    %v533 = vld [vmem:[#allocation2 + $0xcf0] sm:$0xff]
    %v534 = vld [vmem:[#allocation2 + $0xcf8] sm:$0xff]
    %v535 = vld [vmem:[#allocation2 + $0xd00] sm:$0xff]
    %v536 = vld [vmem:[#allocation2 + $0xd08] sm:$0xff]
    %v537 = vld [vmem:[#allocation2 + $0xd10] sm:$0xff]
    %v538 = vld [vmem:[#allocation2 + $0xd18] sm:$0xff]
    %v539 = vld [vmem:[#allocation2 + $0xd20] sm:$0xff]
    %v540 = vld [vmem:[#allocation2 + $0xd28] sm:$0xff]
    %v541 = vld [vmem:[#allocation2 + $0xd30] sm:$0xff]
    %v542 = vld [vmem:[#allocation2 + $0xd38] sm:$0xff]
    %v543 = vld [vmem:[#allocation2 + $0xd40] sm:$0xff]
    %v544 = vld [vmem:[#allocation2 + $0xd48] sm:$0xff]
    %v545 = vld [vmem:[#allocation2 + $0xd50] sm:$0xff]
    %v546 = vld [vmem:[#allocation2 + $0xd58] sm:$0xff]
    %v547 = vld [vmem:[#allocation2 + $0xd60] sm:$0xff]
    %v548 = vld [vmem:[#allocation2 + $0xd68] sm:$0xff]
    %v549 = vld [vmem:[#allocation2 + $0xd70] sm:$0xff]
    %v550 = vld [vmem:[#allocation2 + $0xd78] sm:$0xff]
    %v551 = vld [vmem:[#allocation2 + $0xd80] sm:$0xff]
    %v552 = vld [vmem:[#allocation2 + $0xd88] sm:$0xff]
    %v553 = vld [vmem:[#allocation2 + $0xd90] sm:$0xff]
    %v554 = vld [vmem:[#allocation2 + $0xd98] sm:$0xff]
    %v555 = vld [vmem:[#allocation2 + $0xda0] sm:$0xff]
    %v556 = vld [vmem:[#allocation2 + $0xda8] sm:$0xff]
    %v557 = vld [vmem:[#allocation2 + $0xdb0] sm:$0xff]
    %v558 = vld [vmem:[#allocation2 + $0xdb8] sm:$0xff]
    %v559 = vld [vmem:[#allocation2 + $0xdc0] sm:$0xff]
    %v560 = vld [vmem:[#allocation2 + $0xdc8] sm:$0xff]
    %v561 = vld [vmem:[#allocation2 + $0xdd0] sm:$0xff]
    %v562 = vld [vmem:[#allocation2 + $0xdd8] sm:$0xff]
    %v563 = vld [vmem:[#allocation2 + $0xde0] sm:$0xff]
    %v564 = vld [vmem:[#allocation2 + $0xde8] sm:$0xff]
    %v565 = vld [vmem:[#allocation2 + $0xdf0] sm:$0xff]
    %v566 = vld [vmem:[#allocation2 + $0xdf8] sm:$0xff]
    %v567 = vld [vmem:[#allocation5] sm:$0xff]
    %v569 = vperm.slane %v567, 0
    %v570 = vperm.slane %v567, 1
    %v571 = vperm.slane %v567, 2
    %v572 = vperm.slane %v567, 3
    %v573 = vperm.slane %v567, 4
    %v574 = vperm.slane %v567, 5
    %v575 = vperm.slane %v567, 6
    %v576 = vperm.slane %v567, 7
    %v589 = vunpack.c.l.b16 %v115
    %v590 = vunpack.c.h.b16 %v115
    %v591 = vunpack.c.l.b16 %v116
    %v592 = vunpack.c.h.b16 %v116
    %v593 = vunpack.c.l.b16 %v117
    %v594 = vunpack.c.h.b16 %v117
    %v595 = vunpack.c.l.b16 %v118
    %v596 = vpack.c.b16 %v589, %v589
    %v597 = vpack.c.b16 %v590, %v590
    %v598 = vpack.c.b16 %v591, %v591
    %v599 = vpack.c.b16 %v592, %v592
    %v600 = vpack.c.b16 %v593, %v593
    %v601 = vpack.c.b16 %v594, %v594
    %v602 = vpack.c.b16 %v595, %v595
    %v1058 = vunpack.c.l.b16 %v119
    %v1059 = vunpack.c.h.b16 %v119
    %v1060 = vunpack.c.l.b16 %v120
    %v1061 = vunpack.c.h.b16 %v120
    %v1062 = vunpack.c.l.b16 %v121
    %v1063 = vunpack.c.h.b16 %v121
    %v1064 = vunpack.c.l.b16 %v122
    %v1065 = vunpack.c.h.b16 %v122
    %v1066 = vunpack.c.l.b16 %v123
    %v1067 = vunpack.c.h.b16 %v123
    %v1068 = vunpack.c.l.b16 %v124
    %v1069 = vunpack.c.h.b16 %v124
    %v1070 = vunpack.c.l.b16 %v125
    %v1071 = vunpack.c.h.b16 %v125
    %v1072 = vunpack.c.l.b16 %v126
    %v1073 = vunpack.c.h.b16 %v126
    %v1074 = vunpack.c.l.b16 %v127
    %v1075 = vunpack.c.h.b16 %v127
    %v1076 = vunpack.c.l.b16 %v128
    %v1077 = vunpack.c.h.b16 %v128
    %v1078 = vunpack.c.l.b16 %v129
    %v1079 = vunpack.c.h.b16 %v129
    %v1080 = vunpack.c.l.b16 %v130
    %v1081 = vunpack.c.h.b16 %v130
    %v1082 = vunpack.c.l.b16 %v131
    %v1083 = vunpack.c.h.b16 %v131
    %v1084 = vunpack.c.l.b16 %v132
    %v1085 = vunpack.c.h.b16 %v132
    %v1086 = vunpack.c.l.b16 %v133
    %v1087 = vunpack.c.h.b16 %v133
    %v1088 = vunpack.c.l.b16 %v134
    %v1089 = vunpack.c.h.b16 %v134
    %v1090 = vunpack.c.l.b16 %v135
    %v1091 = vunpack.c.h.b16 %v135
    %v1092 = vunpack.c.l.b16 %v136
    %v1093 = vunpack.c.h.b16 %v136
    %v1094 = vunpack.c.l.b16 %v137
    %v1095 = vunpack.c.h.b16 %v137
    %v1096 = vunpack.c.l.b16 %v138
    %v1097 = vunpack.c.h.b16 %v138
    %v1098 = vunpack.c.l.b16 %v139
    %v1099 = vunpack.c.h.b16 %v139
    %v1100 = vunpack.c.l.b16 %v140
    %v1101 = vunpack.c.h.b16 %v140
    %v1102 = vunpack.c.l.b16 %v141
    %v1103 = vunpack.c.h.b16 %v141
    %v1104 = vunpack.c.l.b16 %v142
    %v1105 = vunpack.c.h.b16 %v142
    %v1106 = vunpack.c.l.b16 %v143
    %v1107 = vunpack.c.h.b16 %v143
    %v1108 = vunpack.c.l.b16 %v144
    %v1109 = vunpack.c.h.b16 %v144
    %v1110 = vunpack.c.l.b16 %v145
    %v1111 = vunpack.c.h.b16 %v145
    %v1112 = vunpack.c.l.b16 %v146
    %v1113 = vunpack.c.h.b16 %v146
    %v1114 = vunpack.c.l.b16 %v147
    %v1115 = vunpack.c.h.b16 %v147
    %v1116 = vunpack.c.l.b16 %v148
    %v1117 = vunpack.c.h.b16 %v148
    %v1118 = vunpack.c.l.b16 %v149
    %v1119 = vunpack.c.h.b16 %v149
    %v1120 = vunpack.c.l.b16 %v150
    %v1121 = vunpack.c.h.b16 %v150
    %v1122 = vunpack.c.l.b16 %v151
    %v1123 = vunpack.c.h.b16 %v151
    %v1124 = vunpack.c.l.b16 %v152
    %v1125 = vunpack.c.h.b16 %v152
    %v1126 = vunpack.c.l.b16 %v153
    %v1127 = vunpack.c.h.b16 %v153
    %v1128 = vunpack.c.l.b16 %v154
    %v1129 = vunpack.c.h.b16 %v154
    %v1130 = vunpack.c.l.b16 %v155
    %v1131 = vunpack.c.h.b16 %v155
    %v1132 = vunpack.c.l.b16 %v156
    %v1133 = vunpack.c.h.b16 %v156
    %v1134 = vunpack.c.l.b16 %v157
    %v1135 = vunpack.c.h.b16 %v157
    %v1136 = vunpack.c.l.b16 %v158
    %v1137 = vunpack.c.h.b16 %v158
    %v1138 = vunpack.c.l.b16 %v159
    %v1139 = vunpack.c.h.b16 %v159
    %v1140 = vunpack.c.l.b16 %v160
    %v1141 = vunpack.c.h.b16 %v160
    %v1142 = vunpack.c.l.b16 %v161
    %v1143 = vunpack.c.h.b16 %v161
    %v1144 = vunpack.c.l.b16 %v162
    %v1145 = vunpack.c.h.b16 %v162
    %v1146 = vunpack.c.l.b16 %v163
    %v1147 = vunpack.c.h.b16 %v163
    %v1148 = vunpack.c.l.b16 %v164
    %v1149 = vunpack.c.h.b16 %v164
    %v1150 = vunpack.c.l.b16 %v165
    %v1151 = vunpack.c.h.b16 %v165
    %v1152 = vunpack.c.l.b16 %v166
    %v1153 = vunpack.c.h.b16 %v166
    %v1154 = vunpack.c.l.b16 %v167
    %v1155 = vunpack.c.h.b16 %v167
    %v1156 = vunpack.c.l.b16 %v168
    %v1157 = vunpack.c.h.b16 %v168
    %v1158 = vunpack.c.l.b16 %v169
    %v1159 = vunpack.c.h.b16 %v169
    %v1160 = vunpack.c.l.b16 %v170
    %v1161 = vunpack.c.h.b16 %v170
    %v1162 = vunpack.c.l.b16 %v171
    %v1163 = vunpack.c.h.b16 %v171
    %v1164 = vunpack.c.l.b16 %v172
    %v1165 = vunpack.c.h.b16 %v172
    %v1166 = vunpack.c.l.b16 %v173
    %v1167 = vunpack.c.h.b16 %v173
    %v1168 = vunpack.c.l.b16 %v174
    %v1169 = vunpack.c.h.b16 %v174
    %v1170 = vunpack.c.l.b16 %v175
    %v1171 = vunpack.c.h.b16 %v175
    %v1172 = vunpack.c.l.b16 %v176
    %v1173 = vunpack.c.h.b16 %v176
    %v1174 = vunpack.c.l.b16 %v177
    %v1175 = vunpack.c.h.b16 %v177
    %v1176 = vunpack.c.l.b16 %v178
    %v1177 = vunpack.c.h.b16 %v178
    %v1178 = vunpack.c.l.b16 %v179
    %v1179 = vunpack.c.h.b16 %v179
    %v1180 = vunpack.c.l.b16 %v180
    %v1181 = vunpack.c.h.b16 %v180
    %v1182 = vunpack.c.l.b16 %v181
    %v1183 = vunpack.c.h.b16 %v181
    %v1184 = vunpack.c.l.b16 %v182
    %v1185 = vunpack.c.h.b16 %v182
    %v1186 = vunpack.c.l.b16 %v183
    %v1187 = vunpack.c.h.b16 %v183
    %v1188 = vunpack.c.l.b16 %v184
    %v1189 = vunpack.c.h.b16 %v184
    %v1190 = vunpack.c.l.b16 %v185
    %v1191 = vunpack.c.h.b16 %v185
    %v1192 = vunpack.c.l.b16 %v186
    %v1193 = vunpack.c.h.b16 %v186
    %v1194 = vunpack.c.l.b16 %v187
    %v1195 = vunpack.c.h.b16 %v187
    %v1196 = vunpack.c.l.b16 %v188
    %v1197 = vunpack.c.h.b16 %v188
    %v1198 = vunpack.c.l.b16 %v189
    %v1199 = vunpack.c.h.b16 %v189
    %v1200 = vunpack.c.l.b16 %v190
    %v1201 = vunpack.c.h.b16 %v190
    %v1202 = vunpack.c.l.b16 %v191
    %v1203 = vunpack.c.h.b16 %v191
    %v1204 = vunpack.c.l.b16 %v192
    %v1205 = vunpack.c.h.b16 %v192
    %v1206 = vunpack.c.l.b16 %v193
    %v1207 = vunpack.c.h.b16 %v193
    %v1208 = vunpack.c.l.b16 %v194
    %v1209 = vunpack.c.h.b16 %v194
    %v1210 = vunpack.c.l.b16 %v195
    %v1211 = vunpack.c.h.b16 %v195
    %v1212 = vunpack.c.l.b16 %v196
    %v1213 = vunpack.c.h.b16 %v196
    %v1214 = vunpack.c.l.b16 %v197
    %v1215 = vunpack.c.h.b16 %v197
    %v1216 = vunpack.c.l.b16 %v198
    %v1217 = vunpack.c.h.b16 %v198
    %v1218 = vunpack.c.l.b16 %v199
    %v1219 = vunpack.c.h.b16 %v199
    %v1220 = vunpack.c.l.b16 %v200
    %v1221 = vunpack.c.h.b16 %v200
    %v1222 = vunpack.c.l.b16 %v201
    %v1223 = vunpack.c.h.b16 %v201
    %v1224 = vunpack.c.l.b16 %v202
    %v1225 = vunpack.c.h.b16 %v202
    %v1226 = vunpack.c.l.b16 %v203
    %v1227 = vunpack.c.h.b16 %v203
    %v1228 = vunpack.c.l.b16 %v204
    %v1229 = vunpack.c.h.b16 %v204
    %v1230 = vunpack.c.l.b16 %v205
    %v1231 = vunpack.c.h.b16 %v205
    %v1232 = vunpack.c.l.b16 %v206
    %v1233 = vunpack.c.h.b16 %v206
    %v1234 = vunpack.c.l.b16 %v207
    %v1235 = vunpack.c.h.b16 %v207
    %v1236 = vunpack.c.l.b16 %v208
    %v1237 = vunpack.c.h.b16 %v208
    %v1238 = vunpack.c.l.b16 %v209
    %v1239 = vunpack.c.h.b16 %v209
    %v1240 = vunpack.c.l.b16 %v210
    %v1241 = vunpack.c.h.b16 %v210
    %v1242 = vunpack.c.l.b16 %v211
    %v1243 = vunpack.c.h.b16 %v211
    %v1244 = vunpack.c.l.b16 %v212
    %v1245 = vunpack.c.h.b16 %v212
    %v1246 = vunpack.c.l.b16 %v213
    %v1247 = vunpack.c.h.b16 %v213
    %v1248 = vunpack.c.l.b16 %v214
    %v1249 = vunpack.c.h.b16 %v214
    %v1250 = vunpack.c.l.b16 %v215
    %v1251 = vunpack.c.h.b16 %v215
    %v1252 = vunpack.c.l.b16 %v216
    %v1253 = vunpack.c.h.b16 %v216
    %v1254 = vunpack.c.l.b16 %v217
    %v1255 = vunpack.c.h.b16 %v217
    %v1256 = vunpack.c.l.b16 %v218
    %v1257 = vunpack.c.h.b16 %v218
    %v1258 = vunpack.c.l.b16 %v219
    %v1259 = vunpack.c.h.b16 %v219
    %v1260 = vunpack.c.l.b16 %v220
    %v1261 = vunpack.c.h.b16 %v220
    %v1262 = vunpack.c.l.b16 %v221
    %v1263 = vunpack.c.h.b16 %v221
    %v1264 = vunpack.c.l.b16 %v222
    %v1265 = vunpack.c.h.b16 %v222
    %v1266 = vunpack.c.l.b16 %v223
    %v1267 = vunpack.c.h.b16 %v223
    %v1268 = vunpack.c.l.b16 %v224
    %v1269 = vunpack.c.h.b16 %v224
    %v1270 = vunpack.c.l.b16 %v225
    %v1271 = vunpack.c.h.b16 %v225
    %v1272 = vunpack.c.l.b16 %v226
    %v1273 = vunpack.c.h.b16 %v226
    %v1274 = vunpack.c.l.b16 %v227
    %v1275 = vunpack.c.h.b16 %v227
    %v1276 = vunpack.c.l.b16 %v228
    %v1277 = vunpack.c.h.b16 %v228
    %v1278 = vunpack.c.l.b16 %v229
    %v1279 = vunpack.c.h.b16 %v229
    %v1280 = vunpack.c.l.b16 %v230
    %v1281 = vunpack.c.h.b16 %v230
    %v1282 = vunpack.c.l.b16 %v231
    %v1283 = vunpack.c.h.b16 %v231
    %v1284 = vunpack.c.l.b16 %v232
    %v1285 = vunpack.c.h.b16 %v232
    %v1286 = vunpack.c.l.b16 %v233
    %v1287 = vunpack.c.h.b16 %v233
    %v1288 = vunpack.c.l.b16 %v234
    %v1289 = vunpack.c.h.b16 %v234
    %v1290 = vunpack.c.l.b16 %v235
    %v1291 = vunpack.c.h.b16 %v235
    %v1292 = vunpack.c.l.b16 %v236
    %v1293 = vunpack.c.h.b16 %v236
    %v1294 = vunpack.c.l.b16 %v237
    %v1295 = vunpack.c.h.b16 %v237
    %v1296 = vunpack.c.l.b16 %v238
    %v1297 = vunpack.c.h.b16 %v238
    %v1298 = vunpack.c.l.b16 %v239
    %v1299 = vunpack.c.h.b16 %v239
    %v1300 = vunpack.c.l.b16 %v240
    %v1301 = vunpack.c.h.b16 %v240
    %v1302 = vunpack.c.l.b16 %v241
    %v1303 = vunpack.c.h.b16 %v241
    %v1304 = vunpack.c.l.b16 %v242
    %v1305 = vunpack.c.h.b16 %v242
    %v1306 = vunpack.c.l.b16 %v243
    %v1307 = vunpack.c.h.b16 %v243
    %v1308 = vunpack.c.l.b16 %v244
    %v1309 = vunpack.c.h.b16 %v244
    %v1310 = vunpack.c.l.b16 %v245
    %v1311 = vunpack.c.h.b16 %v245
    %v1312 = vunpack.c.l.b16 %v246
    %v1313 = vunpack.c.h.b16 %v246
    %v1314 = vunpack.c.l.b16 %v247
    %v1315 = vunpack.c.h.b16 %v247
    %v1316 = vunpack.c.l.b16 %v248
    %v1317 = vunpack.c.h.b16 %v248
    %v1318 = vunpack.c.l.b16 %v249
    %v1319 = vunpack.c.h.b16 %v249
    %v1320 = vunpack.c.l.b16 %v250
    %v1321 = vunpack.c.h.b16 %v250
    %v1322 = vunpack.c.l.b16 %v251
    %v1323 = vunpack.c.h.b16 %v251
    %v1324 = vunpack.c.l.b16 %v252
    %v1325 = vunpack.c.h.b16 %v252
    %v1326 = vunpack.c.l.b16 %v253
    %v1327 = vunpack.c.h.b16 %v253
    %v1328 = vunpack.c.l.b16 %v254
    %v1329 = vunpack.c.h.b16 %v254
    %v1330 = vunpack.c.l.b16 %v255
    %v1331 = vunpack.c.h.b16 %v255
    %v1332 = vunpack.c.l.b16 %v256
    %v1333 = vunpack.c.h.b16 %v256
    %v1334 = vunpack.c.l.b16 %v257
    %v1335 = vunpack.c.h.b16 %v257
    %v1336 = vunpack.c.l.b16 %v258
    %v1337 = vunpack.c.h.b16 %v258
    %v1338 = vunpack.c.l.b16 %v259
    %v1339 = vunpack.c.h.b16 %v259
    %v1340 = vunpack.c.l.b16 %v260
    %v1341 = vunpack.c.h.b16 %v260
    %v1342 = vunpack.c.l.b16 %v261
    %v1343 = vunpack.c.h.b16 %v261
    %v1344 = vunpack.c.l.b16 %v262
    %v1345 = vunpack.c.h.b16 %v262
    %v1346 = vunpack.c.l.b16 %v263
    %v1347 = vunpack.c.h.b16 %v263
    %v1348 = vunpack.c.l.b16 %v264
    %v1349 = vunpack.c.h.b16 %v264
    %v1350 = vunpack.c.l.b16 %v265
    %v1351 = vunpack.c.h.b16 %v265
    %v1352 = vunpack.c.l.b16 %v266
    %v1353 = vunpack.c.h.b16 %v266
    %v1354 = vunpack.c.l.b16 %v267
    %v1355 = vunpack.c.h.b16 %v267
    %v1356 = vunpack.c.l.b16 %v268
    %v1357 = vunpack.c.h.b16 %v268
    %v1358 = vunpack.c.l.b16 %v269
    %v1359 = vunpack.c.h.b16 %v269
    %v1360 = vunpack.c.l.b16 %v270
    %v1361 = vunpack.c.h.b16 %v270
    %v1362 = vunpack.c.l.b16 %v271
    %v1363 = vunpack.c.h.b16 %v271
    %v1364 = vunpack.c.l.b16 %v272
    %v1365 = vunpack.c.h.b16 %v272
    %v1366 = vunpack.c.l.b16 %v273
    %v1367 = vunpack.c.h.b16 %v273
    %v1368 = vunpack.c.l.b16 %v274
    %v1369 = vunpack.c.h.b16 %v274
    %v1370 = vunpack.c.l.b16 %v275
    %v1371 = vunpack.c.h.b16 %v275
    %v1372 = vunpack.c.l.b16 %v276
    %v1373 = vunpack.c.h.b16 %v276
    %v1374 = vunpack.c.l.b16 %v277
    %v1375 = vunpack.c.h.b16 %v277
    %v1376 = vunpack.c.l.b16 %v278
    %v1377 = vunpack.c.h.b16 %v278
    %v1378 = vunpack.c.l.b16 %v279
    %v1379 = vunpack.c.h.b16 %v279
    %v1380 = vunpack.c.l.b16 %v280
    %v1381 = vunpack.c.h.b16 %v280
    %v1382 = vunpack.c.l.b16 %v281
    %v1383 = vunpack.c.h.b16 %v281
    %v1384 = vunpack.c.l.b16 %v282
    %v1385 = vunpack.c.h.b16 %v282
    %v1386 = vunpack.c.l.b16 %v283
    %v1387 = vunpack.c.h.b16 %v283
    %v1388 = vunpack.c.l.b16 %v284
    %v1389 = vunpack.c.h.b16 %v284
    %v1390 = vunpack.c.l.b16 %v285
    %v1391 = vunpack.c.h.b16 %v285
    %v1392 = vunpack.c.l.b16 %v286
    %v1393 = vunpack.c.h.b16 %v286
    %v1394 = vunpack.c.l.b16 %v287
    %v1395 = vunpack.c.h.b16 %v287
    %v1396 = vunpack.c.l.b16 %v288
    %v1397 = vunpack.c.h.b16 %v288
    %v1398 = vunpack.c.l.b16 %v289
    %v1399 = vunpack.c.h.b16 %v289
    %v1400 = vunpack.c.l.b16 %v290
    %v1401 = vunpack.c.h.b16 %v290
    %v1402 = vunpack.c.l.b16 %v291
    %v1403 = vunpack.c.h.b16 %v291
    %v1404 = vunpack.c.l.b16 %v292
    %v1405 = vunpack.c.h.b16 %v292
    %v1406 = vunpack.c.l.b16 %v293
    %v1407 = vunpack.c.h.b16 %v293
    %v1408 = vunpack.c.l.b16 %v294
    %v1409 = vunpack.c.h.b16 %v294
    %v1410 = vunpack.c.l.b16 %v295
    %v1411 = vunpack.c.h.b16 %v295
    %v1412 = vunpack.c.l.b16 %v296
    %v1413 = vunpack.c.h.b16 %v296
    %v1414 = vunpack.c.l.b16 %v297
    %v1415 = vunpack.c.h.b16 %v297
    %v1416 = vunpack.c.l.b16 %v298
    %v1417 = vunpack.c.h.b16 %v298
    %v1418 = vunpack.c.l.b16 %v299
    %v1419 = vunpack.c.h.b16 %v299
    %v1420 = vunpack.c.l.b16 %v300
    %v1421 = vunpack.c.h.b16 %v300
    %v1422 = vunpack.c.l.b16 %v301
    %v1423 = vunpack.c.h.b16 %v301
    %v1424 = vunpack.c.l.b16 %v302
    %v1425 = vunpack.c.h.b16 %v302
    %v1426 = vunpack.c.l.b16 %v303
    %v1427 = vunpack.c.h.b16 %v303
    %v1428 = vunpack.c.l.b16 %v304
    %v1429 = vunpack.c.h.b16 %v304
    %v1430 = vunpack.c.l.b16 %v305
    %v1431 = vunpack.c.h.b16 %v305
    %v1432 = vunpack.c.l.b16 %v306
    %v1433 = vunpack.c.h.b16 %v306
    %v1434 = vunpack.c.l.b16 %v307
    %v1435 = vunpack.c.h.b16 %v307
    %v1436 = vunpack.c.l.b16 %v308
    %v1437 = vunpack.c.h.b16 %v308
    %v1438 = vunpack.c.l.b16 %v309
    %v1439 = vunpack.c.h.b16 %v309
    %v1440 = vunpack.c.l.b16 %v310
    %v1441 = vunpack.c.h.b16 %v310
    %v1442 = vunpack.c.l.b16 %v311
    %v1443 = vunpack.c.h.b16 %v311
    %v1444 = vunpack.c.l.b16 %v312
    %v1445 = vunpack.c.h.b16 %v312
    %v1446 = vunpack.c.l.b16 %v313
    %v1447 = vunpack.c.h.b16 %v313
    %v1448 = vunpack.c.l.b16 %v314
    %v1449 = vunpack.c.h.b16 %v314
    %v1450 = vunpack.c.l.b16 %v315
    %v1451 = vunpack.c.h.b16 %v315
    %v1452 = vunpack.c.l.b16 %v316
    %v1453 = vunpack.c.h.b16 %v316
    %v1454 = vunpack.c.l.b16 %v317
    %v1455 = vunpack.c.h.b16 %v317
    %v1456 = vunpack.c.l.b16 %v318
    %v1457 = vunpack.c.h.b16 %v318
    %v1458 = vunpack.c.l.b16 %v319
    %v1459 = vunpack.c.h.b16 %v319
    %v1460 = vunpack.c.l.b16 %v320
    %v1461 = vunpack.c.h.b16 %v320
    %v1462 = vunpack.c.l.b16 %v321
    %v1463 = vunpack.c.h.b16 %v321
    %v1464 = vunpack.c.l.b16 %v322
    %v1465 = vunpack.c.h.b16 %v322
    %v1466 = vunpack.c.l.b16 %v323
    %v1467 = vunpack.c.h.b16 %v323
    %v1468 = vunpack.c.l.b16 %v324
    %v1469 = vunpack.c.h.b16 %v324
    %v1470 = vunpack.c.l.b16 %v325
    %v1471 = vunpack.c.h.b16 %v325
    %v1472 = vunpack.c.l.b16 %v326
    %v1473 = vunpack.c.h.b16 %v326
    %v1474 = vunpack.c.l.b16 %v327
    %v1475 = vunpack.c.h.b16 %v327
    %v1476 = vunpack.c.l.b16 %v328
    %v1477 = vunpack.c.h.b16 %v328
    %v1478 = vunpack.c.l.b16 %v329
    %v1479 = vunpack.c.h.b16 %v329
    %v1480 = vunpack.c.l.b16 %v330
    %v1481 = vunpack.c.h.b16 %v330
    %v1482 = vunpack.c.l.b16 %v331
    %v1483 = vunpack.c.h.b16 %v331
    %v1484 = vunpack.c.l.b16 %v332
    %v1485 = vunpack.c.h.b16 %v332
    %v1486 = vunpack.c.l.b16 %v333
    %v1487 = vunpack.c.h.b16 %v333
    %v1488 = vunpack.c.l.b16 %v334
    %v1489 = vunpack.c.h.b16 %v334
    %v1490 = vunpack.c.l.b16 %v335
    %v1491 = vunpack.c.h.b16 %v335
    %v1492 = vunpack.c.l.b16 %v336
    %v1493 = vunpack.c.h.b16 %v336
    %v1494 = vunpack.c.l.b16 %v337
    %v1495 = vunpack.c.h.b16 %v337
    %v1496 = vunpack.c.l.b16 %v338
    %v1497 = vunpack.c.h.b16 %v338
    %v1498 = vunpack.c.l.b16 %v339
    %v1499 = vunpack.c.h.b16 %v339
    %v1500 = vunpack.c.l.b16 %v340
    %v1501 = vunpack.c.h.b16 %v340
    %v1502 = vunpack.c.l.b16 %v341
    %v1503 = vunpack.c.h.b16 %v341
    %v1504 = vunpack.c.l.b16 %v342
    %v1505 = vunpack.c.h.b16 %v342
    %v1506 = vunpack.c.l.b16 %v343
    %v1507 = vunpack.c.h.b16 %v343
    %v1508 = vunpack.c.l.b16 %v344
    %v1509 = vunpack.c.h.b16 %v344
    %v1510 = vunpack.c.l.b16 %v345
    %v1511 = vunpack.c.h.b16 %v345
    %v1512 = vunpack.c.l.b16 %v346
    %v1513 = vunpack.c.h.b16 %v346
    %v1514 = vunpack.c.l.b16 %v347
    %v1515 = vunpack.c.h.b16 %v347
    %v1516 = vunpack.c.l.b16 %v348
    %v1517 = vunpack.c.h.b16 %v348
    %v1518 = vunpack.c.l.b16 %v349
    %v1519 = vunpack.c.h.b16 %v349
    %v1520 = vunpack.c.l.b16 %v350
    %v1521 = vunpack.c.h.b16 %v350
    %v1522 = vunpack.c.l.b16 %v351
    %v1523 = vunpack.c.h.b16 %v351
    %v1524 = vunpack.c.l.b16 %v352
    %v1525 = vunpack.c.h.b16 %v352
    %v1526 = vunpack.c.l.b16 %v353
    %v1527 = vunpack.c.h.b16 %v353
    %v1528 = vunpack.c.l.b16 %v354
    %v1529 = vunpack.c.h.b16 %v354
    %v1530 = vunpack.c.l.b16 %v355
    %v1531 = vunpack.c.h.b16 %v355
    %v1532 = vunpack.c.l.b16 %v356
    %v1533 = vunpack.c.h.b16 %v356
    %v1534 = vunpack.c.l.b16 %v357
    %v1535 = vunpack.c.h.b16 %v357
    %v1536 = vunpack.c.l.b16 %v358
    %v1537 = vunpack.c.h.b16 %v358
    %v1538 = vunpack.c.l.b16 %v359
    %v1539 = vunpack.c.h.b16 %v359
    %v1540 = vunpack.c.l.b16 %v360
    %v1541 = vunpack.c.h.b16 %v360
    %v1542 = vunpack.c.l.b16 %v361
    %v1543 = vunpack.c.h.b16 %v361
    %v1544 = vunpack.c.l.b16 %v362
    %v1545 = vunpack.c.h.b16 %v362
    %v1546 = vunpack.c.l.b16 %v363
    %v1547 = vunpack.c.h.b16 %v363
    %v1548 = vunpack.c.l.b16 %v364
    %v1549 = vunpack.c.h.b16 %v364
    %v1550 = vunpack.c.l.b16 %v365
    %v1551 = vunpack.c.h.b16 %v365
    %v1552 = vunpack.c.l.b16 %v366
    %v1553 = vunpack.c.h.b16 %v366
    %v1554 = vunpack.c.l.b16 %v367
    %v1555 = vunpack.c.h.b16 %v367
    %v1556 = vunpack.c.l.b16 %v368
    %v1557 = vunpack.c.h.b16 %v368
    %v1558 = vunpack.c.l.b16 %v369
    %v1559 = vunpack.c.h.b16 %v369
    %v1560 = vunpack.c.l.b16 %v370
    %v1561 = vunpack.c.h.b16 %v370
    %v1562 = vunpack.c.l.b16 %v371
    %v1563 = vunpack.c.h.b16 %v371
    %v1564 = vunpack.c.l.b16 %v372
    %v1565 = vunpack.c.h.b16 %v372
    %v1566 = vunpack.c.l.b16 %v373
    %v1567 = vunpack.c.h.b16 %v373
    %v1568 = vunpack.c.l.b16 %v374
    %v1569 = vunpack.c.h.b16 %v374
    %v1570 = vunpack.c.l.b16 %v375
    %v1571 = vunpack.c.h.b16 %v375
    %v1572 = vunpack.c.l.b16 %v376
    %v1573 = vunpack.c.h.b16 %v376
    %v1574 = vunpack.c.l.b16 %v377
    %v1575 = vunpack.c.h.b16 %v377
    %v1576 = vunpack.c.l.b16 %v378
    %v1577 = vunpack.c.h.b16 %v378
    %v1578 = vunpack.c.l.b16 %v379
    %v1579 = vunpack.c.h.b16 %v379
    %v1580 = vunpack.c.l.b16 %v380
    %v1581 = vunpack.c.h.b16 %v380
    %v1582 = vunpack.c.l.b16 %v381
    %v1583 = vunpack.c.h.b16 %v381
    %v1584 = vunpack.c.l.b16 %v382
    %v1585 = vunpack.c.h.b16 %v382
    %v1586 = vunpack.c.l.b16 %v383
    %v1587 = vunpack.c.h.b16 %v383
    %v1588 = vunpack.c.l.b16 %v384
    %v1589 = vunpack.c.h.b16 %v384
    %v1590 = vunpack.c.l.b16 %v385
    %v1591 = vunpack.c.h.b16 %v385
    %v1592 = vunpack.c.l.b16 %v386
    %v1593 = vunpack.c.h.b16 %v386
    %v1594 = vunpack.c.l.b16 %v387
    %v1595 = vunpack.c.h.b16 %v387
    %v1596 = vunpack.c.l.b16 %v388
    %v1597 = vunpack.c.h.b16 %v388
    %v1598 = vunpack.c.l.b16 %v389
    %v1599 = vunpack.c.h.b16 %v389
    %v1600 = vunpack.c.l.b16 %v390
    %v1601 = vunpack.c.h.b16 %v390
    %v1602 = vunpack.c.l.b16 %v391
    %v1603 = vunpack.c.h.b16 %v391
    %v1604 = vunpack.c.l.b16 %v392
    %v1605 = vunpack.c.h.b16 %v392
    %v1606 = vunpack.c.l.b16 %v393
    %v1607 = vunpack.c.h.b16 %v393
    %v1608 = vunpack.c.l.b16 %v394
    %v1609 = vunpack.c.h.b16 %v394
    %v1610 = vunpack.c.l.b16 %v395
    %v1611 = vunpack.c.h.b16 %v395
    %v1612 = vunpack.c.l.b16 %v396
    %v1613 = vunpack.c.h.b16 %v396
    %v1614 = vunpack.c.l.b16 %v397
    %v1615 = vunpack.c.h.b16 %v397
    %v1616 = vunpack.c.l.b16 %v398
    %v1617 = vunpack.c.h.b16 %v398
    %v1618 = vunpack.c.l.b16 %v399
    %v1619 = vunpack.c.h.b16 %v399
    %v1620 = vunpack.c.l.b16 %v400
    %v1621 = vunpack.c.h.b16 %v400
    %v1622 = vunpack.c.l.b16 %v401
    %v1623 = vunpack.c.h.b16 %v401
    %v1624 = vunpack.c.l.b16 %v402
    %v1625 = vunpack.c.h.b16 %v402
    %v1626 = vunpack.c.l.b16 %v403
    %v1627 = vunpack.c.h.b16 %v403
    %v1628 = vunpack.c.l.b16 %v404
    %v1629 = vunpack.c.h.b16 %v404
    %v1630 = vunpack.c.l.b16 %v405
    %v1631 = vunpack.c.h.b16 %v405
    %v1632 = vunpack.c.l.b16 %v406
    %v1633 = vunpack.c.h.b16 %v406
    %v1634 = vunpack.c.l.b16 %v407
    %v1635 = vunpack.c.h.b16 %v407
    %v1636 = vunpack.c.l.b16 %v408
    %v1637 = vunpack.c.h.b16 %v408
    %v1638 = vunpack.c.l.b16 %v409
    %v1639 = vunpack.c.h.b16 %v409
    %v1640 = vunpack.c.l.b16 %v410
    %v1641 = vunpack.c.h.b16 %v410
    %v1642 = vunpack.c.l.b16 %v411
    %v1643 = vunpack.c.h.b16 %v411
    %v1644 = vunpack.c.l.b16 %v412
    %v1645 = vunpack.c.h.b16 %v412
    %v1646 = vunpack.c.l.b16 %v413
    %v1647 = vunpack.c.h.b16 %v413
    %v1648 = vunpack.c.l.b16 %v414
    %v1649 = vunpack.c.h.b16 %v414
    %v1650 = vunpack.c.l.b16 %v415
    %v1651 = vunpack.c.h.b16 %v415
    %v1652 = vunpack.c.l.b16 %v416
    %v1653 = vunpack.c.h.b16 %v416
    %v1654 = vunpack.c.l.b16 %v417
    %v1655 = vunpack.c.h.b16 %v417
    %v1656 = vunpack.c.l.b16 %v418
    %v1657 = vunpack.c.h.b16 %v418
    %v1658 = vunpack.c.l.b16 %v419
    %v1659 = vunpack.c.h.b16 %v419
    %v1660 = vunpack.c.l.b16 %v420
    %v1661 = vunpack.c.h.b16 %v420
    %v1662 = vunpack.c.l.b16 %v421
    %v1663 = vunpack.c.h.b16 %v421
    %v1664 = vunpack.c.l.b16 %v422
    %v1665 = vunpack.c.h.b16 %v422
    %v1666 = vunpack.c.l.b16 %v423
    %v1667 = vunpack.c.h.b16 %v423
    %v1668 = vunpack.c.l.b16 %v424
    %v1669 = vunpack.c.h.b16 %v424
    %v1670 = vunpack.c.l.b16 %v425
    %v1671 = vunpack.c.h.b16 %v425
    %v1672 = vunpack.c.l.b16 %v426
    %v1673 = vunpack.c.h.b16 %v426
    %v1674 = vunpack.c.l.b16 %v427
    %v1675 = vunpack.c.h.b16 %v427
    %v1676 = vunpack.c.l.b16 %v428
    %v1677 = vunpack.c.h.b16 %v428
    %v1678 = vunpack.c.l.b16 %v429
    %v1679 = vunpack.c.h.b16 %v429
    %v1680 = vunpack.c.l.b16 %v430
    %v1681 = vunpack.c.h.b16 %v430
    %v1682 = vunpack.c.l.b16 %v431
    %v1683 = vunpack.c.h.b16 %v431
    %v1684 = vunpack.c.l.b16 %v432
    %v1685 = vunpack.c.h.b16 %v432
    %v1686 = vunpack.c.l.b16 %v433
    %v1687 = vunpack.c.h.b16 %v433
    %v1688 = vunpack.c.l.b16 %v434
    %v1689 = vunpack.c.h.b16 %v434
    %v1690 = vunpack.c.l.b16 %v435
    %v1691 = vunpack.c.h.b16 %v435
    %v1692 = vunpack.c.l.b16 %v436
    %v1693 = vunpack.c.h.b16 %v436
    %v1694 = vunpack.c.l.b16 %v437
    %v1695 = vunpack.c.h.b16 %v437
    %v1696 = vunpack.c.l.b16 %v438
    %v1697 = vunpack.c.h.b16 %v438
    %v1698 = vunpack.c.l.b16 %v439
    %v1699 = vunpack.c.h.b16 %v439
    %v1700 = vunpack.c.l.b16 %v440
    %v1701 = vunpack.c.h.b16 %v440
    %v1702 = vunpack.c.l.b16 %v441
    %v1703 = vunpack.c.h.b16 %v441
    %v1704 = vunpack.c.l.b16 %v442
    %v1705 = vunpack.c.h.b16 %v442
    %v1706 = vunpack.c.l.b16 %v443
    %v1707 = vunpack.c.h.b16 %v443
    %v1708 = vunpack.c.l.b16 %v444
    %v1709 = vunpack.c.h.b16 %v444
    %v1710 = vunpack.c.l.b16 %v445
    %v1711 = vunpack.c.h.b16 %v445
    %v1712 = vunpack.c.l.b16 %v446
    %v1713 = vunpack.c.h.b16 %v446
    %v1714 = vunpack.c.l.b16 %v447
    %v1715 = vunpack.c.h.b16 %v447
    %v1716 = vunpack.c.l.b16 %v448
    %v1717 = vunpack.c.h.b16 %v448
    %v1718 = vunpack.c.l.b16 %v449
    %v1719 = vunpack.c.h.b16 %v449
    %v1720 = vunpack.c.l.b16 %v450
    %v1721 = vunpack.c.h.b16 %v450
    %v1722 = vunpack.c.l.b16 %v451
    %v1723 = vunpack.c.h.b16 %v451
    %v1724 = vunpack.c.l.b16 %v452
    %v1725 = vunpack.c.h.b16 %v452
    %v1726 = vunpack.c.l.b16 %v453
    %v1727 = vunpack.c.h.b16 %v453
    %v1728 = vunpack.c.l.b16 %v454
    %v1729 = vunpack.c.h.b16 %v454
    %v1730 = vunpack.c.l.b16 %v455
    %v1731 = vunpack.c.h.b16 %v455
    %v1732 = vunpack.c.l.b16 %v456
    %v1733 = vunpack.c.h.b16 %v456
    %v1734 = vunpack.c.l.b16 %v457
    %v1735 = vunpack.c.h.b16 %v457
    %v1736 = vunpack.c.l.b16 %v458
    %v1737 = vunpack.c.h.b16 %v458
    %v1738 = vunpack.c.l.b16 %v459
    %v1739 = vunpack.c.h.b16 %v459
    %v1740 = vunpack.c.l.b16 %v460
    %v1741 = vunpack.c.h.b16 %v460
    %v1742 = vunpack.c.l.b16 %v461
    %v1743 = vunpack.c.h.b16 %v461
    %v1744 = vunpack.c.l.b16 %v462
    %v1745 = vunpack.c.h.b16 %v462
    %v1746 = vunpack.c.l.b16 %v463
    %v1747 = vunpack.c.h.b16 %v463
    %v1748 = vunpack.c.l.b16 %v464
    %v1749 = vunpack.c.h.b16 %v464
    %v1750 = vunpack.c.l.b16 %v465
    %v1751 = vunpack.c.h.b16 %v465
    %v1752 = vunpack.c.l.b16 %v466
    %v1753 = vunpack.c.h.b16 %v466
    %v1754 = vunpack.c.l.b16 %v467
    %v1755 = vunpack.c.h.b16 %v467
    %v1756 = vunpack.c.l.b16 %v468
    %v1757 = vunpack.c.h.b16 %v468
    %v1758 = vunpack.c.l.b16 %v469
    %v1759 = vunpack.c.h.b16 %v469
    %v1760 = vunpack.c.l.b16 %v470
    %v1761 = vunpack.c.h.b16 %v470
    %v1762 = vunpack.c.l.b16 %v471
    %v1763 = vunpack.c.h.b16 %v471
    %v1764 = vunpack.c.l.b16 %v472
    %v1765 = vunpack.c.h.b16 %v472
    %v1766 = vunpack.c.l.b16 %v473
    %v1767 = vunpack.c.h.b16 %v473
    %v1768 = vunpack.c.l.b16 %v474
    %v1769 = vunpack.c.h.b16 %v474
    %v1770 = vunpack.c.l.b16 %v475
    %v1771 = vunpack.c.h.b16 %v475
    %v1772 = vunpack.c.l.b16 %v476
    %v1773 = vunpack.c.h.b16 %v476
    %v1774 = vunpack.c.l.b16 %v477
    %v1775 = vunpack.c.h.b16 %v477
    %v1776 = vunpack.c.l.b16 %v478
    %v1777 = vunpack.c.h.b16 %v478
    %v1778 = vunpack.c.l.b16 %v479
    %v1779 = vunpack.c.h.b16 %v479
    %v1780 = vunpack.c.l.b16 %v480
    %v1781 = vunpack.c.h.b16 %v480
    %v1782 = vunpack.c.l.b16 %v481
    %v1783 = vunpack.c.h.b16 %v481
    %v1784 = vunpack.c.l.b16 %v482
    %v1785 = vunpack.c.h.b16 %v482
    %v1786 = vunpack.c.l.b16 %v483
    %v1787 = vunpack.c.h.b16 %v483
    %v1788 = vunpack.c.l.b16 %v484
    %v1789 = vunpack.c.h.b16 %v484
    %v1790 = vunpack.c.l.b16 %v485
    %v1791 = vunpack.c.h.b16 %v485
    %v1792 = vunpack.c.l.b16 %v486
    %v1793 = vunpack.c.h.b16 %v486
    %v1794 = vunpack.c.l.b16 %v487
    %v1795 = vunpack.c.h.b16 %v487
    %v1796 = vunpack.c.l.b16 %v488
    %v1797 = vunpack.c.h.b16 %v488
    %v1798 = vunpack.c.l.b16 %v489
    %v1799 = vunpack.c.h.b16 %v489
    %v1800 = vunpack.c.l.b16 %v490
    %v1801 = vunpack.c.h.b16 %v490
    %v1802 = vunpack.c.l.b16 %v491
    %v1803 = vunpack.c.h.b16 %v491
    %v1804 = vunpack.c.l.b16 %v492
    %v1805 = vunpack.c.h.b16 %v492
    %v1806 = vunpack.c.l.b16 %v493
    %v1807 = vunpack.c.h.b16 %v493
    %v1808 = vunpack.c.l.b16 %v494
    %v1809 = vunpack.c.h.b16 %v494
    %v1810 = vunpack.c.l.b16 %v495
    %v1811 = vunpack.c.h.b16 %v495
    %v1812 = vunpack.c.l.b16 %v496
    %v1813 = vunpack.c.h.b16 %v496
    %v1814 = vunpack.c.l.b16 %v497
    %v1815 = vunpack.c.h.b16 %v497
    %v1816 = vunpack.c.l.b16 %v498
    %v1817 = vunpack.c.h.b16 %v498
    %v1818 = vunpack.c.l.b16 %v499
    %v1819 = vunpack.c.h.b16 %v499
    %v1820 = vunpack.c.l.b16 %v500
    %v1821 = vunpack.c.h.b16 %v500
    %v1822 = vunpack.c.l.b16 %v501
    %v1823 = vunpack.c.h.b16 %v501
    %v1824 = vunpack.c.l.b16 %v502
    %v1825 = vunpack.c.h.b16 %v502
    %v1826 = vunpack.c.l.b16 %v503
    %v1827 = vunpack.c.h.b16 %v503
    %v1828 = vunpack.c.l.b16 %v504
    %v1829 = vunpack.c.h.b16 %v504
    %v1830 = vunpack.c.l.b16 %v505
    %v1831 = vunpack.c.h.b16 %v505
    %v1832 = vunpack.c.l.b16 %v506
    %v1833 = vunpack.c.h.b16 %v506
    %v1834 = vunpack.c.l.b16 %v507
    %v1835 = vunpack.c.h.b16 %v507
    %v1836 = vunpack.c.l.b16 %v508
    %v1837 = vunpack.c.h.b16 %v508
    %v1838 = vunpack.c.l.b16 %v509
    %v1839 = vunpack.c.h.b16 %v509
    %v1840 = vunpack.c.l.b16 %v510
    %v1841 = vunpack.c.h.b16 %v510
    %v1842 = vunpack.c.l.b16 %v511
    %v1843 = vunpack.c.h.b16 %v511
    %v1844 = vunpack.c.l.b16 %v512
    %v1845 = vunpack.c.h.b16 %v512
    %v1846 = vunpack.c.l.b16 %v513
    %v1847 = vunpack.c.h.b16 %v513
    %v1848 = vunpack.c.l.b16 %v514
    %v1849 = vunpack.c.h.b16 %v514
    %v1850 = vunpack.c.l.b16 %v515
    %v1851 = vunpack.c.h.b16 %v515
    %v1852 = vunpack.c.l.b16 %v516
    %v1853 = vunpack.c.h.b16 %v516
    %v1854 = vunpack.c.l.b16 %v517
    %v1855 = vunpack.c.h.b16 %v517
    %v1856 = vunpack.c.l.b16 %v518
    %v1857 = vunpack.c.h.b16 %v518
    %v1858 = vunpack.c.l.b16 %v519
    %v1859 = vunpack.c.h.b16 %v519
    %v1860 = vunpack.c.l.b16 %v520
    %v1861 = vunpack.c.h.b16 %v520
    %v1862 = vunpack.c.l.b16 %v521
    %v1863 = vunpack.c.h.b16 %v521
    %v1864 = vunpack.c.l.b16 %v522
    %v1865 = vunpack.c.h.b16 %v522
    %v1866 = vunpack.c.l.b16 %v523
    %v1867 = vunpack.c.h.b16 %v523
    %v1868 = vunpack.c.l.b16 %v524
    %v1869 = vunpack.c.h.b16 %v524
    %v1870 = vunpack.c.l.b16 %v525
    %v1871 = vunpack.c.h.b16 %v525
    %v1872 = vunpack.c.l.b16 %v526
    %v1873 = vunpack.c.h.b16 %v526
    %v1874 = vunpack.c.l.b16 %v527
    %v1875 = vunpack.c.h.b16 %v527
    %v1876 = vunpack.c.l.b16 %v528
    %v1877 = vunpack.c.h.b16 %v528
    %v1878 = vunpack.c.l.b16 %v529
    %v1879 = vunpack.c.h.b16 %v529
    %v1880 = vunpack.c.l.b16 %v530
    %v1881 = vunpack.c.h.b16 %v530
    %v1882 = vunpack.c.l.b16 %v531
    %v1883 = vunpack.c.h.b16 %v531
    %v1884 = vunpack.c.l.b16 %v532
    %v1885 = vunpack.c.h.b16 %v532
    %v1886 = vunpack.c.l.b16 %v533
    %v1887 = vunpack.c.h.b16 %v533
    %v1888 = vunpack.c.l.b16 %v534
    %v1889 = vunpack.c.h.b16 %v534
    %v1890 = vunpack.c.l.b16 %v535
    %v1891 = vunpack.c.h.b16 %v535
    %v1892 = vunpack.c.l.b16 %v536
    %v1893 = vunpack.c.h.b16 %v536
    %v1894 = vunpack.c.l.b16 %v537
    %v1895 = vunpack.c.h.b16 %v537
    %v1896 = vunpack.c.l.b16 %v538
    %v1897 = vunpack.c.h.b16 %v538
    %v1898 = vunpack.c.l.b16 %v539
    %v1899 = vunpack.c.h.b16 %v539
    %v1900 = vunpack.c.l.b16 %v540
    %v1901 = vunpack.c.h.b16 %v540
    %v1902 = vunpack.c.l.b16 %v541
    %v1903 = vunpack.c.h.b16 %v541
    %v1904 = vunpack.c.l.b16 %v542
    %v1905 = vunpack.c.h.b16 %v542
    %v1906 = vunpack.c.l.b16 %v543
    %v1907 = vunpack.c.h.b16 %v543
    %v1908 = vunpack.c.l.b16 %v544
    %v1909 = vunpack.c.h.b16 %v544
    %v1910 = vunpack.c.l.b16 %v545
    %v1911 = vunpack.c.h.b16 %v545
    %v1912 = vunpack.c.l.b16 %v546
    %v1913 = vunpack.c.h.b16 %v546
    %v1914 = vunpack.c.l.b16 %v547
    %v1915 = vunpack.c.h.b16 %v547
    %v1916 = vunpack.c.l.b16 %v548
    %v1917 = vunpack.c.h.b16 %v548
    %v1918 = vunpack.c.l.b16 %v549
    %v1919 = vunpack.c.h.b16 %v549
    %v1920 = vunpack.c.l.b16 %v550
    %v1921 = vunpack.c.h.b16 %v550
    %v1922 = vunpack.c.l.b16 %v551
    %v1923 = vunpack.c.h.b16 %v551
    %v1924 = vunpack.c.l.b16 %v552
    %v1925 = vunpack.c.h.b16 %v552
    %v1926 = vunpack.c.l.b16 %v553
    %v1927 = vunpack.c.h.b16 %v553
    %v1928 = vunpack.c.l.b16 %v554
    %v1929 = vunpack.c.h.b16 %v554
    %v1930 = vunpack.c.l.b16 %v555
    %v1931 = vunpack.c.h.b16 %v555
    %v1932 = vunpack.c.l.b16 %v556
    %v1933 = vunpack.c.h.b16 %v556
    %v1934 = vunpack.c.l.b16 %v557
    %v1935 = vunpack.c.h.b16 %v557
    %v1936 = vunpack.c.l.b16 %v558
    %v1937 = vunpack.c.h.b16 %v558
    %v1938 = vunpack.c.l.b16 %v559
    %v1939 = vunpack.c.h.b16 %v559
    %v1940 = vunpack.c.l.b16 %v560
    %v1941 = vunpack.c.h.b16 %v560
    %v1942 = vunpack.c.l.b16 %v561
    %v1943 = vunpack.c.h.b16 %v561
    %v1944 = vunpack.c.l.b16 %v562
    %v1945 = vunpack.c.h.b16 %v562
    %v1946 = vunpack.c.l.b16 %v563
    %v1947 = vunpack.c.h.b16 %v563
    %v1948 = vunpack.c.l.b16 %v564
    %v1949 = vunpack.c.h.b16 %v564
    %v1950 = vunpack.c.l.b16 %v565
    %v1951 = vunpack.c.h.b16 %v565
    %v1952 = vunpack.c.l.b16 %v566
    %v1953 = vunpack.c.h.b16 %v566
    %v1954 = vpack.c.b16 %v1066, %v1058
    %v1955 = vpack.c.b16 %v1067, %v1059
    %v1956 = vpack.c.b16 %v1068, %v1060
    %v1957 = vpack.c.b16 %v1069, %v1061
    %v1958 = vpack.c.b16 %v1070, %v1062
    %v1959 = vpack.c.b16 %v1071, %v1063
    %v1960 = vpack.c.b16 %v1072, %v1064
    %v1961 = vpack.c.b16 %v1073, %v1065
    %v1962 = vpack.c.b16 %v1082, %v1074
    %v1963 = vpack.c.b16 %v1083, %v1075
    %v1964 = vpack.c.b16 %v1084, %v1076
    %v1965 = vpack.c.b16 %v1085, %v1077
    %v1966 = vpack.c.b16 %v1086, %v1078
    %v1967 = vpack.c.b16 %v1087, %v1079
    %v1968 = vpack.c.b16 %v1088, %v1080
    %v1969 = vpack.c.b16 %v1089, %v1081
    %v1970 = vpack.c.b16 %v1098, %v1090
    %v1971 = vpack.c.b16 %v1099, %v1091
    %v1972 = vpack.c.b16 %v1100, %v1092
    %v1973 = vpack.c.b16 %v1101, %v1093
    %v1974 = vpack.c.b16 %v1102, %v1094
    %v1975 = vpack.c.b16 %v1103, %v1095
    %v1976 = vpack.c.b16 %v1104, %v1096
    %v1977 = vpack.c.b16 %v1105, %v1097
    %v1978 = vpack.c.b16 %v1114, %v1106
    %v1979 = vpack.c.b16 %v1115, %v1107
    %v1980 = vpack.c.b16 %v1116, %v1108
    %v1981 = vpack.c.b16 %v1117, %v1109
    %v1982 = vpack.c.b16 %v1118, %v1110
    %v1983 = vpack.c.b16 %v1119, %v1111
    %v1984 = vpack.c.b16 %v1120, %v1112
    %v1985 = vpack.c.b16 %v1121, %v1113
    %v1986 = vpack.c.b16 %v1130, %v1122
    %v1987 = vpack.c.b16 %v1131, %v1123
    %v1988 = vpack.c.b16 %v1132, %v1124
    %v1989 = vpack.c.b16 %v1133, %v1125
    %v1990 = vpack.c.b16 %v1134, %v1126
    %v1991 = vpack.c.b16 %v1135, %v1127
    %v1992 = vpack.c.b16 %v1136, %v1128
    %v1993 = vpack.c.b16 %v1137, %v1129
    %v1994 = vpack.c.b16 %v1146, %v1138
    %v1995 = vpack.c.b16 %v1147, %v1139
    %v1996 = vpack.c.b16 %v1148, %v1140
    %v1997 = vpack.c.b16 %v1149, %v1141
    %v1998 = vpack.c.b16 %v1150, %v1142
    %v1999 = vpack.c.b16 %v1151, %v1143
    %v2000 = vpack.c.b16 %v1152, %v1144
    %v2001 = vpack.c.b16 %v1153, %v1145
    %v2002 = vpack.c.b16 %v1162, %v1154
    %v2003 = vpack.c.b16 %v1163, %v1155
    %v2004 = vpack.c.b16 %v1164, %v1156
    %v2005 = vpack.c.b16 %v1165, %v1157
    %v2006 = vpack.c.b16 %v1166, %v1158
    %v2007 = vpack.c.b16 %v1167, %v1159
    %v2008 = vpack.c.b16 %v1168, %v1160
    %v2009 = vpack.c.b16 %v1169, %v1161
    %v2010 = vpack.c.b16 %v1178, %v1170
    %v2011 = vpack.c.b16 %v1179, %v1171
    %v2012 = vpack.c.b16 %v1180, %v1172
    %v2013 = vpack.c.b16 %v1181, %v1173
    %v2014 = vpack.c.b16 %v1182, %v1174
    %v2015 = vpack.c.b16 %v1183, %v1175
    %v2016 = vpack.c.b16 %v1184, %v1176
    %v2017 = vpack.c.b16 %v1185, %v1177
    %v2018 = vpack.c.b16 %v1194, %v1186
    %v2019 = vpack.c.b16 %v1195, %v1187
    %v2020 = vpack.c.b16 %v1196, %v1188
    %v2021 = vpack.c.b16 %v1197, %v1189
    %v2022 = vpack.c.b16 %v1198, %v1190
    %v2023 = vpack.c.b16 %v1199, %v1191
    %v2024 = vpack.c.b16 %v1200, %v1192
    %v2025 = vpack.c.b16 %v1201, %v1193
    %v2026 = vpack.c.b16 %v1210, %v1202
    %v2027 = vpack.c.b16 %v1211, %v1203
    %v2028 = vpack.c.b16 %v1212, %v1204
    %v2029 = vpack.c.b16 %v1213, %v1205
    %v2030 = vpack.c.b16 %v1214, %v1206
    %v2031 = vpack.c.b16 %v1215, %v1207
    %v2032 = vpack.c.b16 %v1216, %v1208
    %v2033 = vpack.c.b16 %v1217, %v1209
    %v2034 = vpack.c.b16 %v1226, %v1218
    %v2035 = vpack.c.b16 %v1227, %v1219
    %v2036 = vpack.c.b16 %v1228, %v1220
    %v2037 = vpack.c.b16 %v1229, %v1221
    %v2038 = vpack.c.b16 %v1230, %v1222
    %v2039 = vpack.c.b16 %v1231, %v1223
    %v2040 = vpack.c.b16 %v1232, %v1224
    %v2041 = vpack.c.b16 %v1233, %v1225
    %v2042 = vpack.c.b16 %v1242, %v1234
    %v2043 = vpack.c.b16 %v1243, %v1235
    %v2044 = vpack.c.b16 %v1244, %v1236
    %v2045 = vpack.c.b16 %v1245, %v1237
    %v2046 = vpack.c.b16 %v1246, %v1238
    %v2047 = vpack.c.b16 %v1247, %v1239
    %v2048 = vpack.c.b16 %v1248, %v1240
    %v2049 = vpack.c.b16 %v1249, %v1241
    %v2050 = vpack.c.b16 %v1258, %v1250
    %v2051 = vpack.c.b16 %v1259, %v1251
    %v2052 = vpack.c.b16 %v1260, %v1252
    %v2053 = vpack.c.b16 %v1261, %v1253
    %v2054 = vpack.c.b16 %v1262, %v1254
    %v2055 = vpack.c.b16 %v1263, %v1255
    %v2056 = vpack.c.b16 %v1264, %v1256
    %v2057 = vpack.c.b16 %v1265, %v1257
    %v2058 = vpack.c.b16 %v1274, %v1266
    %v2059 = vpack.c.b16 %v1275, %v1267
    %v2060 = vpack.c.b16 %v1276, %v1268
    %v2061 = vpack.c.b16 %v1277, %v1269
    %v2062 = vpack.c.b16 %v1278, %v1270
    %v2063 = vpack.c.b16 %v1279, %v1271
    %v2064 = vpack.c.b16 %v1280, %v1272
    %v2065 = vpack.c.b16 %v1281, %v1273
    %v2066 = vpack.c.b16 %v1290, %v1282
    %v2067 = vpack.c.b16 %v1291, %v1283
    %v2068 = vpack.c.b16 %v1292, %v1284
    %v2069 = vpack.c.b16 %v1293, %v1285
    %v2070 = vpack.c.b16 %v1294, %v1286
    %v2071 = vpack.c.b16 %v1295, %v1287
    %v2072 = vpack.c.b16 %v1296, %v1288
    %v2073 = vpack.c.b16 %v1297, %v1289
    %v2074 = vpack.c.b16 %v1306, %v1298
    %v2075 = vpack.c.b16 %v1307, %v1299
    %v2076 = vpack.c.b16 %v1308, %v1300
    %v2077 = vpack.c.b16 %v1309, %v1301
    %v2078 = vpack.c.b16 %v1310, %v1302
    %v2079 = vpack.c.b16 %v1311, %v1303
    %v2080 = vpack.c.b16 %v1312, %v1304
    %v2081 = vpack.c.b16 %v1313, %v1305
    %v2082 = vpack.c.b16 %v1322, %v1314
    %v2083 = vpack.c.b16 %v1323, %v1315
    %v2084 = vpack.c.b16 %v1324, %v1316
    %v2085 = vpack.c.b16 %v1325, %v1317
    %v2086 = vpack.c.b16 %v1326, %v1318
    %v2087 = vpack.c.b16 %v1327, %v1319
    %v2088 = vpack.c.b16 %v1328, %v1320
    %v2089 = vpack.c.b16 %v1329, %v1321
    %v2090 = vpack.c.b16 %v1338, %v1330
    %v2091 = vpack.c.b16 %v1339, %v1331
    %v2092 = vpack.c.b16 %v1340, %v1332
    %v2093 = vpack.c.b16 %v1341, %v1333
    %v2094 = vpack.c.b16 %v1342, %v1334
    %v2095 = vpack.c.b16 %v1343, %v1335
    %v2096 = vpack.c.b16 %v1344, %v1336
    %v2097 = vpack.c.b16 %v1345, %v1337
    %v2098 = vpack.c.b16 %v1354, %v1346
    %v2099 = vpack.c.b16 %v1355, %v1347
    %v2100 = vpack.c.b16 %v1356, %v1348
    %v2101 = vpack.c.b16 %v1357, %v1349
    %v2102 = vpack.c.b16 %v1358, %v1350
    %v2103 = vpack.c.b16 %v1359, %v1351
    %v2104 = vpack.c.b16 %v1360, %v1352
    %v2105 = vpack.c.b16 %v1361, %v1353
    %v2106 = vpack.c.b16 %v1370, %v1362
    %v2107 = vpack.c.b16 %v1371, %v1363
    %v2108 = vpack.c.b16 %v1372, %v1364
    %v2109 = vpack.c.b16 %v1373, %v1365
    %v2110 = vpack.c.b16 %v1374, %v1366
    %v2111 = vpack.c.b16 %v1375, %v1367
    %v2112 = vpack.c.b16 %v1376, %v1368
    %v2113 = vpack.c.b16 %v1377, %v1369
    %v2114 = vpack.c.b16 %v1386, %v1378
    %v2115 = vpack.c.b16 %v1387, %v1379
    %v2116 = vpack.c.b16 %v1388, %v1380
    %v2117 = vpack.c.b16 %v1389, %v1381
    %v2118 = vpack.c.b16 %v1390, %v1382
    %v2119 = vpack.c.b16 %v1391, %v1383
    %v2120 = vpack.c.b16 %v1392, %v1384
    %v2121 = vpack.c.b16 %v1393, %v1385
    %v2122 = vpack.c.b16 %v1402, %v1394
    %v2123 = vpack.c.b16 %v1403, %v1395
    %v2124 = vpack.c.b16 %v1404, %v1396
    %v2125 = vpack.c.b16 %v1405, %v1397
    %v2126 = vpack.c.b16 %v1406, %v1398
    %v2127 = vpack.c.b16 %v1407, %v1399
    %v2128 = vpack.c.b16 %v1408, %v1400
    %v2129 = vpack.c.b16 %v1409, %v1401
    %v2130 = vpack.c.b16 %v1418, %v1410
    %v2131 = vpack.c.b16 %v1419, %v1411
    %v2132 = vpack.c.b16 %v1420, %v1412
    %v2133 = vpack.c.b16 %v1421, %v1413
    %v2134 = vpack.c.b16 %v1422, %v1414
    %v2135 = vpack.c.b16 %v1423, %v1415
    %v2136 = vpack.c.b16 %v1424, %v1416
    %v2137 = vpack.c.b16 %v1425, %v1417
    %v2138 = vpack.c.b16 %v1434, %v1426
    %v2139 = vpack.c.b16 %v1435, %v1427
    %v2140 = vpack.c.b16 %v1436, %v1428
    %v2141 = vpack.c.b16 %v1437, %v1429
    %v2142 = vpack.c.b16 %v1438, %v1430
    %v2143 = vpack.c.b16 %v1439, %v1431
    %v2144 = vpack.c.b16 %v1440, %v1432
    %v2145 = vpack.c.b16 %v1441, %v1433
    %v2146 = vpack.c.b16 %v1450, %v1442
    %v2147 = vpack.c.b16 %v1451, %v1443
    %v2148 = vpack.c.b16 %v1452, %v1444
    %v2149 = vpack.c.b16 %v1453, %v1445
    %v2150 = vpack.c.b16 %v1454, %v1446
    %v2151 = vpack.c.b16 %v1455, %v1447
    %v2152 = vpack.c.b16 %v1456, %v1448
    %v2153 = vpack.c.b16 %v1457, %v1449
    %v2154 = vpack.c.b16 %v1466, %v1458
    %v2155 = vpack.c.b16 %v1467, %v1459
    %v2156 = vpack.c.b16 %v1468, %v1460
    %v2157 = vpack.c.b16 %v1469, %v1461
    %v2158 = vpack.c.b16 %v1470, %v1462
    %v2159 = vpack.c.b16 %v1471, %v1463
    %v2160 = vpack.c.b16 %v1472, %v1464
    %v2161 = vpack.c.b16 %v1473, %v1465
    %v2162 = vpack.c.b16 %v1482, %v1474
    %v2163 = vpack.c.b16 %v1483, %v1475
    %v2164 = vpack.c.b16 %v1484, %v1476
    %v2165 = vpack.c.b16 %v1485, %v1477
    %v2166 = vpack.c.b16 %v1486, %v1478
    %v2167 = vpack.c.b16 %v1487, %v1479
    %v2168 = vpack.c.b16 %v1488, %v1480
    %v2169 = vpack.c.b16 %v1489, %v1481
    %v2170 = vpack.c.b16 %v1498, %v1490
    %v2171 = vpack.c.b16 %v1499, %v1491
    %v2172 = vpack.c.b16 %v1500, %v1492
    %v2173 = vpack.c.b16 %v1501, %v1493
    %v2174 = vpack.c.b16 %v1502, %v1494
    %v2175 = vpack.c.b16 %v1503, %v1495
    %v2176 = vpack.c.b16 %v1504, %v1496
    %v2177 = vpack.c.b16 %v1505, %v1497
    %v2178 = vpack.c.b16 %v1514, %v1506
    %v2179 = vpack.c.b16 %v1515, %v1507
    %v2180 = vpack.c.b16 %v1516, %v1508
    %v2181 = vpack.c.b16 %v1517, %v1509
    %v2182 = vpack.c.b16 %v1518, %v1510
    %v2183 = vpack.c.b16 %v1519, %v1511
    %v2184 = vpack.c.b16 %v1520, %v1512
    %v2185 = vpack.c.b16 %v1521, %v1513
    %v2186 = vpack.c.b16 %v1530, %v1522
    %v2187 = vpack.c.b16 %v1531, %v1523
    %v2188 = vpack.c.b16 %v1532, %v1524
    %v2189 = vpack.c.b16 %v1533, %v1525
    %v2190 = vpack.c.b16 %v1534, %v1526
    %v2191 = vpack.c.b16 %v1535, %v1527
    %v2192 = vpack.c.b16 %v1536, %v1528
    %v2193 = vpack.c.b16 %v1537, %v1529
    %v2194 = vpack.c.b16 %v1546, %v1538
    %v2195 = vpack.c.b16 %v1547, %v1539
    %v2196 = vpack.c.b16 %v1548, %v1540
    %v2197 = vpack.c.b16 %v1549, %v1541
    %v2198 = vpack.c.b16 %v1550, %v1542
    %v2199 = vpack.c.b16 %v1551, %v1543
    %v2200 = vpack.c.b16 %v1552, %v1544
    %v2201 = vpack.c.b16 %v1553, %v1545
    %v2202 = vpack.c.b16 %v1562, %v1554
    %v2203 = vpack.c.b16 %v1563, %v1555
    %v2204 = vpack.c.b16 %v1564, %v1556
    %v2205 = vpack.c.b16 %v1565, %v1557
    %v2206 = vpack.c.b16 %v1566, %v1558
    %v2207 = vpack.c.b16 %v1567, %v1559
    %v2208 = vpack.c.b16 %v1568, %v1560
    %v2209 = vpack.c.b16 %v1569, %v1561
    %v2210 = vpack.c.b16 %v1578, %v1570
    %v2211 = vpack.c.b16 %v1579, %v1571
    %v2212 = vpack.c.b16 %v1580, %v1572
    %v2213 = vpack.c.b16 %v1581, %v1573
    %v2214 = vpack.c.b16 %v1582, %v1574
    %v2215 = vpack.c.b16 %v1583, %v1575
    %v2216 = vpack.c.b16 %v1584, %v1576
    %v2217 = vpack.c.b16 %v1585, %v1577
    %v2218 = vpack.c.b16 %v1594, %v1586
    %v2219 = vpack.c.b16 %v1595, %v1587
    %v2220 = vpack.c.b16 %v1596, %v1588
    %v2221 = vpack.c.b16 %v1597, %v1589
    %v2222 = vpack.c.b16 %v1598, %v1590
    %v2223 = vpack.c.b16 %v1599, %v1591
    %v2224 = vpack.c.b16 %v1600, %v1592
    %v2225 = vpack.c.b16 %v1601, %v1593
    %v2226 = vpack.c.b16 %v1610, %v1602
    %v2227 = vpack.c.b16 %v1611, %v1603
    %v2228 = vpack.c.b16 %v1612, %v1604
    %v2229 = vpack.c.b16 %v1613, %v1605
    %v2230 = vpack.c.b16 %v1614, %v1606
    %v2231 = vpack.c.b16 %v1615, %v1607
    %v2232 = vpack.c.b16 %v1616, %v1608
    %v2233 = vpack.c.b16 %v1617, %v1609
    %v2234 = vpack.c.b16 %v1626, %v1618
    %v2235 = vpack.c.b16 %v1627, %v1619
    %v2236 = vpack.c.b16 %v1628, %v1620
    %v2237 = vpack.c.b16 %v1629, %v1621
    %v2238 = vpack.c.b16 %v1630, %v1622
    %v2239 = vpack.c.b16 %v1631, %v1623
    %v2240 = vpack.c.b16 %v1632, %v1624
    %v2241 = vpack.c.b16 %v1633, %v1625
    %v2242 = vpack.c.b16 %v1642, %v1634
    %v2243 = vpack.c.b16 %v1643, %v1635
    %v2244 = vpack.c.b16 %v1644, %v1636
    %v2245 = vpack.c.b16 %v1645, %v1637
    %v2246 = vpack.c.b16 %v1646, %v1638
    %v2247 = vpack.c.b16 %v1647, %v1639
    %v2248 = vpack.c.b16 %v1648, %v1640
    %v2249 = vpack.c.b16 %v1649, %v1641
    %v2250 = vpack.c.b16 %v1658, %v1650
    %v2251 = vpack.c.b16 %v1659, %v1651
    %v2252 = vpack.c.b16 %v1660, %v1652
    %v2253 = vpack.c.b16 %v1661, %v1653
    %v2254 = vpack.c.b16 %v1662, %v1654
    %v2255 = vpack.c.b16 %v1663, %v1655
    %v2256 = vpack.c.b16 %v1664, %v1656
    %v2257 = vpack.c.b16 %v1665, %v1657
    %v2258 = vpack.c.b16 %v1674, %v1666
    %v2259 = vpack.c.b16 %v1675, %v1667
    %v2260 = vpack.c.b16 %v1676, %v1668
    %v2261 = vpack.c.b16 %v1677, %v1669
    %v2262 = vpack.c.b16 %v1678, %v1670
    %v2263 = vpack.c.b16 %v1679, %v1671
    %v2264 = vpack.c.b16 %v1680, %v1672
    %v2265 = vpack.c.b16 %v1681, %v1673
    %v2266 = vpack.c.b16 %v1690, %v1682
    %v2267 = vpack.c.b16 %v1691, %v1683
    %v2268 = vpack.c.b16 %v1692, %v1684
    %v2269 = vpack.c.b16 %v1693, %v1685
    %v2270 = vpack.c.b16 %v1694, %v1686
    %v2271 = vpack.c.b16 %v1695, %v1687
    %v2272 = vpack.c.b16 %v1696, %v1688
    %v2273 = vpack.c.b16 %v1697, %v1689
    %v2274 = vpack.c.b16 %v1706, %v1698
    %v2275 = vpack.c.b16 %v1707, %v1699
    %v2276 = vpack.c.b16 %v1708, %v1700
    %v2277 = vpack.c.b16 %v1709, %v1701
    %v2278 = vpack.c.b16 %v1710, %v1702
    %v2279 = vpack.c.b16 %v1711, %v1703
    %v2280 = vpack.c.b16 %v1712, %v1704
    %v2281 = vpack.c.b16 %v1713, %v1705
    %v2282 = vpack.c.b16 %v1722, %v1714
    %v2283 = vpack.c.b16 %v1723, %v1715
    %v2284 = vpack.c.b16 %v1724, %v1716
    %v2285 = vpack.c.b16 %v1725, %v1717
    %v2286 = vpack.c.b16 %v1726, %v1718
    %v2287 = vpack.c.b16 %v1727, %v1719
    %v2288 = vpack.c.b16 %v1728, %v1720
    %v2289 = vpack.c.b16 %v1729, %v1721
    %v2290 = vpack.c.b16 %v1738, %v1730
    %v2291 = vpack.c.b16 %v1739, %v1731
    %v2292 = vpack.c.b16 %v1740, %v1732
    %v2293 = vpack.c.b16 %v1741, %v1733
    %v2294 = vpack.c.b16 %v1742, %v1734
    %v2295 = vpack.c.b16 %v1743, %v1735
    %v2296 = vpack.c.b16 %v1744, %v1736
    %v2297 = vpack.c.b16 %v1745, %v1737
    %v2298 = vpack.c.b16 %v1754, %v1746
    %v2299 = vpack.c.b16 %v1755, %v1747
    %v2300 = vpack.c.b16 %v1756, %v1748
    %v2301 = vpack.c.b16 %v1757, %v1749
    %v2302 = vpack.c.b16 %v1758, %v1750
    %v2303 = vpack.c.b16 %v1759, %v1751
    %v2304 = vpack.c.b16 %v1760, %v1752
    %v2305 = vpack.c.b16 %v1761, %v1753
    %v2306 = vpack.c.b16 %v1770, %v1762
    %v2307 = vpack.c.b16 %v1771, %v1763
    %v2308 = vpack.c.b16 %v1772, %v1764
    %v2309 = vpack.c.b16 %v1773, %v1765
    %v2310 = vpack.c.b16 %v1774, %v1766
    %v2311 = vpack.c.b16 %v1775, %v1767
    %v2312 = vpack.c.b16 %v1776, %v1768
    %v2313 = vpack.c.b16 %v1777, %v1769
    %v2314 = vpack.c.b16 %v1786, %v1778
    %v2315 = vpack.c.b16 %v1787, %v1779
    %v2316 = vpack.c.b16 %v1788, %v1780
    %v2317 = vpack.c.b16 %v1789, %v1781
    %v2318 = vpack.c.b16 %v1790, %v1782
    %v2319 = vpack.c.b16 %v1791, %v1783
    %v2320 = vpack.c.b16 %v1792, %v1784
    %v2321 = vpack.c.b16 %v1793, %v1785
    %v2322 = vpack.c.b16 %v1802, %v1794
    %v2323 = vpack.c.b16 %v1803, %v1795
    %v2324 = vpack.c.b16 %v1804, %v1796
    %v2325 = vpack.c.b16 %v1805, %v1797
    %v2326 = vpack.c.b16 %v1806, %v1798
    %v2327 = vpack.c.b16 %v1807, %v1799
    %v2328 = vpack.c.b16 %v1808, %v1800
    %v2329 = vpack.c.b16 %v1809, %v1801
    %v2330 = vpack.c.b16 %v1818, %v1810
    %v2331 = vpack.c.b16 %v1819, %v1811
    %v2332 = vpack.c.b16 %v1820, %v1812
    %v2333 = vpack.c.b16 %v1821, %v1813
    %v2334 = vpack.c.b16 %v1822, %v1814
    %v2335 = vpack.c.b16 %v1823, %v1815
    %v2336 = vpack.c.b16 %v1824, %v1816
    %v2337 = vpack.c.b16 %v1825, %v1817
    %v2338 = vpack.c.b16 %v1834, %v1826
    %v2339 = vpack.c.b16 %v1835, %v1827
    %v2340 = vpack.c.b16 %v1836, %v1828
    %v2341 = vpack.c.b16 %v1837, %v1829
    %v2342 = vpack.c.b16 %v1838, %v1830
    %v2343 = vpack.c.b16 %v1839, %v1831
    %v2344 = vpack.c.b16 %v1840, %v1832
    %v2345 = vpack.c.b16 %v1841, %v1833
    %v2346 = vpack.c.b16 %v1850, %v1842
    %v2347 = vpack.c.b16 %v1851, %v1843
    %v2348 = vpack.c.b16 %v1852, %v1844
    %v2349 = vpack.c.b16 %v1853, %v1845
    %v2350 = vpack.c.b16 %v1854, %v1846
    %v2351 = vpack.c.b16 %v1855, %v1847
    %v2352 = vpack.c.b16 %v1856, %v1848
    %v2353 = vpack.c.b16 %v1857, %v1849
    %v2354 = vpack.c.b16 %v1866, %v1858
    %v2355 = vpack.c.b16 %v1867, %v1859
    %v2356 = vpack.c.b16 %v1868, %v1860
    %v2357 = vpack.c.b16 %v1869, %v1861
    %v2358 = vpack.c.b16 %v1870, %v1862
    %v2359 = vpack.c.b16 %v1871, %v1863
    %v2360 = vpack.c.b16 %v1872, %v1864
    %v2361 = vpack.c.b16 %v1873, %v1865
    %v2362 = vpack.c.b16 %v1882, %v1874
    %v2363 = vpack.c.b16 %v1883, %v1875
    %v2364 = vpack.c.b16 %v1884, %v1876
    %v2365 = vpack.c.b16 %v1885, %v1877
    %v2366 = vpack.c.b16 %v1886, %v1878
    %v2367 = vpack.c.b16 %v1887, %v1879
    %v2368 = vpack.c.b16 %v1888, %v1880
    %v2369 = vpack.c.b16 %v1889, %v1881
    %v2370 = vpack.c.b16 %v1898, %v1890
    %v2371 = vpack.c.b16 %v1899, %v1891
    %v2372 = vpack.c.b16 %v1900, %v1892
    %v2373 = vpack.c.b16 %v1901, %v1893
    %v2374 = vpack.c.b16 %v1902, %v1894
    %v2375 = vpack.c.b16 %v1903, %v1895
    %v2376 = vpack.c.b16 %v1904, %v1896
    %v2377 = vpack.c.b16 %v1905, %v1897
    %v2378 = vpack.c.b16 %v1914, %v1906
    %v2379 = vpack.c.b16 %v1915, %v1907
    %v2380 = vpack.c.b16 %v1916, %v1908
    %v2381 = vpack.c.b16 %v1917, %v1909
    %v2382 = vpack.c.b16 %v1918, %v1910
    %v2383 = vpack.c.b16 %v1919, %v1911
    %v2384 = vpack.c.b16 %v1920, %v1912
    %v2385 = vpack.c.b16 %v1921, %v1913
    %v2386 = vpack.c.b16 %v1930, %v1922
    %v2387 = vpack.c.b16 %v1931, %v1923
    %v2388 = vpack.c.b16 %v1932, %v1924
    %v2389 = vpack.c.b16 %v1933, %v1925
    %v2390 = vpack.c.b16 %v1934, %v1926
    %v2391 = vpack.c.b16 %v1935, %v1927
    %v2392 = vpack.c.b16 %v1936, %v1928
    %v2393 = vpack.c.b16 %v1937, %v1929
    %v2394 = vpack.c.b16 %v1946, %v1938
    %v2395 = vpack.c.b16 %v1947, %v1939
    %v2396 = vpack.c.b16 %v1948, %v1940
    %v2397 = vpack.c.b16 %v1949, %v1941
    %v2398 = vpack.c.b16 %v1950, %v1942
    %v2399 = vpack.c.b16 %v1951, %v1943
    %v2400 = vpack.c.b16 %v1952, %v1944
    %v2401 = vpack.c.b16 %v1953, %v1945
    %2850 = vmatpush.bf16.msra.mxu0 %v2010
    %2851 = vmatpush.bf16.msra.mxu0 %v2002
    %2852 = vmatpush.bf16.msra.mxu0 %v1994
    %2853 = vmatpush.bf16.msra.mxu0 %v1986
    %2854 = vmatpush.bf16.msra.mxu0 %v1978
    %2855 = vmatpush.bf16.msra.mxu0 %v1970
    %2856 = vmatpush.bf16.msra.mxu0 %v1962
    %2857 = vmatpush.bf16.msra.mxu0 %v1954
    %2858 = vmatmul.bf16.gmra.mxu0 %v596
    %v2859 = vpop.f32.mrf.mxu0
    %v2860 = vadd.f32 %v569, %v2859
    %v2861 = vpop.f32.mrf.mxu0
    %2862 = vdwg.mxu0
    %2863 = vmatpush.bf16.msra.mxu0 %v2074
    %2864 = vmatpush.bf16.msra.mxu0 %v2066
    %2865 = vmatpush.bf16.msra.mxu0 %v2058
    %2866 = vmatpush.bf16.msra.mxu0 %v2050
    %2867 = vmatpush.bf16.msra.mxu0 %v2042
    %2868 = vmatpush.bf16.msra.mxu0 %v2034
    %2869 = vmatpush.bf16.msra.mxu0 %v2026
    %2870 = vmatpush.bf16.msra.mxu0 %v2018
    %2871 = vmatmul.bf16.gmra.mxu0 %v597
    %v2872 = vpop.f32.mrf.mxu0
    %v2873 = vadd.f32 %v2860, %v2872
    %v2874 = vpop.f32.mrf.mxu0
    %2875 = vdwg.mxu0
    %2876 = vmatpush.bf16.msra.mxu0 %v2138
    %2877 = vmatpush.bf16.msra.mxu0 %v2130
    %2878 = vmatpush.bf16.msra.mxu0 %v2122
    %2879 = vmatpush.bf16.msra.mxu0 %v2114
    %2880 = vmatpush.bf16.msra.mxu0 %v2106
    %2881 = vmatpush.bf16.msra.mxu0 %v2098
    %2882 = vmatpush.bf16.msra.mxu0 %v2090
    %2883 = vmatpush.bf16.msra.mxu0 %v2082
    %2884 = vmatmul.bf16.gmra.mxu0 %v598
    %v2885 = vpop.f32.mrf.mxu0
    %v2886 = vadd.f32 %v2873, %v2885
    %v2887 = vpop.f32.mrf.mxu0
    %2888 = vdwg.mxu0
    %2889 = vmatpush.bf16.msra.mxu0 %v2202
    %2890 = vmatpush.bf16.msra.mxu0 %v2194
    %2891 = vmatpush.bf16.msra.mxu0 %v2186
    %2892 = vmatpush.bf16.msra.mxu0 %v2178
    %2893 = vmatpush.bf16.msra.mxu0 %v2170
    %2894 = vmatpush.bf16.msra.mxu0 %v2162
    %2895 = vmatpush.bf16.msra.mxu0 %v2154
    %2896 = vmatpush.bf16.msra.mxu0 %v2146
    %2897 = vmatmul.bf16.gmra.mxu0 %v599
    %v2898 = vpop.f32.mrf.mxu0
    %v2899 = vadd.f32 %v2886, %v2898
    %v2900 = vpop.f32.mrf.mxu0
    %2901 = vdwg.mxu0
    %2902 = vmatpush.bf16.msra.mxu0 %v2266
    %2903 = vmatpush.bf16.msra.mxu0 %v2258
    %2904 = vmatpush.bf16.msra.mxu0 %v2250
    %2905 = vmatpush.bf16.msra.mxu0 %v2242
    %2906 = vmatpush.bf16.msra.mxu0 %v2234
    %2907 = vmatpush.bf16.msra.mxu0 %v2226
    %2908 = vmatpush.bf16.msra.mxu0 %v2218
    %2909 = vmatpush.bf16.msra.mxu0 %v2210
    %2910 = vmatmul.bf16.gmra.mxu0 %v600
    %v2911 = vpop.f32.mrf.mxu0
    %v2912 = vadd.f32 %v2899, %v2911
    %v2913 = vpop.f32.mrf.mxu0
    %2914 = vdwg.mxu0
    %2915 = vmatpush.bf16.msra.mxu0 %v2330
    %2916 = vmatpush.bf16.msra.mxu0 %v2322
    %2917 = vmatpush.bf16.msra.mxu0 %v2314
    %2918 = vmatpush.bf16.msra.mxu0 %v2306
    %2919 = vmatpush.bf16.msra.mxu0 %v2298
    %2920 = vmatpush.bf16.msra.mxu0 %v2290
    %2921 = vmatpush.bf16.msra.mxu0 %v2282
    %2922 = vmatpush.bf16.msra.mxu0 %v2274
    %2923 = vmatmul.bf16.gmra.mxu0 %v601
    %v2924 = vpop.f32.mrf.mxu0
    %v2925 = vadd.f32 %v2912, %v2924
    %v2926 = vpop.f32.mrf.mxu0
    %2927 = vdwg.mxu0
    %2928 = vmatpush.bf16.msra.mxu0 %v2394
    %2929 = vmatpush.bf16.msra.mxu0 %v2386
    %2930 = vmatpush.bf16.msra.mxu0 %v2378
    %2931 = vmatpush.bf16.msra.mxu0 %v2370
    %2932 = vmatpush.bf16.msra.mxu0 %v2362
    %2933 = vmatpush.bf16.msra.mxu0 %v2354
    %2934 = vmatpush.bf16.msra.mxu0 %v2346
    %2935 = vmatpush.bf16.msra.mxu0 %v2338
    %2936 = vmatmul.bf16.gmra.mxu0 %v602
    %v2937 = vpop.f32.mrf.mxu0
    %v2938 = vadd.f32 %v2925, %v2937
    %v2939 = vpop.f32.mrf.mxu0
    %2940 = vdwg.mxu0
    %2941 = vmatpush.bf16.msra.mxu0 %v2011
    %2942 = vmatpush.bf16.msra.mxu0 %v2003
    %2943 = vmatpush.bf16.msra.mxu0 %v1995
    %2944 = vmatpush.bf16.msra.mxu0 %v1987
    %2945 = vmatpush.bf16.msra.mxu0 %v1979
    %2946 = vmatpush.bf16.msra.mxu0 %v1971
    %2947 = vmatpush.bf16.msra.mxu0 %v1963
    %2948 = vmatpush.bf16.msra.mxu0 %v1955
    %2949 = vmatmul.bf16.gmra.mxu0 %v596
    %v2950 = vpop.f32.mrf.mxu0
    %v2951 = vadd.f32 %v570, %v2950
    %v2952 = vpop.f32.mrf.mxu0
    %2953 = vdwg.mxu0
    %2954 = vmatpush.bf16.msra.mxu0 %v2075
    %2955 = vmatpush.bf16.msra.mxu0 %v2067
    %2956 = vmatpush.bf16.msra.mxu0 %v2059
    %2957 = vmatpush.bf16.msra.mxu0 %v2051
    %2958 = vmatpush.bf16.msra.mxu0 %v2043
    %2959 = vmatpush.bf16.msra.mxu0 %v2035
    %2960 = vmatpush.bf16.msra.mxu0 %v2027
    %2961 = vmatpush.bf16.msra.mxu0 %v2019
    %2962 = vmatmul.bf16.gmra.mxu0 %v597
    %v2963 = vpop.f32.mrf.mxu0
    %v2964 = vadd.f32 %v2951, %v2963
    %v2965 = vpop.f32.mrf.mxu0
    %2966 = vdwg.mxu0
    %2967 = vmatpush.bf16.msra.mxu0 %v2139
    %2968 = vmatpush.bf16.msra.mxu0 %v2131
    %2969 = vmatpush.bf16.msra.mxu0 %v2123
    %2970 = vmatpush.bf16.msra.mxu0 %v2115
    %2971 = vmatpush.bf16.msra.mxu0 %v2107
    %2972 = vmatpush.bf16.msra.mxu0 %v2099
    %2973 = vmatpush.bf16.msra.mxu0 %v2091
    %2974 = vmatpush.bf16.msra.mxu0 %v2083
    %2975 = vmatmul.bf16.gmra.mxu0 %v598
    %v2976 = vpop.f32.mrf.mxu0
    %v2977 = vadd.f32 %v2964, %v2976
    %v2978 = vpop.f32.mrf.mxu0
    %2979 = vdwg.mxu0
    %2980 = vmatpush.bf16.msra.mxu0 %v2203
    %2981 = vmatpush.bf16.msra.mxu0 %v2195
    %2982 = vmatpush.bf16.msra.mxu0 %v2187
    %2983 = vmatpush.bf16.msra.mxu0 %v2179
    %2984 = vmatpush.bf16.msra.mxu0 %v2171
    %2985 = vmatpush.bf16.msra.mxu0 %v2163
    %2986 = vmatpush.bf16.msra.mxu0 %v2155
    %2987 = vmatpush.bf16.msra.mxu0 %v2147
    %2988 = vmatmul.bf16.gmra.mxu0 %v599
    %v2989 = vpop.f32.mrf.mxu0
    %v2990 = vadd.f32 %v2977, %v2989
    %v2991 = vpop.f32.mrf.mxu0
    %2992 = vdwg.mxu0
    %2993 = vmatpush.bf16.msra.mxu0 %v2267
    %2994 = vmatpush.bf16.msra.mxu0 %v2259
    %2995 = vmatpush.bf16.msra.mxu0 %v2251
    %2996 = vmatpush.bf16.msra.mxu0 %v2243
    %2997 = vmatpush.bf16.msra.mxu0 %v2235
    %2998 = vmatpush.bf16.msra.mxu0 %v2227
    %2999 = vmatpush.bf16.msra.mxu0 %v2219
    %3000 = vmatpush.bf16.msra.mxu0 %v2211
    %3001 = vmatmul.bf16.gmra.mxu0 %v600
    %v3002 = vpop.f32.mrf.mxu0
    %v3003 = vadd.f32 %v2990, %v3002
    %v3004 = vpop.f32.mrf.mxu0
    %3005 = vdwg.mxu0
    %3006 = vmatpush.bf16.msra.mxu0 %v2331
    %3007 = vmatpush.bf16.msra.mxu0 %v2323
    %3008 = vmatpush.bf16.msra.mxu0 %v2315
    %3009 = vmatpush.bf16.msra.mxu0 %v2307
    %3010 = vmatpush.bf16.msra.mxu0 %v2299
    %3011 = vmatpush.bf16.msra.mxu0 %v2291
    %3012 = vmatpush.bf16.msra.mxu0 %v2283
    %3013 = vmatpush.bf16.msra.mxu0 %v2275
    %3014 = vmatmul.bf16.gmra.mxu0 %v601
    %v3015 = vpop.f32.mrf.mxu0
    %v3016 = vadd.f32 %v3003, %v3015
    %v3017 = vpop.f32.mrf.mxu0
    %3018 = vdwg.mxu0
    %3019 = vmatpush.bf16.msra.mxu0 %v2395
    %3020 = vmatpush.bf16.msra.mxu0 %v2387
    %3021 = vmatpush.bf16.msra.mxu0 %v2379
    %3022 = vmatpush.bf16.msra.mxu0 %v2371
    %3023 = vmatpush.bf16.msra.mxu0 %v2363
    %3024 = vmatpush.bf16.msra.mxu0 %v2355
    %3025 = vmatpush.bf16.msra.mxu0 %v2347
    %3026 = vmatpush.bf16.msra.mxu0 %v2339
    %3027 = vmatmul.bf16.gmra.mxu0 %v602
    %v3028 = vpop.f32.mrf.mxu0
    %v3029 = vadd.f32 %v3016, %v3028
    %v3030 = vpop.f32.mrf.mxu0
    %3031 = vdwg.mxu0
    %3032 = vmatpush.bf16.msra.mxu0 %v2012
    %3033 = vmatpush.bf16.msra.mxu0 %v2004
    %3034 = vmatpush.bf16.msra.mxu0 %v1996
    %3035 = vmatpush.bf16.msra.mxu0 %v1988
    %3036 = vmatpush.bf16.msra.mxu0 %v1980
    %3037 = vmatpush.bf16.msra.mxu0 %v1972
    %3038 = vmatpush.bf16.msra.mxu0 %v1964
    %3039 = vmatpush.bf16.msra.mxu0 %v1956
    %3040 = vmatmul.bf16.gmra.mxu0 %v596
    %v3041 = vpop.f32.mrf.mxu0
    %v3042 = vadd.f32 %v571, %v3041
    %v3043 = vpop.f32.mrf.mxu0
    %3044 = vdwg.mxu0
    %3045 = vmatpush.bf16.msra.mxu0 %v2076
    %3046 = vmatpush.bf16.msra.mxu0 %v2068
    %3047 = vmatpush.bf16.msra.mxu0 %v2060
    %3048 = vmatpush.bf16.msra.mxu0 %v2052
    %3049 = vmatpush.bf16.msra.mxu0 %v2044
    %3050 = vmatpush.bf16.msra.mxu0 %v2036
    %3051 = vmatpush.bf16.msra.mxu0 %v2028
    %3052 = vmatpush.bf16.msra.mxu0 %v2020
    %3053 = vmatmul.bf16.gmra.mxu0 %v597
    %v3054 = vpop.f32.mrf.mxu0
    %v3055 = vadd.f32 %v3042, %v3054
    %v3056 = vpop.f32.mrf.mxu0
    %3057 = vdwg.mxu0
    %3058 = vmatpush.bf16.msra.mxu0 %v2140
    %3059 = vmatpush.bf16.msra.mxu0 %v2132
    %3060 = vmatpush.bf16.msra.mxu0 %v2124
    %3061 = vmatpush.bf16.msra.mxu0 %v2116
    %3062 = vmatpush.bf16.msra.mxu0 %v2108
    %3063 = vmatpush.bf16.msra.mxu0 %v2100
    %3064 = vmatpush.bf16.msra.mxu0 %v2092
    %3065 = vmatpush.bf16.msra.mxu0 %v2084
    %3066 = vmatmul.bf16.gmra.mxu0 %v598
    %v3067 = vpop.f32.mrf.mxu0
    %v3068 = vadd.f32 %v3055, %v3067
    %v3069 = vpop.f32.mrf.mxu0
    %3070 = vdwg.mxu0
    %3071 = vmatpush.bf16.msra.mxu0 %v2204
    %3072 = vmatpush.bf16.msra.mxu0 %v2196
    %3073 = vmatpush.bf16.msra.mxu0 %v2188
    %3074 = vmatpush.bf16.msra.mxu0 %v2180
    %3075 = vmatpush.bf16.msra.mxu0 %v2172
    %3076 = vmatpush.bf16.msra.mxu0 %v2164
    %3077 = vmatpush.bf16.msra.mxu0 %v2156
    %3078 = vmatpush.bf16.msra.mxu0 %v2148
    %3079 = vmatmul.bf16.gmra.mxu0 %v599
    %v3080 = vpop.f32.mrf.mxu0
    %v3081 = vadd.f32 %v3068, %v3080
    %v3082 = vpop.f32.mrf.mxu0
    %3083 = vdwg.mxu0
    %3084 = vmatpush.bf16.msra.mxu0 %v2268
    %3085 = vmatpush.bf16.msra.mxu0 %v2260
    %3086 = vmatpush.bf16.msra.mxu0 %v2252
    %3087 = vmatpush.bf16.msra.mxu0 %v2244
    %3088 = vmatpush.bf16.msra.mxu0 %v2236
    %3089 = vmatpush.bf16.msra.mxu0 %v2228
    %3090 = vmatpush.bf16.msra.mxu0 %v2220
    %3091 = vmatpush.bf16.msra.mxu0 %v2212
    %3092 = vmatmul.bf16.gmra.mxu0 %v600
    %v3093 = vpop.f32.mrf.mxu0
    %v3094 = vadd.f32 %v3081, %v3093
    %v3095 = vpop.f32.mrf.mxu0
    %3096 = vdwg.mxu0
    %3097 = vmatpush.bf16.msra.mxu0 %v2332
    %3098 = vmatpush.bf16.msra.mxu0 %v2324
    %3099 = vmatpush.bf16.msra.mxu0 %v2316
    %3100 = vmatpush.bf16.msra.mxu0 %v2308
    %3101 = vmatpush.bf16.msra.mxu0 %v2300
    %3102 = vmatpush.bf16.msra.mxu0 %v2292
    %3103 = vmatpush.bf16.msra.mxu0 %v2284
    %3104 = vmatpush.bf16.msra.mxu0 %v2276
    %3105 = vmatmul.bf16.gmra.mxu0 %v601
    %v3106 = vpop.f32.mrf.mxu0
    %v3107 = vadd.f32 %v3094, %v3106
    %v3108 = vpop.f32.mrf.mxu0
    %3109 = vdwg.mxu0
    %3110 = vmatpush.bf16.msra.mxu0 %v2396
    %3111 = vmatpush.bf16.msra.mxu0 %v2388
    %3112 = vmatpush.bf16.msra.mxu0 %v2380
    %3113 = vmatpush.bf16.msra.mxu0 %v2372
    %3114 = vmatpush.bf16.msra.mxu0 %v2364
    %3115 = vmatpush.bf16.msra.mxu0 %v2356
    %3116 = vmatpush.bf16.msra.mxu0 %v2348
    %3117 = vmatpush.bf16.msra.mxu0 %v2340
    %3118 = vmatmul.bf16.gmra.mxu0 %v602
    %v3119 = vpop.f32.mrf.mxu0
    %v3120 = vadd.f32 %v3107, %v3119
    %v3121 = vpop.f32.mrf.mxu0
    %3122 = vdwg.mxu0
    %3123 = vmatpush.bf16.msra.mxu0 %v2013
    %3124 = vmatpush.bf16.msra.mxu0 %v2005
    %3125 = vmatpush.bf16.msra.mxu0 %v1997
    %3126 = vmatpush.bf16.msra.mxu0 %v1989
    %3127 = vmatpush.bf16.msra.mxu0 %v1981
    %3128 = vmatpush.bf16.msra.mxu0 %v1973
    %3129 = vmatpush.bf16.msra.mxu0 %v1965
    %3130 = vmatpush.bf16.msra.mxu0 %v1957
    %3131 = vmatmul.bf16.gmra.mxu0 %v596
    %v3132 = vpop.f32.mrf.mxu0
    %v3133 = vadd.f32 %v572, %v3132
    %v3134 = vpop.f32.mrf.mxu0
    %3135 = vdwg.mxu0
    %3136 = vmatpush.bf16.msra.mxu0 %v2077
    %3137 = vmatpush.bf16.msra.mxu0 %v2069
    %3138 = vmatpush.bf16.msra.mxu0 %v2061
    %3139 = vmatpush.bf16.msra.mxu0 %v2053
    %3140 = vmatpush.bf16.msra.mxu0 %v2045
    %3141 = vmatpush.bf16.msra.mxu0 %v2037
    %3142 = vmatpush.bf16.msra.mxu0 %v2029
    %3143 = vmatpush.bf16.msra.mxu0 %v2021
    %3144 = vmatmul.bf16.gmra.mxu0 %v597
    %v3145 = vpop.f32.mrf.mxu0
    %v3146 = vadd.f32 %v3133, %v3145
    %v3147 = vpop.f32.mrf.mxu0
    %3148 = vdwg.mxu0
    %3149 = vmatpush.bf16.msra.mxu0 %v2141
    %3150 = vmatpush.bf16.msra.mxu0 %v2133
    %3151 = vmatpush.bf16.msra.mxu0 %v2125
    %3152 = vmatpush.bf16.msra.mxu0 %v2117
    %3153 = vmatpush.bf16.msra.mxu0 %v2109
    %3154 = vmatpush.bf16.msra.mxu0 %v2101
    %3155 = vmatpush.bf16.msra.mxu0 %v2093
    %3156 = vmatpush.bf16.msra.mxu0 %v2085
    %3157 = vmatmul.bf16.gmra.mxu0 %v598
    %v3158 = vpop.f32.mrf.mxu0
    %v3159 = vadd.f32 %v3146, %v3158
    %v3160 = vpop.f32.mrf.mxu0
    %3161 = vdwg.mxu0
    %3162 = vmatpush.bf16.msra.mxu0 %v2205
    %3163 = vmatpush.bf16.msra.mxu0 %v2197
    %3164 = vmatpush.bf16.msra.mxu0 %v2189
    %3165 = vmatpush.bf16.msra.mxu0 %v2181
    %3166 = vmatpush.bf16.msra.mxu0 %v2173
    %3167 = vmatpush.bf16.msra.mxu0 %v2165
    %3168 = vmatpush.bf16.msra.mxu0 %v2157
    %3169 = vmatpush.bf16.msra.mxu0 %v2149
    %3170 = vmatmul.bf16.gmra.mxu0 %v599
    %v3171 = vpop.f32.mrf.mxu0
    %v3172 = vadd.f32 %v3159, %v3171
    %v3173 = vpop.f32.mrf.mxu0
    %3174 = vdwg.mxu0
    %3175 = vmatpush.bf16.msra.mxu0 %v2269
    %3176 = vmatpush.bf16.msra.mxu0 %v2261
    %3177 = vmatpush.bf16.msra.mxu0 %v2253
    %3178 = vmatpush.bf16.msra.mxu0 %v2245
    %3179 = vmatpush.bf16.msra.mxu0 %v2237
    %3180 = vmatpush.bf16.msra.mxu0 %v2229
    %3181 = vmatpush.bf16.msra.mxu0 %v2221
    %3182 = vmatpush.bf16.msra.mxu0 %v2213
    %3183 = vmatmul.bf16.gmra.mxu0 %v600
    %v3184 = vpop.f32.mrf.mxu0
    %v3185 = vadd.f32 %v3172, %v3184
    %v3186 = vpop.f32.mrf.mxu0
    %3187 = vdwg.mxu0
    %3188 = vmatpush.bf16.msra.mxu0 %v2333
    %3189 = vmatpush.bf16.msra.mxu0 %v2325
    %3190 = vmatpush.bf16.msra.mxu0 %v2317
    %3191 = vmatpush.bf16.msra.mxu0 %v2309
    %3192 = vmatpush.bf16.msra.mxu0 %v2301
    %3193 = vmatpush.bf16.msra.mxu0 %v2293
    %3194 = vmatpush.bf16.msra.mxu0 %v2285
    %3195 = vmatpush.bf16.msra.mxu0 %v2277
    %3196 = vmatmul.bf16.gmra.mxu0 %v601
    %v3197 = vpop.f32.mrf.mxu0
    %v3198 = vadd.f32 %v3185, %v3197
    %v3199 = vpop.f32.mrf.mxu0
    %3200 = vdwg.mxu0
    %3201 = vmatpush.bf16.msra.mxu0 %v2397
    %3202 = vmatpush.bf16.msra.mxu0 %v2389
    %3203 = vmatpush.bf16.msra.mxu0 %v2381
    %3204 = vmatpush.bf16.msra.mxu0 %v2373
    %3205 = vmatpush.bf16.msra.mxu0 %v2365
    %3206 = vmatpush.bf16.msra.mxu0 %v2357
    %3207 = vmatpush.bf16.msra.mxu0 %v2349
    %3208 = vmatpush.bf16.msra.mxu0 %v2341
    %3209 = vmatmul.bf16.gmra.mxu0 %v602
    %v3210 = vpop.f32.mrf.mxu0
    %v3211 = vadd.f32 %v3198, %v3210
    %v3212 = vpop.f32.mrf.mxu0
    %3213 = vdwg.mxu0
    %3214 = vmatpush.bf16.msra.mxu0 %v2014
    %3215 = vmatpush.bf16.msra.mxu0 %v2006
    %3216 = vmatpush.bf16.msra.mxu0 %v1998
    %3217 = vmatpush.bf16.msra.mxu0 %v1990
    %3218 = vmatpush.bf16.msra.mxu0 %v1982
    %3219 = vmatpush.bf16.msra.mxu0 %v1974
    %3220 = vmatpush.bf16.msra.mxu0 %v1966
    %3221 = vmatpush.bf16.msra.mxu0 %v1958
    %3222 = vmatmul.bf16.gmra.mxu0 %v596
    %v3223 = vpop.f32.mrf.mxu0
    %v3224 = vadd.f32 %v573, %v3223
    %v3225 = vpop.f32.mrf.mxu0
    %3226 = vdwg.mxu0
    %3227 = vmatpush.bf16.msra.mxu0 %v2078
    %3228 = vmatpush.bf16.msra.mxu0 %v2070
    %3229 = vmatpush.bf16.msra.mxu0 %v2062
    %3230 = vmatpush.bf16.msra.mxu0 %v2054
    %3231 = vmatpush.bf16.msra.mxu0 %v2046
    %3232 = vmatpush.bf16.msra.mxu0 %v2038
    %3233 = vmatpush.bf16.msra.mxu0 %v2030
    %3234 = vmatpush.bf16.msra.mxu0 %v2022
    %3235 = vmatmul.bf16.gmra.mxu0 %v597
    %v3236 = vpop.f32.mrf.mxu0
    %v3237 = vadd.f32 %v3224, %v3236
    %v3238 = vpop.f32.mrf.mxu0
    %3239 = vdwg.mxu0
    %3240 = vmatpush.bf16.msra.mxu0 %v2142
    %3241 = vmatpush.bf16.msra.mxu0 %v2134
    %3242 = vmatpush.bf16.msra.mxu0 %v2126
    %3243 = vmatpush.bf16.msra.mxu0 %v2118
    %3244 = vmatpush.bf16.msra.mxu0 %v2110
    %3245 = vmatpush.bf16.msra.mxu0 %v2102
    %3246 = vmatpush.bf16.msra.mxu0 %v2094
    %3247 = vmatpush.bf16.msra.mxu0 %v2086
    %3248 = vmatmul.bf16.gmra.mxu0 %v598
    %v3249 = vpop.f32.mrf.mxu0
    %v3250 = vadd.f32 %v3237, %v3249
    %v3251 = vpop.f32.mrf.mxu0
    %3252 = vdwg.mxu0
    %3253 = vmatpush.bf16.msra.mxu0 %v2206
    %3254 = vmatpush.bf16.msra.mxu0 %v2198
    %3255 = vmatpush.bf16.msra.mxu0 %v2190
    %3256 = vmatpush.bf16.msra.mxu0 %v2182
    %3257 = vmatpush.bf16.msra.mxu0 %v2174
    %3258 = vmatpush.bf16.msra.mxu0 %v2166
    %3259 = vmatpush.bf16.msra.mxu0 %v2158
    %3260 = vmatpush.bf16.msra.mxu0 %v2150
    %3261 = vmatmul.bf16.gmra.mxu0 %v599
    %v3262 = vpop.f32.mrf.mxu0
    %v3263 = vadd.f32 %v3250, %v3262
    %v3264 = vpop.f32.mrf.mxu0
    %3265 = vdwg.mxu0
    %3266 = vmatpush.bf16.msra.mxu0 %v2270
    %3267 = vmatpush.bf16.msra.mxu0 %v2262
    %3268 = vmatpush.bf16.msra.mxu0 %v2254
    %3269 = vmatpush.bf16.msra.mxu0 %v2246
    %3270 = vmatpush.bf16.msra.mxu0 %v2238
    %3271 = vmatpush.bf16.msra.mxu0 %v2230
    %3272 = vmatpush.bf16.msra.mxu0 %v2222
    %3273 = vmatpush.bf16.msra.mxu0 %v2214
    %3274 = vmatmul.bf16.gmra.mxu0 %v600
    %v3275 = vpop.f32.mrf.mxu0
    %v3276 = vadd.f32 %v3263, %v3275
    %v3277 = vpop.f32.mrf.mxu0
    %3278 = vdwg.mxu0
    %3279 = vmatpush.bf16.msra.mxu0 %v2334
    %3280 = vmatpush.bf16.msra.mxu0 %v2326
    %3281 = vmatpush.bf16.msra.mxu0 %v2318
    %3282 = vmatpush.bf16.msra.mxu0 %v2310
    %3283 = vmatpush.bf16.msra.mxu0 %v2302
    %3284 = vmatpush.bf16.msra.mxu0 %v2294
    %3285 = vmatpush.bf16.msra.mxu0 %v2286
    %3286 = vmatpush.bf16.msra.mxu0 %v2278
    %3287 = vmatmul.bf16.gmra.mxu0 %v601
    %v3288 = vpop.f32.mrf.mxu0
    %v3289 = vadd.f32 %v3276, %v3288
    %v3290 = vpop.f32.mrf.mxu0
    %3291 = vdwg.mxu0
    %3292 = vmatpush.bf16.msra.mxu0 %v2398
    %3293 = vmatpush.bf16.msra.mxu0 %v2390
    %3294 = vmatpush.bf16.msra.mxu0 %v2382
    %3295 = vmatpush.bf16.msra.mxu0 %v2374
    %3296 = vmatpush.bf16.msra.mxu0 %v2366
    %3297 = vmatpush.bf16.msra.mxu0 %v2358
    %3298 = vmatpush.bf16.msra.mxu0 %v2350
    %3299 = vmatpush.bf16.msra.mxu0 %v2342
    %3300 = vmatmul.bf16.gmra.mxu0 %v602
    %v3301 = vpop.f32.mrf.mxu0
    %v3302 = vadd.f32 %v3289, %v3301
    %v3303 = vpop.f32.mrf.mxu0
    %3304 = vdwg.mxu0
    %3305 = vmatpush.bf16.msra.mxu0 %v2015
    %3306 = vmatpush.bf16.msra.mxu0 %v2007
    %3307 = vmatpush.bf16.msra.mxu0 %v1999
    %3308 = vmatpush.bf16.msra.mxu0 %v1991
    %3309 = vmatpush.bf16.msra.mxu0 %v1983
    %3310 = vmatpush.bf16.msra.mxu0 %v1975
    %3311 = vmatpush.bf16.msra.mxu0 %v1967
    %3312 = vmatpush.bf16.msra.mxu0 %v1959
    %3313 = vmatmul.bf16.gmra.mxu0 %v596
    %v3314 = vpop.f32.mrf.mxu0
    %v3315 = vadd.f32 %v574, %v3314
    %v3316 = vpop.f32.mrf.mxu0
    %3317 = vdwg.mxu0
    %3318 = vmatpush.bf16.msra.mxu0 %v2079
    %3319 = vmatpush.bf16.msra.mxu0 %v2071
    %3320 = vmatpush.bf16.msra.mxu0 %v2063
    %3321 = vmatpush.bf16.msra.mxu0 %v2055
    %3322 = vmatpush.bf16.msra.mxu0 %v2047
    %3323 = vmatpush.bf16.msra.mxu0 %v2039
    %3324 = vmatpush.bf16.msra.mxu0 %v2031
    %3325 = vmatpush.bf16.msra.mxu0 %v2023
    %3326 = vmatmul.bf16.gmra.mxu0 %v597
    %v3327 = vpop.f32.mrf.mxu0
    %v3328 = vadd.f32 %v3315, %v3327
    %v3329 = vpop.f32.mrf.mxu0
    %3330 = vdwg.mxu0
    %3331 = vmatpush.bf16.msra.mxu0 %v2143
    %3332 = vmatpush.bf16.msra.mxu0 %v2135
    %3333 = vmatpush.bf16.msra.mxu0 %v2127
    %3334 = vmatpush.bf16.msra.mxu0 %v2119
    %3335 = vmatpush.bf16.msra.mxu0 %v2111
    %3336 = vmatpush.bf16.msra.mxu0 %v2103
    %3337 = vmatpush.bf16.msra.mxu0 %v2095
    %3338 = vmatpush.bf16.msra.mxu0 %v2087
    %3339 = vmatmul.bf16.gmra.mxu0 %v598
    %v3340 = vpop.f32.mrf.mxu0
    %v3341 = vadd.f32 %v3328, %v3340
    %v3342 = vpop.f32.mrf.mxu0
    %3343 = vdwg.mxu0
    %3344 = vmatpush.bf16.msra.mxu0 %v2207
    %3345 = vmatpush.bf16.msra.mxu0 %v2199
    %3346 = vmatpush.bf16.msra.mxu0 %v2191
    %3347 = vmatpush.bf16.msra.mxu0 %v2183
    %3348 = vmatpush.bf16.msra.mxu0 %v2175
    %3349 = vmatpush.bf16.msra.mxu0 %v2167
    %3350 = vmatpush.bf16.msra.mxu0 %v2159
    %3351 = vmatpush.bf16.msra.mxu0 %v2151
    %3352 = vmatmul.bf16.gmra.mxu0 %v599
    %v3353 = vpop.f32.mrf.mxu0
    %v3354 = vadd.f32 %v3341, %v3353
    %v3355 = vpop.f32.mrf.mxu0
    %3356 = vdwg.mxu0
    %3357 = vmatpush.bf16.msra.mxu0 %v2271
    %3358 = vmatpush.bf16.msra.mxu0 %v2263
    %3359 = vmatpush.bf16.msra.mxu0 %v2255
    %3360 = vmatpush.bf16.msra.mxu0 %v2247
    %3361 = vmatpush.bf16.msra.mxu0 %v2239
    %3362 = vmatpush.bf16.msra.mxu0 %v2231
    %3363 = vmatpush.bf16.msra.mxu0 %v2223
    %3364 = vmatpush.bf16.msra.mxu0 %v2215
    %3365 = vmatmul.bf16.gmra.mxu0 %v600
    %v3366 = vpop.f32.mrf.mxu0
    %v3367 = vadd.f32 %v3354, %v3366
    %v3368 = vpop.f32.mrf.mxu0
    %3369 = vdwg.mxu0
    %3370 = vmatpush.bf16.msra.mxu0 %v2335
    %3371 = vmatpush.bf16.msra.mxu0 %v2327
    %3372 = vmatpush.bf16.msra.mxu0 %v2319
    %3373 = vmatpush.bf16.msra.mxu0 %v2311
    %3374 = vmatpush.bf16.msra.mxu0 %v2303
    %3375 = vmatpush.bf16.msra.mxu0 %v2295
    %3376 = vmatpush.bf16.msra.mxu0 %v2287
    %3377 = vmatpush.bf16.msra.mxu0 %v2279
    %3378 = vmatmul.bf16.gmra.mxu0 %v601
    %v3379 = vpop.f32.mrf.mxu0
    %v3380 = vadd.f32 %v3367, %v3379
    %v3381 = vpop.f32.mrf.mxu0
    %3382 = vdwg.mxu0
    %3383 = vmatpush.bf16.msra.mxu0 %v2399
    %3384 = vmatpush.bf16.msra.mxu0 %v2391
    %3385 = vmatpush.bf16.msra.mxu0 %v2383
    %3386 = vmatpush.bf16.msra.mxu0 %v2375
    %3387 = vmatpush.bf16.msra.mxu0 %v2367
    %3388 = vmatpush.bf16.msra.mxu0 %v2359
    %3389 = vmatpush.bf16.msra.mxu0 %v2351
    %3390 = vmatpush.bf16.msra.mxu0 %v2343
    %3391 = vmatmul.bf16.gmra.mxu0 %v602
    %v3392 = vpop.f32.mrf.mxu0
    %v3393 = vadd.f32 %v3380, %v3392
    %v3394 = vpop.f32.mrf.mxu0
    %3395 = vdwg.mxu0
    %3396 = vmatpush.bf16.msra.mxu0 %v2016
    %3397 = vmatpush.bf16.msra.mxu0 %v2008
    %3398 = vmatpush.bf16.msra.mxu0 %v2000
    %3399 = vmatpush.bf16.msra.mxu0 %v1992
    %3400 = vmatpush.bf16.msra.mxu0 %v1984
    %3401 = vmatpush.bf16.msra.mxu0 %v1976
    %3402 = vmatpush.bf16.msra.mxu0 %v1968
    %3403 = vmatpush.bf16.msra.mxu0 %v1960
    %3404 = vmatmul.bf16.gmra.mxu0 %v596
    %v3405 = vpop.f32.mrf.mxu0
    %v3406 = vadd.f32 %v575, %v3405
    %v3407 = vpop.f32.mrf.mxu0
    %3408 = vdwg.mxu0
    %3409 = vmatpush.bf16.msra.mxu0 %v2080
    %3410 = vmatpush.bf16.msra.mxu0 %v2072
    %3411 = vmatpush.bf16.msra.mxu0 %v2064
    %3412 = vmatpush.bf16.msra.mxu0 %v2056
    %3413 = vmatpush.bf16.msra.mxu0 %v2048
    %3414 = vmatpush.bf16.msra.mxu0 %v2040
    %3415 = vmatpush.bf16.msra.mxu0 %v2032
    %3416 = vmatpush.bf16.msra.mxu0 %v2024
    %3417 = vmatmul.bf16.gmra.mxu0 %v597
    %v3418 = vpop.f32.mrf.mxu0
    %v3419 = vadd.f32 %v3406, %v3418
    %v3420 = vpop.f32.mrf.mxu0
    %3421 = vdwg.mxu0
    %3422 = vmatpush.bf16.msra.mxu0 %v2144
    %3423 = vmatpush.bf16.msra.mxu0 %v2136
    %3424 = vmatpush.bf16.msra.mxu0 %v2128
    %3425 = vmatpush.bf16.msra.mxu0 %v2120
    %3426 = vmatpush.bf16.msra.mxu0 %v2112
    %3427 = vmatpush.bf16.msra.mxu0 %v2104
    %3428 = vmatpush.bf16.msra.mxu0 %v2096
    %3429 = vmatpush.bf16.msra.mxu0 %v2088
    %3430 = vmatmul.bf16.gmra.mxu0 %v598
    %v3431 = vpop.f32.mrf.mxu0
    %v3432 = vadd.f32 %v3419, %v3431
    %v3433 = vpop.f32.mrf.mxu0
    %3434 = vdwg.mxu0
    %3435 = vmatpush.bf16.msra.mxu0 %v2208
    %3436 = vmatpush.bf16.msra.mxu0 %v2200
    %3437 = vmatpush.bf16.msra.mxu0 %v2192
    %3438 = vmatpush.bf16.msra.mxu0 %v2184
    %3439 = vmatpush.bf16.msra.mxu0 %v2176
    %3440 = vmatpush.bf16.msra.mxu0 %v2168
    %3441 = vmatpush.bf16.msra.mxu0 %v2160
    %3442 = vmatpush.bf16.msra.mxu0 %v2152
    %3443 = vmatmul.bf16.gmra.mxu0 %v599
    %v3444 = vpop.f32.mrf.mxu0
    %v3445 = vadd.f32 %v3432, %v3444
    %v3446 = vpop.f32.mrf.mxu0
    %3447 = vdwg.mxu0
    %3448 = vmatpush.bf16.msra.mxu0 %v2272
    %3449 = vmatpush.bf16.msra.mxu0 %v2264
    %3450 = vmatpush.bf16.msra.mxu0 %v2256
    %3451 = vmatpush.bf16.msra.mxu0 %v2248
    %3452 = vmatpush.bf16.msra.mxu0 %v2240
    %3453 = vmatpush.bf16.msra.mxu0 %v2232
    %3454 = vmatpush.bf16.msra.mxu0 %v2224
    %3455 = vmatpush.bf16.msra.mxu0 %v2216
    %3456 = vmatmul.bf16.gmra.mxu0 %v600
    %v3457 = vpop.f32.mrf.mxu0
    %v3458 = vadd.f32 %v3445, %v3457
    %v3459 = vpop.f32.mrf.mxu0
    %3460 = vdwg.mxu0
    %3461 = vmatpush.bf16.msra.mxu0 %v2336
    %3462 = vmatpush.bf16.msra.mxu0 %v2328
    %3463 = vmatpush.bf16.msra.mxu0 %v2320
    %3464 = vmatpush.bf16.msra.mxu0 %v2312
    %3465 = vmatpush.bf16.msra.mxu0 %v2304
    %3466 = vmatpush.bf16.msra.mxu0 %v2296
    %3467 = vmatpush.bf16.msra.mxu0 %v2288
    %3468 = vmatpush.bf16.msra.mxu0 %v2280
    %3469 = vmatmul.bf16.gmra.mxu0 %v601
    %v3470 = vpop.f32.mrf.mxu0
    %v3471 = vadd.f32 %v3458, %v3470
    %v3472 = vpop.f32.mrf.mxu0
    %3473 = vdwg.mxu0
    %3474 = vmatpush.bf16.msra.mxu0 %v2400
    %3475 = vmatpush.bf16.msra.mxu0 %v2392
    %3476 = vmatpush.bf16.msra.mxu0 %v2384
    %3477 = vmatpush.bf16.msra.mxu0 %v2376
    %3478 = vmatpush.bf16.msra.mxu0 %v2368
    %3479 = vmatpush.bf16.msra.mxu0 %v2360
    %3480 = vmatpush.bf16.msra.mxu0 %v2352
    %3481 = vmatpush.bf16.msra.mxu0 %v2344
    %3482 = vmatmul.bf16.gmra.mxu0 %v602
    %v3483 = vpop.f32.mrf.mxu0
    %v3484 = vadd.f32 %v3471, %v3483
    %v3485 = vpop.f32.mrf.mxu0
    %3486 = vdwg.mxu0
    %3487 = vmatpush.bf16.msra.mxu0 %v2017
    %3488 = vmatpush.bf16.msra.mxu0 %v2009
    %3489 = vmatpush.bf16.msra.mxu0 %v2001
    %3490 = vmatpush.bf16.msra.mxu0 %v1993
    %3491 = vmatpush.bf16.msra.mxu0 %v1985
    %3492 = vmatpush.bf16.msra.mxu0 %v1977
    %3493 = vmatpush.bf16.msra.mxu0 %v1969
    %3494 = vmatpush.bf16.msra.mxu0 %v1961
    %3495 = vmatmul.bf16.gmra.mxu0 %v596
    %v3496 = vpop.f32.mrf.mxu0
    %v3497 = vadd.f32 %v576, %v3496
    %v3498 = vpop.f32.mrf.mxu0
    %3499 = vdwg.mxu0
    %3500 = vmatpush.bf16.msra.mxu0 %v2081
    %3501 = vmatpush.bf16.msra.mxu0 %v2073
    %3502 = vmatpush.bf16.msra.mxu0 %v2065
    %3503 = vmatpush.bf16.msra.mxu0 %v2057
    %3504 = vmatpush.bf16.msra.mxu0 %v2049
    %3505 = vmatpush.bf16.msra.mxu0 %v2041
    %3506 = vmatpush.bf16.msra.mxu0 %v2033
    %3507 = vmatpush.bf16.msra.mxu0 %v2025
    %3508 = vmatmul.bf16.gmra.mxu0 %v597
    %v3509 = vpop.f32.mrf.mxu0
    %v3510 = vadd.f32 %v3497, %v3509
    %v3511 = vpop.f32.mrf.mxu0
    %3512 = vdwg.mxu0
    %3513 = vmatpush.bf16.msra.mxu0 %v2145
    %3514 = vmatpush.bf16.msra.mxu0 %v2137
    %3515 = vmatpush.bf16.msra.mxu0 %v2129
    %3516 = vmatpush.bf16.msra.mxu0 %v2121
    %3517 = vmatpush.bf16.msra.mxu0 %v2113
    %3518 = vmatpush.bf16.msra.mxu0 %v2105
    %3519 = vmatpush.bf16.msra.mxu0 %v2097
    %3520 = vmatpush.bf16.msra.mxu0 %v2089
    %3521 = vmatmul.bf16.gmra.mxu0 %v598
    %v3522 = vpop.f32.mrf.mxu0
    %v3523 = vadd.f32 %v3510, %v3522
    %v3524 = vpop.f32.mrf.mxu0
    %3525 = vdwg.mxu0
    %3526 = vmatpush.bf16.msra.mxu0 %v2209
    %3527 = vmatpush.bf16.msra.mxu0 %v2201
    %3528 = vmatpush.bf16.msra.mxu0 %v2193
    %3529 = vmatpush.bf16.msra.mxu0 %v2185
    %3530 = vmatpush.bf16.msra.mxu0 %v2177
    %3531 = vmatpush.bf16.msra.mxu0 %v2169
    %3532 = vmatpush.bf16.msra.mxu0 %v2161
    %3533 = vmatpush.bf16.msra.mxu0 %v2153
    %3534 = vmatmul.bf16.gmra.mxu0 %v599
    %v3535 = vpop.f32.mrf.mxu0
    %v3536 = vadd.f32 %v3523, %v3535
    %v3537 = vpop.f32.mrf.mxu0
    %3538 = vdwg.mxu0
    %3539 = vmatpush.bf16.msra.mxu0 %v2273
    %3540 = vmatpush.bf16.msra.mxu0 %v2265
    %3541 = vmatpush.bf16.msra.mxu0 %v2257
    %3542 = vmatpush.bf16.msra.mxu0 %v2249
    %3543 = vmatpush.bf16.msra.mxu0 %v2241
    %3544 = vmatpush.bf16.msra.mxu0 %v2233
    %3545 = vmatpush.bf16.msra.mxu0 %v2225
    %3546 = vmatpush.bf16.msra.mxu0 %v2217
    %3547 = vmatmul.bf16.gmra.mxu0 %v600
    %v3548 = vpop.f32.mrf.mxu0
    %v3549 = vadd.f32 %v3536, %v3548
    %v3550 = vpop.f32.mrf.mxu0
    %3551 = vdwg.mxu0
    %3552 = vmatpush.bf16.msra.mxu0 %v2337
    %3553 = vmatpush.bf16.msra.mxu0 %v2329
    %3554 = vmatpush.bf16.msra.mxu0 %v2321
    %3555 = vmatpush.bf16.msra.mxu0 %v2313
    %3556 = vmatpush.bf16.msra.mxu0 %v2305
    %3557 = vmatpush.bf16.msra.mxu0 %v2297
    %3558 = vmatpush.bf16.msra.mxu0 %v2289
    %3559 = vmatpush.bf16.msra.mxu0 %v2281
    %3560 = vmatmul.bf16.gmra.mxu0 %v601
    %v3561 = vpop.f32.mrf.mxu0
    %v3562 = vadd.f32 %v3549, %v3561
    %v3563 = vpop.f32.mrf.mxu0
    %3564 = vdwg.mxu0
    %3565 = vmatpush.bf16.msra.mxu0 %v2401
    %3566 = vmatpush.bf16.msra.mxu0 %v2393
    %3567 = vmatpush.bf16.msra.mxu0 %v2385
    %3568 = vmatpush.bf16.msra.mxu0 %v2377
    %3569 = vmatpush.bf16.msra.mxu0 %v2369
    %3570 = vmatpush.bf16.msra.mxu0 %v2361
    %3571 = vmatpush.bf16.msra.mxu0 %v2353
    %3572 = vmatpush.bf16.msra.mxu0 %v2345
    %3573 = vmatmul.bf16.gmra.mxu0 %v602
    %v3574 = vpop.f32.mrf.mxu0
    %v3575 = vadd.f32 %v3562, %v3574
    %v3576 = vpop.f32.mrf.mxu0
    %3577 = vdwg.mxu0
    %v3578 = vmax.f32 %v2938, 0.0
    %v3579 = vmax.f32 %v3029, 0.0
    %v3580 = vmax.f32 %v3120, 0.0
    %v3581 = vmax.f32 %v3211, 0.0
    %v3582 = vmax.f32 %v3302, 0.0
    %v3583 = vmax.f32 %v3393, 0.0
    %v3584 = vmax.f32 %v3484, 0.0
    %v3585 = vmax.f32 %v3575, 0.0
    %v3586 = vpack.c.bf16 %v3578, %v3578
    %v3587 = vpack.c.bf16 %v3579, %v3579
    %v3588 = vpack.c.bf16 %v3580, %v3580
    %v3589 = vpack.c.bf16 %v3581, %v3581
    %v3590 = vpack.c.bf16 %v3582, %v3582
    %v3591 = vpack.c.bf16 %v3583, %v3583
    %v3592 = vpack.c.bf16 %v3584, %v3584
    %v3593 = vpack.c.bf16 %v3585, %v3585
    %v3594 = vld [vmem:[#allocation7] sm:$0xff]
    %v3595 = vld [vmem:[#allocation7 + $0x8] sm:$0xff]
    %v3596 = vld [vmem:[#allocation7 + $0x10] sm:$0xff]
    %v3597 = vld [vmem:[#allocation7 + $0x18] sm:$0xff]
    %v3598 = vld [vmem:[#allocation7 + $0x20] sm:$0xff]
    %v3599 = vld [vmem:[#allocation7 + $0x28] sm:$0xff]
    %v3600 = vld [vmem:[#allocation7 + $0x30] sm:$0xff]
    %v3601 = vld [vmem:[#allocation7 + $0x38] sm:$0xff]
    %v3602 = vld [vmem:[#allocation7 + $0x40] sm:$0xff]
    %v3603 = vld [vmem:[#allocation7 + $0x48] sm:$0xff]
    %v3604 = vld [vmem:[#allocation7 + $0x50] sm:$0xff]
    %v3605 = vld [vmem:[#allocation7 + $0x58] sm:$0xff]
    %v3606 = vld [vmem:[#allocation7 + $0x60] sm:$0xff]
    %v3607 = vld [vmem:[#allocation7 + $0x68] sm:$0xff]
    %v3608 = vld [vmem:[#allocation7 + $0x70] sm:$0xff]
    %v3609 = vld [vmem:[#allocation7 + $0x78] sm:$0xff]
    %v3610 = vld [vmem:[#allocation7 + $0x80] sm:$0xff]
    %v3611 = vld [vmem:[#allocation7 + $0x88] sm:$0xff]
    %v3612 = vld [vmem:[#allocation7 + $0x90] sm:$0xff]
    %v3613 = vld [vmem:[#allocation7 + $0x98] sm:$0xff]
    %v3614 = vld [vmem:[#allocation7 + $0xa0] sm:$0xff]
    %v3615 = vld [vmem:[#allocation7 + $0xa8] sm:$0xff]
    %v3616 = vld [vmem:[#allocation7 + $0xb0] sm:$0xff]
    %v3617 = vld [vmem:[#allocation7 + $0xb8] sm:$0xff]
    %v3618 = vld [vmem:[#allocation7 + $0xc0] sm:$0xff]
    %v3619 = vld [vmem:[#allocation7 + $0xc8] sm:$0xff]
    %v3620 = vld [vmem:[#allocation7 + $0xd0] sm:$0xff]
    %v3621 = vld [vmem:[#allocation7 + $0xd8] sm:$0xff]
    %v3622 = vld [vmem:[#allocation7 + $0xe0] sm:$0xff]
    %v3623 = vld [vmem:[#allocation7 + $0xe8] sm:$0xff]
    %v3624 = vld [vmem:[#allocation7 + $0xf0] sm:$0xff]
    %v3625 = vld [vmem:[#allocation7 + $0xf8] sm:$0xff]
    %v3626 = vld [vmem:[#allocation7 + $0x100] sm:$0xff]
    %v3627 = vld [vmem:[#allocation7 + $0x108] sm:$0xff]
    %v3628 = vld [vmem:[#allocation7 + $0x110] sm:$0xff]
    %v3629 = vld [vmem:[#allocation7 + $0x118] sm:$0xff]
    %v3630 = vld [vmem:[#allocation7 + $0x120] sm:$0xff]
    %v3631 = vld [vmem:[#allocation7 + $0x128] sm:$0xff]
    %v3632 = vld [vmem:[#allocation7 + $0x130] sm:$0xff]
    %v3633 = vld [vmem:[#allocation7 + $0x138] sm:$0xff]
    %v3634 = vld [vmem:[#allocation7 + $0x140] sm:$0xff]
    %v3635 = vld [vmem:[#allocation7 + $0x148] sm:$0xff]
    %v3636 = vld [vmem:[#allocation7 + $0x150] sm:$0xff]
    %v3637 = vld [vmem:[#allocation7 + $0x158] sm:$0xff]
    %v3638 = vld [vmem:[#allocation7 + $0x160] sm:$0xff]
    %v3639 = vld [vmem:[#allocation7 + $0x168] sm:$0xff]
    %v3640 = vld [vmem:[#allocation7 + $0x170] sm:$0xff]
    %v3641 = vld [vmem:[#allocation7 + $0x178] sm:$0xff]
    %v3642 = vld [vmem:[#allocation7 + $0x180] sm:$0xff]
    %v3643 = vld [vmem:[#allocation7 + $0x188] sm:$0xff]
    %v3644 = vld [vmem:[#allocation7 + $0x190] sm:$0xff]
    %v3645 = vld [vmem:[#allocation7 + $0x198] sm:$0xff]
    %v3646 = vld [vmem:[#allocation7 + $0x1a0] sm:$0xff]
    %v3647 = vld [vmem:[#allocation7 + $0x1a8] sm:$0xff]
    %v3648 = vld [vmem:[#allocation7 + $0x1b0] sm:$0xff]
    %v3649 = vld [vmem:[#allocation7 + $0x1b8] sm:$0xff]
    %v3650 = vld [vmem:[#allocation7 + $0x1c0] sm:$0xff]
    %v3651 = vld [vmem:[#allocation7 + $0x1c8] sm:$0xff]
    %v3652 = vld [vmem:[#allocation7 + $0x1d0] sm:$0xff]
    %v3653 = vld [vmem:[#allocation7 + $0x1d8] sm:$0xff]
    %v3654 = vld [vmem:[#allocation7 + $0x1e0] sm:$0xff]
    %v3655 = vld [vmem:[#allocation7 + $0x1e8] sm:$0xff]
    %v3656 = vld [vmem:[#allocation7 + $0x1f0] sm:$0xff]
    %v3657 = vld [vmem:[#allocation7 + $0x1f8] sm:$0xff]
    %v3658 = vld [vmem:[#allocation7 + $0x200] sm:$0xff]
    %v3659 = vld [vmem:[#allocation7 + $0x208] sm:$0xff]
    %v3660 = vld [vmem:[#allocation7 + $0x210] sm:$0xff]
    %v3661 = vld [vmem:[#allocation7 + $0x218] sm:$0xff]
    %v3662 = vld [vmem:[#allocation7 + $0x220] sm:$0xff]
    %v3663 = vld [vmem:[#allocation7 + $0x228] sm:$0xff]
    %v3664 = vld [vmem:[#allocation7 + $0x230] sm:$0xff]
    %v3665 = vld [vmem:[#allocation7 + $0x238] sm:$0xff]
    %v3666 = vld [vmem:[#allocation7 + $0x240] sm:$0xff]
    %v3667 = vld [vmem:[#allocation7 + $0x248] sm:$0xff]
    %v3668 = vld [vmem:[#allocation7 + $0x250] sm:$0xff]
    %v3669 = vld [vmem:[#allocation7 + $0x258] sm:$0xff]
    %v3670 = vld [vmem:[#allocation7 + $0x260] sm:$0xff]
    %v3671 = vld [vmem:[#allocation7 + $0x268] sm:$0xff]
    %v3672 = vld [vmem:[#allocation7 + $0x270] sm:$0xff]
    %v3673 = vld [vmem:[#allocation7 + $0x278] sm:$0xff]
    %v3674 = vld [vmem:[#allocation7 + $0x280] sm:$0xff]
    %v3675 = vld [vmem:[#allocation7 + $0x288] sm:$0xff]
    %v3676 = vld [vmem:[#allocation7 + $0x290] sm:$0xff]
    %v3677 = vld [vmem:[#allocation7 + $0x298] sm:$0xff]
    %v3678 = vld [vmem:[#allocation7 + $0x2a0] sm:$0xff]
    %v3679 = vld [vmem:[#allocation7 + $0x2a8] sm:$0xff]
    %v3680 = vld [vmem:[#allocation7 + $0x2b0] sm:$0xff]
    %v3681 = vld [vmem:[#allocation7 + $0x2b8] sm:$0xff]
    %v3682 = vld [vmem:[#allocation7 + $0x2c0] sm:$0xff]
    %v3683 = vld [vmem:[#allocation7 + $0x2c8] sm:$0xff]
    %v3684 = vld [vmem:[#allocation7 + $0x2d0] sm:$0xff]
    %v3685 = vld [vmem:[#allocation7 + $0x2d8] sm:$0xff]
    %v3686 = vld [vmem:[#allocation7 + $0x2e0] sm:$0xff]
    %v3687 = vld [vmem:[#allocation7 + $0x2e8] sm:$0xff]
    %v3688 = vld [vmem:[#allocation7 + $0x2f0] sm:$0xff]
    %v3689 = vld [vmem:[#allocation7 + $0x2f8] sm:$0xff]
    %v3690 = vld [vmem:[#allocation7 + $0x300] sm:$0xff]
    %v3691 = vld [vmem:[#allocation7 + $0x308] sm:$0xff]
    %v3692 = vld [vmem:[#allocation7 + $0x310] sm:$0xff]
    %v3693 = vld [vmem:[#allocation7 + $0x318] sm:$0xff]
    %v3694 = vld [vmem:[#allocation7 + $0x320] sm:$0xff]
    %v3695 = vld [vmem:[#allocation7 + $0x328] sm:$0xff]
    %v3696 = vld [vmem:[#allocation7 + $0x330] sm:$0xff]
    %v3697 = vld [vmem:[#allocation7 + $0x338] sm:$0xff]
    %v3698 = vld [vmem:[#allocation7 + $0x340] sm:$0xff]
    %v3699 = vld [vmem:[#allocation7 + $0x348] sm:$0xff]
    %v3700 = vld [vmem:[#allocation7 + $0x350] sm:$0xff]
    %v3701 = vld [vmem:[#allocation7 + $0x358] sm:$0xff]
    %v3702 = vld [vmem:[#allocation7 + $0x360] sm:$0xff]
    %v3703 = vld [vmem:[#allocation7 + $0x368] sm:$0xff]
    %v3704 = vld [vmem:[#allocation7 + $0x370] sm:$0xff]
    %v3705 = vld [vmem:[#allocation7 + $0x378] sm:$0xff]
    %v3706 = vld [vmem:[#allocation7 + $0x380] sm:$0xff]
    %v3707 = vld [vmem:[#allocation7 + $0x388] sm:$0xff]
    %v3708 = vld [vmem:[#allocation7 + $0x390] sm:$0xff]
    %v3709 = vld [vmem:[#allocation7 + $0x398] sm:$0xff]
    %v3710 = vld [vmem:[#allocation7 + $0x3a0] sm:$0xff]
    %v3711 = vld [vmem:[#allocation7 + $0x3a8] sm:$0xff]
    %v3712 = vld [vmem:[#allocation7 + $0x3b0] sm:$0xff]
    %v3713 = vld [vmem:[#allocation7 + $0x3b8] sm:$0xff]
    %v3714 = vld [vmem:[#allocation7 + $0x3c0] sm:$0xff]
    %v3715 = vld [vmem:[#allocation7 + $0x3c8] sm:$0xff]
    %v3716 = vld [vmem:[#allocation7 + $0x3d0] sm:$0xff]
    %v3717 = vld [vmem:[#allocation7 + $0x3d8] sm:$0xff]
    %v3718 = vld [vmem:[#allocation7 + $0x3e0] sm:$0xff]
    %v3719 = vld [vmem:[#allocation7 + $0x3e8] sm:$0xff]
    %v3720 = vld [vmem:[#allocation7 + $0x3f0] sm:$0xff]
    %v3721 = vld [vmem:[#allocation7 + $0x3f8] sm:$0xff]
    %v3722 = vld [vmem:[#allocation7 + $0x400] sm:$0xff]
    %v3723 = vld [vmem:[#allocation7 + $0x408] sm:$0xff]
    %v3724 = vld [vmem:[#allocation7 + $0x410] sm:$0xff]
    %v3725 = vld [vmem:[#allocation7 + $0x418] sm:$0xff]
    %v3726 = vld [vmem:[#allocation7 + $0x420] sm:$0xff]
    %v3727 = vld [vmem:[#allocation7 + $0x428] sm:$0xff]
    %v3728 = vld [vmem:[#allocation7 + $0x430] sm:$0xff]
    %v3729 = vld [vmem:[#allocation7 + $0x438] sm:$0xff]
    %v3730 = vld [vmem:[#allocation7 + $0x440] sm:$0xff]
    %v3731 = vld [vmem:[#allocation7 + $0x448] sm:$0xff]
    %v3732 = vld [vmem:[#allocation7 + $0x450] sm:$0xff]
    %v3733 = vld [vmem:[#allocation7 + $0x458] sm:$0xff]
    %v3734 = vld [vmem:[#allocation7 + $0x460] sm:$0xff]
    %v3735 = vld [vmem:[#allocation7 + $0x468] sm:$0xff]
    %v3736 = vld [vmem:[#allocation7 + $0x470] sm:$0xff]
    %v3737 = vld [vmem:[#allocation7 + $0x478] sm:$0xff]
    %v3738 = vld [vmem:[#allocation7 + $0x480] sm:$0xff]
    %v3739 = vld [vmem:[#allocation7 + $0x488] sm:$0xff]
    %v3740 = vld [vmem:[#allocation7 + $0x490] sm:$0xff]
    %v3741 = vld [vmem:[#allocation7 + $0x498] sm:$0xff]
    %v3742 = vld [vmem:[#allocation7 + $0x4a0] sm:$0xff]
    %v3743 = vld [vmem:[#allocation7 + $0x4a8] sm:$0xff]
    %v3744 = vld [vmem:[#allocation7 + $0x4b0] sm:$0xff]
    %v3745 = vld [vmem:[#allocation7 + $0x4b8] sm:$0xff]
    %v3746 = vld [vmem:[#allocation7 + $0x4c0] sm:$0xff]
    %v3747 = vld [vmem:[#allocation7 + $0x4c8] sm:$0xff]
    %v3748 = vld [vmem:[#allocation7 + $0x4d0] sm:$0xff]
    %v3749 = vld [vmem:[#allocation7 + $0x4d8] sm:$0xff]
    %v3750 = vld [vmem:[#allocation7 + $0x4e0] sm:$0xff]
    %v3751 = vld [vmem:[#allocation7 + $0x4e8] sm:$0xff]
    %v3752 = vld [vmem:[#allocation7 + $0x4f0] sm:$0xff]
    %v3753 = vld [vmem:[#allocation7 + $0x4f8] sm:$0xff]
    %v3754 = vld [vmem:[#allocation7 + $0x500] sm:$0xff]
    %v3755 = vld [vmem:[#allocation7 + $0x508] sm:$0xff]
    %v3756 = vld [vmem:[#allocation7 + $0x510] sm:$0xff]
    %v3757 = vld [vmem:[#allocation7 + $0x518] sm:$0xff]
    %v3758 = vld [vmem:[#allocation7 + $0x520] sm:$0xff]
    %v3759 = vld [vmem:[#allocation7 + $0x528] sm:$0xff]
    %v3760 = vld [vmem:[#allocation7 + $0x530] sm:$0xff]
    %v3761 = vld [vmem:[#allocation7 + $0x538] sm:$0xff]
    %v3762 = vld [vmem:[#allocation7 + $0x540] sm:$0xff]
    %v3763 = vld [vmem:[#allocation7 + $0x548] sm:$0xff]
    %v3764 = vld [vmem:[#allocation7 + $0x550] sm:$0xff]
    %v3765 = vld [vmem:[#allocation7 + $0x558] sm:$0xff]
    %v3766 = vld [vmem:[#allocation7 + $0x560] sm:$0xff]
    %v3767 = vld [vmem:[#allocation7 + $0x568] sm:$0xff]
    %v3768 = vld [vmem:[#allocation7 + $0x570] sm:$0xff]
    %v3769 = vld [vmem:[#allocation7 + $0x578] sm:$0xff]
    %v3770 = vld [vmem:[#allocation7 + $0x580] sm:$0xff]
    %v3771 = vld [vmem:[#allocation7 + $0x588] sm:$0xff]
    %v3772 = vld [vmem:[#allocation7 + $0x590] sm:$0xff]
    %v3773 = vld [vmem:[#allocation7 + $0x598] sm:$0xff]
    %v3774 = vld [vmem:[#allocation7 + $0x5a0] sm:$0xff]
    %v3775 = vld [vmem:[#allocation7 + $0x5a8] sm:$0xff]
    %v3776 = vld [vmem:[#allocation7 + $0x5b0] sm:$0xff]
    %v3777 = vld [vmem:[#allocation7 + $0x5b8] sm:$0xff]
    %v3778 = vld [vmem:[#allocation7 + $0x5c0] sm:$0xff]
    %v3779 = vld [vmem:[#allocation7 + $0x5c8] sm:$0xff]
    %v3780 = vld [vmem:[#allocation7 + $0x5d0] sm:$0xff]
    %v3781 = vld [vmem:[#allocation7 + $0x5d8] sm:$0xff]
    %v3782 = vld [vmem:[#allocation7 + $0x5e0] sm:$0xff]
    %v3783 = vld [vmem:[#allocation7 + $0x5e8] sm:$0xff]
    %v3784 = vld [vmem:[#allocation7 + $0x5f0] sm:$0xff]
    %v3785 = vld [vmem:[#allocation7 + $0x5f8] sm:$0xff]
    %v3786 = vld [vmem:[#allocation7 + $0x600] sm:$0xff]
    %v3787 = vld [vmem:[#allocation7 + $0x608] sm:$0xff]
    %v3788 = vld [vmem:[#allocation7 + $0x610] sm:$0xff]
    %v3789 = vld [vmem:[#allocation7 + $0x618] sm:$0xff]
    %v3790 = vld [vmem:[#allocation7 + $0x620] sm:$0xff]
    %v3791 = vld [vmem:[#allocation7 + $0x628] sm:$0xff]
    %v3792 = vld [vmem:[#allocation7 + $0x630] sm:$0xff]
    %v3793 = vld [vmem:[#allocation7 + $0x638] sm:$0xff]
    %v3794 = vld [vmem:[#allocation7 + $0x640] sm:$0xff]
    %v3795 = vld [vmem:[#allocation7 + $0x648] sm:$0xff]
    %v3796 = vld [vmem:[#allocation7 + $0x650] sm:$0xff]
    %v3797 = vld [vmem:[#allocation7 + $0x658] sm:$0xff]
    %v3798 = vld [vmem:[#allocation7 + $0x660] sm:$0xff]
    %v3799 = vld [vmem:[#allocation7 + $0x668] sm:$0xff]
    %v3800 = vld [vmem:[#allocation7 + $0x670] sm:$0xff]
    %v3801 = vld [vmem:[#allocation7 + $0x678] sm:$0xff]
    %v3802 = vld [vmem:[#allocation7 + $0x680] sm:$0xff]
    %v3803 = vld [vmem:[#allocation7 + $0x688] sm:$0xff]
    %v3804 = vld [vmem:[#allocation7 + $0x690] sm:$0xff]
    %v3805 = vld [vmem:[#allocation7 + $0x698] sm:$0xff]
    %v3806 = vld [vmem:[#allocation7 + $0x6a0] sm:$0xff]
    %v3807 = vld [vmem:[#allocation7 + $0x6a8] sm:$0xff]
    %v3808 = vld [vmem:[#allocation7 + $0x6b0] sm:$0xff]
    %v3809 = vld [vmem:[#allocation7 + $0x6b8] sm:$0xff]
    %v3810 = vld [vmem:[#allocation7 + $0x6c0] sm:$0xff]
    %v3811 = vld [vmem:[#allocation7 + $0x6c8] sm:$0xff]
    %v3812 = vld [vmem:[#allocation7 + $0x6d0] sm:$0xff]
    %v3813 = vld [vmem:[#allocation7 + $0x6d8] sm:$0xff]
    %v3814 = vld [vmem:[#allocation7 + $0x6e0] sm:$0xff]
    %v3815 = vld [vmem:[#allocation7 + $0x6e8] sm:$0xff]
    %v3816 = vld [vmem:[#allocation7 + $0x6f0] sm:$0xff]
    %v3817 = vld [vmem:[#allocation7 + $0x6f8] sm:$0xff]
    %v3818 = vld [vmem:[#allocation7 + $0x700] sm:$0xff]
    %v3819 = vld [vmem:[#allocation7 + $0x708] sm:$0xff]
    %v3820 = vld [vmem:[#allocation7 + $0x710] sm:$0xff]
    %v3821 = vld [vmem:[#allocation7 + $0x718] sm:$0xff]
    %v3822 = vld [vmem:[#allocation7 + $0x720] sm:$0xff]
    %v3823 = vld [vmem:[#allocation7 + $0x728] sm:$0xff]
    %v3824 = vld [vmem:[#allocation7 + $0x730] sm:$0xff]
    %v3825 = vld [vmem:[#allocation7 + $0x738] sm:$0xff]
    %v3826 = vld [vmem:[#allocation7 + $0x740] sm:$0xff]
    %v3827 = vld [vmem:[#allocation7 + $0x748] sm:$0xff]
    %v3828 = vld [vmem:[#allocation7 + $0x750] sm:$0xff]
    %v3829 = vld [vmem:[#allocation7 + $0x758] sm:$0xff]
    %v3830 = vld [vmem:[#allocation7 + $0x760] sm:$0xff]
    %v3831 = vld [vmem:[#allocation7 + $0x768] sm:$0xff]
    %v3832 = vld [vmem:[#allocation7 + $0x770] sm:$0xff]
    %v3833 = vld [vmem:[#allocation7 + $0x778] sm:$0xff]
    %v3834 = vld [vmem:[#allocation7 + $0x780] sm:$0xff]
    %v3835 = vld [vmem:[#allocation7 + $0x788] sm:$0xff]
    %v3836 = vld [vmem:[#allocation7 + $0x790] sm:$0xff]
    %v3837 = vld [vmem:[#allocation7 + $0x798] sm:$0xff]
    %v3838 = vld [vmem:[#allocation7 + $0x7a0] sm:$0xff]
    %v3839 = vld [vmem:[#allocation7 + $0x7a8] sm:$0xff]
    %v3840 = vld [vmem:[#allocation7 + $0x7b0] sm:$0xff]
    %v3841 = vld [vmem:[#allocation7 + $0x7b8] sm:$0xff]
    %v3842 = vld [vmem:[#allocation7 + $0x7c0] sm:$0xff]
    %v3843 = vld [vmem:[#allocation7 + $0x7c8] sm:$0xff]
    %v3844 = vld [vmem:[#allocation7 + $0x7d0] sm:$0xff]
    %v3845 = vld [vmem:[#allocation7 + $0x7d8] sm:$0xff]
    %v3846 = vld [vmem:[#allocation7 + $0x7e0] sm:$0xff]
    %v3847 = vld [vmem:[#allocation7 + $0x7e8] sm:$0xff]
    %v3848 = vld [vmem:[#allocation7 + $0x7f0] sm:$0xff]
    %v3849 = vld [vmem:[#allocation7 + $0x7f8] sm:$0xff]
    %v3850 = vld [vmem:[#allocation8] sm:$0xf]
    %v3852 = vperm.slane %v3850, 0
    %v3853 = vperm.slane %v3850, 1
    %v3854 = vperm.slane %v3850, 2
    %v3855 = vperm.slane %v3850, 3
    %v4116 = vunpack.c.l.b16 %v3594
    %v4117 = vunpack.c.h.b16 %v3594
    %v4118 = vunpack.c.l.b16 %v3595
    %v4119 = vunpack.c.h.b16 %v3595
    %v4120 = vunpack.c.l.b16 %v3596
    %v4121 = vunpack.c.h.b16 %v3596
    %v4122 = vunpack.c.l.b16 %v3597
    %v4123 = vunpack.c.h.b16 %v3597
    %v4124 = vunpack.c.l.b16 %v3598
    %v4125 = vunpack.c.h.b16 %v3598
    %v4126 = vunpack.c.l.b16 %v3599
    %v4127 = vunpack.c.h.b16 %v3599
    %v4128 = vunpack.c.l.b16 %v3600
    %v4129 = vunpack.c.h.b16 %v3600
    %v4130 = vunpack.c.l.b16 %v3601
    %v4131 = vunpack.c.h.b16 %v3601
    %v4132 = vunpack.c.l.b16 %v3602
    %v4133 = vunpack.c.h.b16 %v3602
    %v4134 = vunpack.c.l.b16 %v3603
    %v4135 = vunpack.c.h.b16 %v3603
    %v4136 = vunpack.c.l.b16 %v3604
    %v4137 = vunpack.c.h.b16 %v3604
    %v4138 = vunpack.c.l.b16 %v3605
    %v4139 = vunpack.c.h.b16 %v3605
    %v4140 = vunpack.c.l.b16 %v3606
    %v4141 = vunpack.c.h.b16 %v3606
    %v4142 = vunpack.c.l.b16 %v3607
    %v4143 = vunpack.c.h.b16 %v3607
    %v4144 = vunpack.c.l.b16 %v3608
    %v4145 = vunpack.c.h.b16 %v3608
    %v4146 = vunpack.c.l.b16 %v3609
    %v4147 = vunpack.c.h.b16 %v3609
    %v4148 = vunpack.c.l.b16 %v3610
    %v4149 = vunpack.c.h.b16 %v3610
    %v4150 = vunpack.c.l.b16 %v3611
    %v4151 = vunpack.c.h.b16 %v3611
    %v4152 = vunpack.c.l.b16 %v3612
    %v4153 = vunpack.c.h.b16 %v3612
    %v4154 = vunpack.c.l.b16 %v3613
    %v4155 = vunpack.c.h.b16 %v3613
    %v4156 = vunpack.c.l.b16 %v3614
    %v4157 = vunpack.c.h.b16 %v3614
    %v4158 = vunpack.c.l.b16 %v3615
    %v4159 = vunpack.c.h.b16 %v3615
    %v4160 = vunpack.c.l.b16 %v3616
    %v4161 = vunpack.c.h.b16 %v3616
    %v4162 = vunpack.c.l.b16 %v3617
    %v4163 = vunpack.c.h.b16 %v3617
    %v4164 = vunpack.c.l.b16 %v3618
    %v4165 = vunpack.c.h.b16 %v3618
    %v4166 = vunpack.c.l.b16 %v3619
    %v4167 = vunpack.c.h.b16 %v3619
    %v4168 = vunpack.c.l.b16 %v3620
    %v4169 = vunpack.c.h.b16 %v3620
    %v4170 = vunpack.c.l.b16 %v3621
    %v4171 = vunpack.c.h.b16 %v3621
    %v4172 = vunpack.c.l.b16 %v3622
    %v4173 = vunpack.c.h.b16 %v3622
    %v4174 = vunpack.c.l.b16 %v3623
    %v4175 = vunpack.c.h.b16 %v3623
    %v4176 = vunpack.c.l.b16 %v3624
    %v4177 = vunpack.c.h.b16 %v3624
    %v4178 = vunpack.c.l.b16 %v3625
    %v4179 = vunpack.c.h.b16 %v3625
    %v4180 = vunpack.c.l.b16 %v3626
    %v4181 = vunpack.c.h.b16 %v3626
    %v4182 = vunpack.c.l.b16 %v3627
    %v4183 = vunpack.c.h.b16 %v3627
    %v4184 = vunpack.c.l.b16 %v3628
    %v4185 = vunpack.c.h.b16 %v3628
    %v4186 = vunpack.c.l.b16 %v3629
    %v4187 = vunpack.c.h.b16 %v3629
    %v4188 = vunpack.c.l.b16 %v3630
    %v4189 = vunpack.c.h.b16 %v3630
    %v4190 = vunpack.c.l.b16 %v3631
    %v4191 = vunpack.c.h.b16 %v3631
    %v4192 = vunpack.c.l.b16 %v3632
    %v4193 = vunpack.c.h.b16 %v3632
    %v4194 = vunpack.c.l.b16 %v3633
    %v4195 = vunpack.c.h.b16 %v3633
    %v4196 = vunpack.c.l.b16 %v3634
    %v4197 = vunpack.c.h.b16 %v3634
    %v4198 = vunpack.c.l.b16 %v3635
    %v4199 = vunpack.c.h.b16 %v3635
    %v4200 = vunpack.c.l.b16 %v3636
    %v4201 = vunpack.c.h.b16 %v3636
    %v4202 = vunpack.c.l.b16 %v3637
    %v4203 = vunpack.c.h.b16 %v3637
    %v4204 = vunpack.c.l.b16 %v3638
    %v4205 = vunpack.c.h.b16 %v3638
    %v4206 = vunpack.c.l.b16 %v3639
    %v4207 = vunpack.c.h.b16 %v3639
    %v4208 = vunpack.c.l.b16 %v3640
    %v4209 = vunpack.c.h.b16 %v3640
    %v4210 = vunpack.c.l.b16 %v3641
    %v4211 = vunpack.c.h.b16 %v3641
    %v4212 = vunpack.c.l.b16 %v3642
    %v4213 = vunpack.c.h.b16 %v3642
    %v4214 = vunpack.c.l.b16 %v3643
    %v4215 = vunpack.c.h.b16 %v3643
    %v4216 = vunpack.c.l.b16 %v3644
    %v4217 = vunpack.c.h.b16 %v3644
    %v4218 = vunpack.c.l.b16 %v3645
    %v4219 = vunpack.c.h.b16 %v3645
    %v4220 = vunpack.c.l.b16 %v3646
    %v4221 = vunpack.c.h.b16 %v3646
    %v4222 = vunpack.c.l.b16 %v3647
    %v4223 = vunpack.c.h.b16 %v3647
    %v4224 = vunpack.c.l.b16 %v3648
    %v4225 = vunpack.c.h.b16 %v3648
    %v4226 = vunpack.c.l.b16 %v3649
    %v4227 = vunpack.c.h.b16 %v3649
    %v4228 = vunpack.c.l.b16 %v3650
    %v4229 = vunpack.c.h.b16 %v3650
    %v4230 = vunpack.c.l.b16 %v3651
    %v4231 = vunpack.c.h.b16 %v3651
    %v4232 = vunpack.c.l.b16 %v3652
    %v4233 = vunpack.c.h.b16 %v3652
    %v4234 = vunpack.c.l.b16 %v3653
    %v4235 = vunpack.c.h.b16 %v3653
    %v4236 = vunpack.c.l.b16 %v3654
    %v4237 = vunpack.c.h.b16 %v3654
    %v4238 = vunpack.c.l.b16 %v3655
    %v4239 = vunpack.c.h.b16 %v3655
    %v4240 = vunpack.c.l.b16 %v3656
    %v4241 = vunpack.c.h.b16 %v3656
    %v4242 = vunpack.c.l.b16 %v3657
    %v4243 = vunpack.c.h.b16 %v3657
    %v4244 = vunpack.c.l.b16 %v3658
    %v4245 = vunpack.c.h.b16 %v3658
    %v4246 = vunpack.c.l.b16 %v3659
    %v4247 = vunpack.c.h.b16 %v3659
    %v4248 = vunpack.c.l.b16 %v3660
    %v4249 = vunpack.c.h.b16 %v3660
    %v4250 = vunpack.c.l.b16 %v3661
    %v4251 = vunpack.c.h.b16 %v3661
    %v4252 = vunpack.c.l.b16 %v3662
    %v4253 = vunpack.c.h.b16 %v3662
    %v4254 = vunpack.c.l.b16 %v3663
    %v4255 = vunpack.c.h.b16 %v3663
    %v4256 = vunpack.c.l.b16 %v3664
    %v4257 = vunpack.c.h.b16 %v3664
    %v4258 = vunpack.c.l.b16 %v3665
    %v4259 = vunpack.c.h.b16 %v3665
    %v4260 = vunpack.c.l.b16 %v3666
    %v4261 = vunpack.c.h.b16 %v3666
    %v4262 = vunpack.c.l.b16 %v3667
    %v4263 = vunpack.c.h.b16 %v3667
    %v4264 = vunpack.c.l.b16 %v3668
    %v4265 = vunpack.c.h.b16 %v3668
    %v4266 = vunpack.c.l.b16 %v3669
    %v4267 = vunpack.c.h.b16 %v3669
    %v4268 = vunpack.c.l.b16 %v3670
    %v4269 = vunpack.c.h.b16 %v3670
    %v4270 = vunpack.c.l.b16 %v3671
    %v4271 = vunpack.c.h.b16 %v3671
    %v4272 = vunpack.c.l.b16 %v3672
    %v4273 = vunpack.c.h.b16 %v3672
    %v4274 = vunpack.c.l.b16 %v3673
    %v4275 = vunpack.c.h.b16 %v3673
    %v4276 = vunpack.c.l.b16 %v3674
    %v4277 = vunpack.c.h.b16 %v3674
    %v4278 = vunpack.c.l.b16 %v3675
    %v4279 = vunpack.c.h.b16 %v3675
    %v4280 = vunpack.c.l.b16 %v3676
    %v4281 = vunpack.c.h.b16 %v3676
    %v4282 = vunpack.c.l.b16 %v3677
    %v4283 = vunpack.c.h.b16 %v3677
    %v4284 = vunpack.c.l.b16 %v3678
    %v4285 = vunpack.c.h.b16 %v3678
    %v4286 = vunpack.c.l.b16 %v3679
    %v4287 = vunpack.c.h.b16 %v3679
    %v4288 = vunpack.c.l.b16 %v3680
    %v4289 = vunpack.c.h.b16 %v3680
    %v4290 = vunpack.c.l.b16 %v3681
    %v4291 = vunpack.c.h.b16 %v3681
    %v4292 = vunpack.c.l.b16 %v3682
    %v4293 = vunpack.c.h.b16 %v3682
    %v4294 = vunpack.c.l.b16 %v3683
    %v4295 = vunpack.c.h.b16 %v3683
    %v4296 = vunpack.c.l.b16 %v3684
    %v4297 = vunpack.c.h.b16 %v3684
    %v4298 = vunpack.c.l.b16 %v3685
    %v4299 = vunpack.c.h.b16 %v3685
    %v4300 = vunpack.c.l.b16 %v3686
    %v4301 = vunpack.c.h.b16 %v3686
    %v4302 = vunpack.c.l.b16 %v3687
    %v4303 = vunpack.c.h.b16 %v3687
    %v4304 = vunpack.c.l.b16 %v3688
    %v4305 = vunpack.c.h.b16 %v3688
    %v4306 = vunpack.c.l.b16 %v3689
    %v4307 = vunpack.c.h.b16 %v3689
    %v4308 = vunpack.c.l.b16 %v3690
    %v4309 = vunpack.c.h.b16 %v3690
    %v4310 = vunpack.c.l.b16 %v3691
    %v4311 = vunpack.c.h.b16 %v3691
    %v4312 = vunpack.c.l.b16 %v3692
    %v4313 = vunpack.c.h.b16 %v3692
    %v4314 = vunpack.c.l.b16 %v3693
    %v4315 = vunpack.c.h.b16 %v3693
    %v4316 = vunpack.c.l.b16 %v3694
    %v4317 = vunpack.c.h.b16 %v3694
    %v4318 = vunpack.c.l.b16 %v3695
    %v4319 = vunpack.c.h.b16 %v3695
    %v4320 = vunpack.c.l.b16 %v3696
    %v4321 = vunpack.c.h.b16 %v3696
    %v4322 = vunpack.c.l.b16 %v3697
    %v4323 = vunpack.c.h.b16 %v3697
    %v4324 = vunpack.c.l.b16 %v3698
    %v4325 = vunpack.c.h.b16 %v3698
    %v4326 = vunpack.c.l.b16 %v3699
    %v4327 = vunpack.c.h.b16 %v3699
    %v4328 = vunpack.c.l.b16 %v3700
    %v4329 = vunpack.c.h.b16 %v3700
    %v4330 = vunpack.c.l.b16 %v3701
    %v4331 = vunpack.c.h.b16 %v3701
    %v4332 = vunpack.c.l.b16 %v3702
    %v4333 = vunpack.c.h.b16 %v3702
    %v4334 = vunpack.c.l.b16 %v3703
    %v4335 = vunpack.c.h.b16 %v3703
    %v4336 = vunpack.c.l.b16 %v3704
    %v4337 = vunpack.c.h.b16 %v3704
    %v4338 = vunpack.c.l.b16 %v3705
    %v4339 = vunpack.c.h.b16 %v3705
    %v4340 = vunpack.c.l.b16 %v3706
    %v4341 = vunpack.c.h.b16 %v3706
    %v4342 = vunpack.c.l.b16 %v3707
    %v4343 = vunpack.c.h.b16 %v3707
    %v4344 = vunpack.c.l.b16 %v3708
    %v4345 = vunpack.c.h.b16 %v3708
    %v4346 = vunpack.c.l.b16 %v3709
    %v4347 = vunpack.c.h.b16 %v3709
    %v4348 = vunpack.c.l.b16 %v3710
    %v4349 = vunpack.c.h.b16 %v3710
    %v4350 = vunpack.c.l.b16 %v3711
    %v4351 = vunpack.c.h.b16 %v3711
    %v4352 = vunpack.c.l.b16 %v3712
    %v4353 = vunpack.c.h.b16 %v3712
    %v4354 = vunpack.c.l.b16 %v3713
    %v4355 = vunpack.c.h.b16 %v3713
    %v4356 = vunpack.c.l.b16 %v3714
    %v4357 = vunpack.c.h.b16 %v3714
    %v4358 = vunpack.c.l.b16 %v3715
    %v4359 = vunpack.c.h.b16 %v3715
    %v4360 = vunpack.c.l.b16 %v3716
    %v4361 = vunpack.c.h.b16 %v3716
    %v4362 = vunpack.c.l.b16 %v3717
    %v4363 = vunpack.c.h.b16 %v3717
    %v4364 = vunpack.c.l.b16 %v3718
    %v4365 = vunpack.c.h.b16 %v3718
    %v4366 = vunpack.c.l.b16 %v3719
    %v4367 = vunpack.c.h.b16 %v3719
    %v4368 = vunpack.c.l.b16 %v3720
    %v4369 = vunpack.c.h.b16 %v3720
    %v4370 = vunpack.c.l.b16 %v3721
    %v4371 = vunpack.c.h.b16 %v3721
    %v4372 = vunpack.c.l.b16 %v3722
    %v4373 = vunpack.c.h.b16 %v3722
    %v4374 = vunpack.c.l.b16 %v3723
    %v4375 = vunpack.c.h.b16 %v3723
    %v4376 = vunpack.c.l.b16 %v3724
    %v4377 = vunpack.c.h.b16 %v3724
    %v4378 = vunpack.c.l.b16 %v3725
    %v4379 = vunpack.c.h.b16 %v3725
    %v4380 = vunpack.c.l.b16 %v3726
    %v4381 = vunpack.c.h.b16 %v3726
    %v4382 = vunpack.c.l.b16 %v3727
    %v4383 = vunpack.c.h.b16 %v3727
    %v4384 = vunpack.c.l.b16 %v3728
    %v4385 = vunpack.c.h.b16 %v3728
    %v4386 = vunpack.c.l.b16 %v3729
    %v4387 = vunpack.c.h.b16 %v3729
    %v4388 = vunpack.c.l.b16 %v3730
    %v4389 = vunpack.c.h.b16 %v3730
    %v4390 = vunpack.c.l.b16 %v3731
    %v4391 = vunpack.c.h.b16 %v3731
    %v4392 = vunpack.c.l.b16 %v3732
    %v4393 = vunpack.c.h.b16 %v3732
    %v4394 = vunpack.c.l.b16 %v3733
    %v4395 = vunpack.c.h.b16 %v3733
    %v4396 = vunpack.c.l.b16 %v3734
    %v4397 = vunpack.c.h.b16 %v3734
    %v4398 = vunpack.c.l.b16 %v3735
    %v4399 = vunpack.c.h.b16 %v3735
    %v4400 = vunpack.c.l.b16 %v3736
    %v4401 = vunpack.c.h.b16 %v3736
    %v4402 = vunpack.c.l.b16 %v3737
    %v4403 = vunpack.c.h.b16 %v3737
    %v4404 = vunpack.c.l.b16 %v3738
    %v4405 = vunpack.c.h.b16 %v3738
    %v4406 = vunpack.c.l.b16 %v3739
    %v4407 = vunpack.c.h.b16 %v3739
    %v4408 = vunpack.c.l.b16 %v3740
    %v4409 = vunpack.c.h.b16 %v3740
    %v4410 = vunpack.c.l.b16 %v3741
    %v4411 = vunpack.c.h.b16 %v3741
    %v4412 = vunpack.c.l.b16 %v3742
    %v4413 = vunpack.c.h.b16 %v3742
    %v4414 = vunpack.c.l.b16 %v3743
    %v4415 = vunpack.c.h.b16 %v3743
    %v4416 = vunpack.c.l.b16 %v3744
    %v4417 = vunpack.c.h.b16 %v3744
    %v4418 = vunpack.c.l.b16 %v3745
    %v4419 = vunpack.c.h.b16 %v3745
    %v4420 = vunpack.c.l.b16 %v3746
    %v4421 = vunpack.c.h.b16 %v3746
    %v4422 = vunpack.c.l.b16 %v3747
    %v4423 = vunpack.c.h.b16 %v3747
    %v4424 = vunpack.c.l.b16 %v3748
    %v4425 = vunpack.c.h.b16 %v3748
    %v4426 = vunpack.c.l.b16 %v3749
    %v4427 = vunpack.c.h.b16 %v3749
    %v4428 = vunpack.c.l.b16 %v3750
    %v4429 = vunpack.c.h.b16 %v3750
    %v4430 = vunpack.c.l.b16 %v3751
    %v4431 = vunpack.c.h.b16 %v3751
    %v4432 = vunpack.c.l.b16 %v3752
    %v4433 = vunpack.c.h.b16 %v3752
    %v4434 = vunpack.c.l.b16 %v3753
    %v4435 = vunpack.c.h.b16 %v3753
    %v4436 = vunpack.c.l.b16 %v3754
    %v4437 = vunpack.c.h.b16 %v3754
    %v4438 = vunpack.c.l.b16 %v3755
    %v4439 = vunpack.c.h.b16 %v3755
    %v4440 = vunpack.c.l.b16 %v3756
    %v4441 = vunpack.c.h.b16 %v3756
    %v4442 = vunpack.c.l.b16 %v3757
    %v4443 = vunpack.c.h.b16 %v3757
    %v4444 = vunpack.c.l.b16 %v3758
    %v4445 = vunpack.c.h.b16 %v3758
    %v4446 = vunpack.c.l.b16 %v3759
    %v4447 = vunpack.c.h.b16 %v3759
    %v4448 = vunpack.c.l.b16 %v3760
    %v4449 = vunpack.c.h.b16 %v3760
    %v4450 = vunpack.c.l.b16 %v3761
    %v4451 = vunpack.c.h.b16 %v3761
    %v4452 = vunpack.c.l.b16 %v3762
    %v4453 = vunpack.c.h.b16 %v3762
    %v4454 = vunpack.c.l.b16 %v3763
    %v4455 = vunpack.c.h.b16 %v3763
    %v4456 = vunpack.c.l.b16 %v3764
    %v4457 = vunpack.c.h.b16 %v3764
    %v4458 = vunpack.c.l.b16 %v3765
    %v4459 = vunpack.c.h.b16 %v3765
    %v4460 = vunpack.c.l.b16 %v3766
    %v4461 = vunpack.c.h.b16 %v3766
    %v4462 = vunpack.c.l.b16 %v3767
    %v4463 = vunpack.c.h.b16 %v3767
    %v4464 = vunpack.c.l.b16 %v3768
    %v4465 = vunpack.c.h.b16 %v3768
    %v4466 = vunpack.c.l.b16 %v3769
    %v4467 = vunpack.c.h.b16 %v3769
    %v4468 = vunpack.c.l.b16 %v3770
    %v4469 = vunpack.c.h.b16 %v3770
    %v4470 = vunpack.c.l.b16 %v3771
    %v4471 = vunpack.c.h.b16 %v3771
    %v4472 = vunpack.c.l.b16 %v3772
    %v4473 = vunpack.c.h.b16 %v3772
    %v4474 = vunpack.c.l.b16 %v3773
    %v4475 = vunpack.c.h.b16 %v3773
    %v4476 = vunpack.c.l.b16 %v3774
    %v4477 = vunpack.c.h.b16 %v3774
    %v4478 = vunpack.c.l.b16 %v3775
    %v4479 = vunpack.c.h.b16 %v3775
    %v4480 = vunpack.c.l.b16 %v3776
    %v4481 = vunpack.c.h.b16 %v3776
    %v4482 = vunpack.c.l.b16 %v3777
    %v4483 = vunpack.c.h.b16 %v3777
    %v4484 = vunpack.c.l.b16 %v3778
    %v4485 = vunpack.c.h.b16 %v3778
    %v4486 = vunpack.c.l.b16 %v3779
    %v4487 = vunpack.c.h.b16 %v3779
    %v4488 = vunpack.c.l.b16 %v3780
    %v4489 = vunpack.c.h.b16 %v3780
    %v4490 = vunpack.c.l.b16 %v3781
    %v4491 = vunpack.c.h.b16 %v3781
    %v4492 = vunpack.c.l.b16 %v3782
    %v4493 = vunpack.c.h.b16 %v3782
    %v4494 = vunpack.c.l.b16 %v3783
    %v4495 = vunpack.c.h.b16 %v3783
    %v4496 = vunpack.c.l.b16 %v3784
    %v4497 = vunpack.c.h.b16 %v3784
    %v4498 = vunpack.c.l.b16 %v3785
    %v4499 = vunpack.c.h.b16 %v3785
    %v4500 = vunpack.c.l.b16 %v3786
    %v4501 = vunpack.c.h.b16 %v3786
    %v4502 = vunpack.c.l.b16 %v3787
    %v4503 = vunpack.c.h.b16 %v3787
    %v4504 = vunpack.c.l.b16 %v3788
    %v4505 = vunpack.c.h.b16 %v3788
    %v4506 = vunpack.c.l.b16 %v3789
    %v4507 = vunpack.c.h.b16 %v3789
    %v4508 = vunpack.c.l.b16 %v3790
    %v4509 = vunpack.c.h.b16 %v3790
    %v4510 = vunpack.c.l.b16 %v3791
    %v4511 = vunpack.c.h.b16 %v3791
    %v4512 = vunpack.c.l.b16 %v3792
    %v4513 = vunpack.c.h.b16 %v3792
    %v4514 = vunpack.c.l.b16 %v3793
    %v4515 = vunpack.c.h.b16 %v3793
    %v4516 = vunpack.c.l.b16 %v3794
    %v4517 = vunpack.c.h.b16 %v3794
    %v4518 = vunpack.c.l.b16 %v3795
    %v4519 = vunpack.c.h.b16 %v3795
    %v4520 = vunpack.c.l.b16 %v3796
    %v4521 = vunpack.c.h.b16 %v3796
    %v4522 = vunpack.c.l.b16 %v3797
    %v4523 = vunpack.c.h.b16 %v3797
    %v4524 = vunpack.c.l.b16 %v3798
    %v4525 = vunpack.c.h.b16 %v3798
    %v4526 = vunpack.c.l.b16 %v3799
    %v4527 = vunpack.c.h.b16 %v3799
    %v4528 = vunpack.c.l.b16 %v3800
    %v4529 = vunpack.c.h.b16 %v3800
    %v4530 = vunpack.c.l.b16 %v3801
    %v4531 = vunpack.c.h.b16 %v3801
    %v4532 = vunpack.c.l.b16 %v3802
    %v4533 = vunpack.c.h.b16 %v3802
    %v4534 = vunpack.c.l.b16 %v3803
    %v4535 = vunpack.c.h.b16 %v3803
    %v4536 = vunpack.c.l.b16 %v3804
    %v4537 = vunpack.c.h.b16 %v3804
    %v4538 = vunpack.c.l.b16 %v3805
    %v4539 = vunpack.c.h.b16 %v3805
    %v4540 = vunpack.c.l.b16 %v3806
    %v4541 = vunpack.c.h.b16 %v3806
    %v4542 = vunpack.c.l.b16 %v3807
    %v4543 = vunpack.c.h.b16 %v3807
    %v4544 = vunpack.c.l.b16 %v3808
    %v4545 = vunpack.c.h.b16 %v3808
    %v4546 = vunpack.c.l.b16 %v3809
    %v4547 = vunpack.c.h.b16 %v3809
    %v4548 = vunpack.c.l.b16 %v3810
    %v4549 = vunpack.c.h.b16 %v3810
    %v4550 = vunpack.c.l.b16 %v3811
    %v4551 = vunpack.c.h.b16 %v3811
    %v4552 = vunpack.c.l.b16 %v3812
    %v4553 = vunpack.c.h.b16 %v3812
    %v4554 = vunpack.c.l.b16 %v3813
    %v4555 = vunpack.c.h.b16 %v3813
    %v4556 = vunpack.c.l.b16 %v3814
    %v4557 = vunpack.c.h.b16 %v3814
    %v4558 = vunpack.c.l.b16 %v3815
    %v4559 = vunpack.c.h.b16 %v3815
    %v4560 = vunpack.c.l.b16 %v3816
    %v4561 = vunpack.c.h.b16 %v3816
    %v4562 = vunpack.c.l.b16 %v3817
    %v4563 = vunpack.c.h.b16 %v3817
    %v4564 = vunpack.c.l.b16 %v3818
    %v4565 = vunpack.c.h.b16 %v3818
    %v4566 = vunpack.c.l.b16 %v3819
    %v4567 = vunpack.c.h.b16 %v3819
    %v4568 = vunpack.c.l.b16 %v3820
    %v4569 = vunpack.c.h.b16 %v3820
    %v4570 = vunpack.c.l.b16 %v3821
    %v4571 = vunpack.c.h.b16 %v3821
    %v4572 = vunpack.c.l.b16 %v3822
    %v4573 = vunpack.c.h.b16 %v3822
    %v4574 = vunpack.c.l.b16 %v3823
    %v4575 = vunpack.c.h.b16 %v3823
    %v4576 = vunpack.c.l.b16 %v3824
    %v4577 = vunpack.c.h.b16 %v3824
    %v4578 = vunpack.c.l.b16 %v3825
    %v4579 = vunpack.c.h.b16 %v3825
    %v4580 = vunpack.c.l.b16 %v3826
    %v4581 = vunpack.c.h.b16 %v3826
    %v4582 = vunpack.c.l.b16 %v3827
    %v4583 = vunpack.c.h.b16 %v3827
    %v4584 = vunpack.c.l.b16 %v3828
    %v4585 = vunpack.c.h.b16 %v3828
    %v4586 = vunpack.c.l.b16 %v3829
    %v4587 = vunpack.c.h.b16 %v3829
    %v4588 = vunpack.c.l.b16 %v3830
    %v4589 = vunpack.c.h.b16 %v3830
    %v4590 = vunpack.c.l.b16 %v3831
    %v4591 = vunpack.c.h.b16 %v3831
    %v4592 = vunpack.c.l.b16 %v3832
    %v4593 = vunpack.c.h.b16 %v3832
    %v4594 = vunpack.c.l.b16 %v3833
    %v4595 = vunpack.c.h.b16 %v3833
    %v4596 = vunpack.c.l.b16 %v3834
    %v4597 = vunpack.c.h.b16 %v3834
    %v4598 = vunpack.c.l.b16 %v3835
    %v4599 = vunpack.c.h.b16 %v3835
    %v4600 = vunpack.c.l.b16 %v3836
    %v4601 = vunpack.c.h.b16 %v3836
    %v4602 = vunpack.c.l.b16 %v3837
    %v4603 = vunpack.c.h.b16 %v3837
    %v4604 = vunpack.c.l.b16 %v3838
    %v4605 = vunpack.c.h.b16 %v3838
    %v4606 = vunpack.c.l.b16 %v3839
    %v4607 = vunpack.c.h.b16 %v3839
    %v4608 = vunpack.c.l.b16 %v3840
    %v4609 = vunpack.c.h.b16 %v3840
    %v4610 = vunpack.c.l.b16 %v3841
    %v4611 = vunpack.c.h.b16 %v3841
    %v4612 = vunpack.c.l.b16 %v3842
    %v4613 = vunpack.c.h.b16 %v3842
    %v4614 = vunpack.c.l.b16 %v3843
    %v4615 = vunpack.c.h.b16 %v3843
    %v4616 = vunpack.c.l.b16 %v3844
    %v4617 = vunpack.c.h.b16 %v3844
    %v4618 = vunpack.c.l.b16 %v3845
    %v4619 = vunpack.c.h.b16 %v3845
    %v4620 = vunpack.c.l.b16 %v3846
    %v4621 = vunpack.c.h.b16 %v3846
    %v4622 = vunpack.c.l.b16 %v3847
    %v4623 = vunpack.c.h.b16 %v3847
    %v4624 = vunpack.c.l.b16 %v3848
    %v4625 = vunpack.c.h.b16 %v3848
    %v4626 = vunpack.c.l.b16 %v3849
    %v4627 = vunpack.c.h.b16 %v3849
    %v4628 = vpack.c.b16 %v4120, %v4116
    %v4629 = vpack.c.b16 %v4121, %v4117
    %v4630 = vpack.c.b16 %v4122, %v4118
    %v4631 = vpack.c.b16 %v4123, %v4119
    %v4632 = vpack.c.b16 %v4128, %v4124
    %v4633 = vpack.c.b16 %v4129, %v4125
    %v4634 = vpack.c.b16 %v4130, %v4126
    %v4635 = vpack.c.b16 %v4131, %v4127
    %v4636 = vpack.c.b16 %v4136, %v4132
    %v4637 = vpack.c.b16 %v4137, %v4133
    %v4638 = vpack.c.b16 %v4138, %v4134
    %v4639 = vpack.c.b16 %v4139, %v4135
    %v4640 = vpack.c.b16 %v4144, %v4140
    %v4641 = vpack.c.b16 %v4145, %v4141
    %v4642 = vpack.c.b16 %v4146, %v4142
    %v4643 = vpack.c.b16 %v4147, %v4143
    %v4644 = vpack.c.b16 %v4152, %v4148
    %v4645 = vpack.c.b16 %v4153, %v4149
    %v4646 = vpack.c.b16 %v4154, %v4150
    %v4647 = vpack.c.b16 %v4155, %v4151
    %v4648 = vpack.c.b16 %v4160, %v4156
    %v4649 = vpack.c.b16 %v4161, %v4157
    %v4650 = vpack.c.b16 %v4162, %v4158
    %v4651 = vpack.c.b16 %v4163, %v4159
    %v4652 = vpack.c.b16 %v4168, %v4164
    %v4653 = vpack.c.b16 %v4169, %v4165
    %v4654 = vpack.c.b16 %v4170, %v4166
    %v4655 = vpack.c.b16 %v4171, %v4167
    %v4656 = vpack.c.b16 %v4176, %v4172
    %v4657 = vpack.c.b16 %v4177, %v4173
    %v4658 = vpack.c.b16 %v4178, %v4174
    %v4659 = vpack.c.b16 %v4179, %v4175
    %v4660 = vpack.c.b16 %v4184, %v4180
    %v4661 = vpack.c.b16 %v4185, %v4181
    %v4662 = vpack.c.b16 %v4186, %v4182
    %v4663 = vpack.c.b16 %v4187, %v4183
    %v4664 = vpack.c.b16 %v4192, %v4188
    %v4665 = vpack.c.b16 %v4193, %v4189
    %v4666 = vpack.c.b16 %v4194, %v4190
    %v4667 = vpack.c.b16 %v4195, %v4191
    %v4668 = vpack.c.b16 %v4200, %v4196
    %v4669 = vpack.c.b16 %v4201, %v4197
    %v4670 = vpack.c.b16 %v4202, %v4198
    %v4671 = vpack.c.b16 %v4203, %v4199
    %v4672 = vpack.c.b16 %v4208, %v4204
    %v4673 = vpack.c.b16 %v4209, %v4205
    %v4674 = vpack.c.b16 %v4210, %v4206
    %v4675 = vpack.c.b16 %v4211, %v4207
    %v4676 = vpack.c.b16 %v4216, %v4212
    %v4677 = vpack.c.b16 %v4217, %v4213
    %v4678 = vpack.c.b16 %v4218, %v4214
    %v4679 = vpack.c.b16 %v4219, %v4215
    %v4680 = vpack.c.b16 %v4224, %v4220
    %v4681 = vpack.c.b16 %v4225, %v4221
    %v4682 = vpack.c.b16 %v4226, %v4222
    %v4683 = vpack.c.b16 %v4227, %v4223
    %v4684 = vpack.c.b16 %v4232, %v4228
    %v4685 = vpack.c.b16 %v4233, %v4229
    %v4686 = vpack.c.b16 %v4234, %v4230
    %v4687 = vpack.c.b16 %v4235, %v4231
    %v4688 = vpack.c.b16 %v4240, %v4236
    %v4689 = vpack.c.b16 %v4241, %v4237
    %v4690 = vpack.c.b16 %v4242, %v4238
    %v4691 = vpack.c.b16 %v4243, %v4239
    %v4692 = vpack.c.b16 %v4248, %v4244
    %v4693 = vpack.c.b16 %v4249, %v4245
    %v4694 = vpack.c.b16 %v4250, %v4246
    %v4695 = vpack.c.b16 %v4251, %v4247
    %v4696 = vpack.c.b16 %v4256, %v4252
    %v4697 = vpack.c.b16 %v4257, %v4253
    %v4698 = vpack.c.b16 %v4258, %v4254
    %v4699 = vpack.c.b16 %v4259, %v4255
    %v4700 = vpack.c.b16 %v4264, %v4260
    %v4701 = vpack.c.b16 %v4265, %v4261
    %v4702 = vpack.c.b16 %v4266, %v4262
    %v4703 = vpack.c.b16 %v4267, %v4263
    %v4704 = vpack.c.b16 %v4272, %v4268
    %v4705 = vpack.c.b16 %v4273, %v4269
    %v4706 = vpack.c.b16 %v4274, %v4270
    %v4707 = vpack.c.b16 %v4275, %v4271
    %v4708 = vpack.c.b16 %v4280, %v4276
    %v4709 = vpack.c.b16 %v4281, %v4277
    %v4710 = vpack.c.b16 %v4282, %v4278
    %v4711 = vpack.c.b16 %v4283, %v4279
    %v4712 = vpack.c.b16 %v4288, %v4284
    %v4713 = vpack.c.b16 %v4289, %v4285
    %v4714 = vpack.c.b16 %v4290, %v4286
    %v4715 = vpack.c.b16 %v4291, %v4287
    %v4716 = vpack.c.b16 %v4296, %v4292
    %v4717 = vpack.c.b16 %v4297, %v4293
    %v4718 = vpack.c.b16 %v4298, %v4294
    %v4719 = vpack.c.b16 %v4299, %v4295
    %v4720 = vpack.c.b16 %v4304, %v4300
    %v4721 = vpack.c.b16 %v4305, %v4301
    %v4722 = vpack.c.b16 %v4306, %v4302
    %v4723 = vpack.c.b16 %v4307, %v4303
    %v4724 = vpack.c.b16 %v4312, %v4308
    %v4725 = vpack.c.b16 %v4313, %v4309
    %v4726 = vpack.c.b16 %v4314, %v4310
    %v4727 = vpack.c.b16 %v4315, %v4311
    %v4728 = vpack.c.b16 %v4320, %v4316
    %v4729 = vpack.c.b16 %v4321, %v4317
    %v4730 = vpack.c.b16 %v4322, %v4318
    %v4731 = vpack.c.b16 %v4323, %v4319
    %v4732 = vpack.c.b16 %v4328, %v4324
    %v4733 = vpack.c.b16 %v4329, %v4325
    %v4734 = vpack.c.b16 %v4330, %v4326
    %v4735 = vpack.c.b16 %v4331, %v4327
    %v4736 = vpack.c.b16 %v4336, %v4332
    %v4737 = vpack.c.b16 %v4337, %v4333
    %v4738 = vpack.c.b16 %v4338, %v4334
    %v4739 = vpack.c.b16 %v4339, %v4335
    %v4740 = vpack.c.b16 %v4344, %v4340
    %v4741 = vpack.c.b16 %v4345, %v4341
    %v4742 = vpack.c.b16 %v4346, %v4342
    %v4743 = vpack.c.b16 %v4347, %v4343
    %v4744 = vpack.c.b16 %v4352, %v4348
    %v4745 = vpack.c.b16 %v4353, %v4349
    %v4746 = vpack.c.b16 %v4354, %v4350
    %v4747 = vpack.c.b16 %v4355, %v4351
    %v4748 = vpack.c.b16 %v4360, %v4356
    %v4749 = vpack.c.b16 %v4361, %v4357
    %v4750 = vpack.c.b16 %v4362, %v4358
    %v4751 = vpack.c.b16 %v4363, %v4359
    %v4752 = vpack.c.b16 %v4368, %v4364
    %v4753 = vpack.c.b16 %v4369, %v4365
    %v4754 = vpack.c.b16 %v4370, %v4366
    %v4755 = vpack.c.b16 %v4371, %v4367
    %v4756 = vpack.c.b16 %v4376, %v4372
    %v4757 = vpack.c.b16 %v4377, %v4373
    %v4758 = vpack.c.b16 %v4378, %v4374
    %v4759 = vpack.c.b16 %v4379, %v4375
    %v4760 = vpack.c.b16 %v4384, %v4380
    %v4761 = vpack.c.b16 %v4385, %v4381
    %v4762 = vpack.c.b16 %v4386, %v4382
    %v4763 = vpack.c.b16 %v4387, %v4383
    %v4764 = vpack.c.b16 %v4392, %v4388
    %v4765 = vpack.c.b16 %v4393, %v4389
    %v4766 = vpack.c.b16 %v4394, %v4390
    %v4767 = vpack.c.b16 %v4395, %v4391
    %v4768 = vpack.c.b16 %v4400, %v4396
    %v4769 = vpack.c.b16 %v4401, %v4397
    %v4770 = vpack.c.b16 %v4402, %v4398
    %v4771 = vpack.c.b16 %v4403, %v4399
    %v4772 = vpack.c.b16 %v4408, %v4404
    %v4773 = vpack.c.b16 %v4409, %v4405
    %v4774 = vpack.c.b16 %v4410, %v4406
    %v4775 = vpack.c.b16 %v4411, %v4407
    %v4776 = vpack.c.b16 %v4416, %v4412
    %v4777 = vpack.c.b16 %v4417, %v4413
    %v4778 = vpack.c.b16 %v4418, %v4414
    %v4779 = vpack.c.b16 %v4419, %v4415
    %v4780 = vpack.c.b16 %v4424, %v4420
    %v4781 = vpack.c.b16 %v4425, %v4421
    %v4782 = vpack.c.b16 %v4426, %v4422
    %v4783 = vpack.c.b16 %v4427, %v4423
    %v4784 = vpack.c.b16 %v4432, %v4428
    %v4785 = vpack.c.b16 %v4433, %v4429
    %v4786 = vpack.c.b16 %v4434, %v4430
    %v4787 = vpack.c.b16 %v4435, %v4431
    %v4788 = vpack.c.b16 %v4440, %v4436
    %v4789 = vpack.c.b16 %v4441, %v4437
    %v4790 = vpack.c.b16 %v4442, %v4438
    %v4791 = vpack.c.b16 %v4443, %v4439
    %v4792 = vpack.c.b16 %v4448, %v4444
    %v4793 = vpack.c.b16 %v4449, %v4445
    %v4794 = vpack.c.b16 %v4450, %v4446
    %v4795 = vpack.c.b16 %v4451, %v4447
    %v4796 = vpack.c.b16 %v4456, %v4452
    %v4797 = vpack.c.b16 %v4457, %v4453
    %v4798 = vpack.c.b16 %v4458, %v4454
    %v4799 = vpack.c.b16 %v4459, %v4455
    %v4800 = vpack.c.b16 %v4464, %v4460
    %v4801 = vpack.c.b16 %v4465, %v4461
    %v4802 = vpack.c.b16 %v4466, %v4462
    %v4803 = vpack.c.b16 %v4467, %v4463
    %v4804 = vpack.c.b16 %v4472, %v4468
    %v4805 = vpack.c.b16 %v4473, %v4469
    %v4806 = vpack.c.b16 %v4474, %v4470
    %v4807 = vpack.c.b16 %v4475, %v4471
    %v4808 = vpack.c.b16 %v4480, %v4476
    %v4809 = vpack.c.b16 %v4481, %v4477
    %v4810 = vpack.c.b16 %v4482, %v4478
    %v4811 = vpack.c.b16 %v4483, %v4479
    %v4812 = vpack.c.b16 %v4488, %v4484
    %v4813 = vpack.c.b16 %v4489, %v4485
    %v4814 = vpack.c.b16 %v4490, %v4486
    %v4815 = vpack.c.b16 %v4491, %v4487
    %v4816 = vpack.c.b16 %v4496, %v4492
    %v4817 = vpack.c.b16 %v4497, %v4493
    %v4818 = vpack.c.b16 %v4498, %v4494
    %v4819 = vpack.c.b16 %v4499, %v4495
    %v4820 = vpack.c.b16 %v4504, %v4500
    %v4821 = vpack.c.b16 %v4505, %v4501
    %v4822 = vpack.c.b16 %v4506, %v4502
    %v4823 = vpack.c.b16 %v4507, %v4503
    %v4824 = vpack.c.b16 %v4512, %v4508
    %v4825 = vpack.c.b16 %v4513, %v4509
    %v4826 = vpack.c.b16 %v4514, %v4510
    %v4827 = vpack.c.b16 %v4515, %v4511
    %v4828 = vpack.c.b16 %v4520, %v4516
    %v4829 = vpack.c.b16 %v4521, %v4517
    %v4830 = vpack.c.b16 %v4522, %v4518
    %v4831 = vpack.c.b16 %v4523, %v4519
    %v4832 = vpack.c.b16 %v4528, %v4524
    %v4833 = vpack.c.b16 %v4529, %v4525
    %v4834 = vpack.c.b16 %v4530, %v4526
    %v4835 = vpack.c.b16 %v4531, %v4527
    %v4836 = vpack.c.b16 %v4536, %v4532
    %v4837 = vpack.c.b16 %v4537, %v4533
    %v4838 = vpack.c.b16 %v4538, %v4534
    %v4839 = vpack.c.b16 %v4539, %v4535
    %v4840 = vpack.c.b16 %v4544, %v4540
    %v4841 = vpack.c.b16 %v4545, %v4541
    %v4842 = vpack.c.b16 %v4546, %v4542
    %v4843 = vpack.c.b16 %v4547, %v4543
    %v4844 = vpack.c.b16 %v4552, %v4548
    %v4845 = vpack.c.b16 %v4553, %v4549
    %v4846 = vpack.c.b16 %v4554, %v4550
    %v4847 = vpack.c.b16 %v4555, %v4551
    %v4848 = vpack.c.b16 %v4560, %v4556
    %v4849 = vpack.c.b16 %v4561, %v4557
    %v4850 = vpack.c.b16 %v4562, %v4558
    %v4851 = vpack.c.b16 %v4563, %v4559
    %v4852 = vpack.c.b16 %v4568, %v4564
    %v4853 = vpack.c.b16 %v4569, %v4565
    %v4854 = vpack.c.b16 %v4570, %v4566
    %v4855 = vpack.c.b16 %v4571, %v4567
    %v4856 = vpack.c.b16 %v4576, %v4572
    %v4857 = vpack.c.b16 %v4577, %v4573
    %v4858 = vpack.c.b16 %v4578, %v4574
    %v4859 = vpack.c.b16 %v4579, %v4575
    %v4860 = vpack.c.b16 %v4584, %v4580
    %v4861 = vpack.c.b16 %v4585, %v4581
    %v4862 = vpack.c.b16 %v4586, %v4582
    %v4863 = vpack.c.b16 %v4587, %v4583
    %v4864 = vpack.c.b16 %v4592, %v4588
    %v4865 = vpack.c.b16 %v4593, %v4589
    %v4866 = vpack.c.b16 %v4594, %v4590
    %v4867 = vpack.c.b16 %v4595, %v4591
    %v4868 = vpack.c.b16 %v4600, %v4596
    %v4869 = vpack.c.b16 %v4601, %v4597
    %v4870 = vpack.c.b16 %v4602, %v4598
    %v4871 = vpack.c.b16 %v4603, %v4599
    %v4872 = vpack.c.b16 %v4608, %v4604
    %v4873 = vpack.c.b16 %v4609, %v4605
    %v4874 = vpack.c.b16 %v4610, %v4606
    %v4875 = vpack.c.b16 %v4611, %v4607
    %v4876 = vpack.c.b16 %v4616, %v4612
    %v4877 = vpack.c.b16 %v4617, %v4613
    %v4878 = vpack.c.b16 %v4618, %v4614
    %v4879 = vpack.c.b16 %v4619, %v4615
    %v4880 = vpack.c.b16 %v4624, %v4620
    %v4881 = vpack.c.b16 %v4625, %v4621
    %v4882 = vpack.c.b16 %v4626, %v4622
    %v4883 = vpack.c.b16 %v4627, %v4623
    %5140 = vmatpush.bf16.msra.mxu0 %v4656
    %5141 = vmatpush.bf16.msra.mxu0 %v4652
    %5142 = vmatpush.bf16.msra.mxu0 %v4648
    %5143 = vmatpush.bf16.msra.mxu0 %v4644
    %5144 = vmatpush.bf16.msra.mxu0 %v4640
    %5145 = vmatpush.bf16.msra.mxu0 %v4636
    %5146 = vmatpush.bf16.msra.mxu0 %v4632
    %5147 = vmatpush.bf16.msra.mxu0 %v4628
    %5148 = vmatmul.bf16.gmra.mxu0 %v3586
    %v5149 = vpop.f32.mrf.mxu0
    %v5150 = vadd.f32 %v3852, %v5149
    %v5151 = vpop.f32.mrf.mxu0
    %5152 = vdwg.mxu0
    %5153 = vmatpush.bf16.msra.mxu0 %v4688
    %5154 = vmatpush.bf16.msra.mxu0 %v4684
    %5155 = vmatpush.bf16.msra.mxu0 %v4680
    %5156 = vmatpush.bf16.msra.mxu0 %v4676
    %5157 = vmatpush.bf16.msra.mxu0 %v4672
    %5158 = vmatpush.bf16.msra.mxu0 %v4668
    %5159 = vmatpush.bf16.msra.mxu0 %v4664
    %5160 = vmatpush.bf16.msra.mxu0 %v4660
    %5161 = vmatmul.bf16.gmra.mxu0 %v3587
    %v5162 = vpop.f32.mrf.mxu0
    %v5163 = vadd.f32 %v5150, %v5162
    %v5164 = vpop.f32.mrf.mxu0
    %5165 = vdwg.mxu0
    %5166 = vmatpush.bf16.msra.mxu0 %v4720
    %5167 = vmatpush.bf16.msra.mxu0 %v4716
    %5168 = vmatpush.bf16.msra.mxu0 %v4712
    %5169 = vmatpush.bf16.msra.mxu0 %v4708
    %5170 = vmatpush.bf16.msra.mxu0 %v4704
    %5171 = vmatpush.bf16.msra.mxu0 %v4700
    %5172 = vmatpush.bf16.msra.mxu0 %v4696
    %5173 = vmatpush.bf16.msra.mxu0 %v4692
    %5174 = vmatmul.bf16.gmra.mxu0 %v3588
    %v5175 = vpop.f32.mrf.mxu0
    %v5176 = vadd.f32 %v5163, %v5175
    %v5177 = vpop.f32.mrf.mxu0
    %5178 = vdwg.mxu0
    %5179 = vmatpush.bf16.msra.mxu0 %v4752
    %5180 = vmatpush.bf16.msra.mxu0 %v4748
    %5181 = vmatpush.bf16.msra.mxu0 %v4744
    %5182 = vmatpush.bf16.msra.mxu0 %v4740
    %5183 = vmatpush.bf16.msra.mxu0 %v4736
    %5184 = vmatpush.bf16.msra.mxu0 %v4732
    %5185 = vmatpush.bf16.msra.mxu0 %v4728
    %5186 = vmatpush.bf16.msra.mxu0 %v4724
    %5187 = vmatmul.bf16.gmra.mxu0 %v3589
    %v5188 = vpop.f32.mrf.mxu0
    %v5189 = vadd.f32 %v5176, %v5188
    %v5190 = vpop.f32.mrf.mxu0
    %5191 = vdwg.mxu0
    %5192 = vmatpush.bf16.msra.mxu0 %v4784
    %5193 = vmatpush.bf16.msra.mxu0 %v4780
    %5194 = vmatpush.bf16.msra.mxu0 %v4776
    %5195 = vmatpush.bf16.msra.mxu0 %v4772
    %5196 = vmatpush.bf16.msra.mxu0 %v4768
    %5197 = vmatpush.bf16.msra.mxu0 %v4764
    %5198 = vmatpush.bf16.msra.mxu0 %v4760
    %5199 = vmatpush.bf16.msra.mxu0 %v4756
    %5200 = vmatmul.bf16.gmra.mxu0 %v3590
    %v5201 = vpop.f32.mrf.mxu0
    %v5202 = vadd.f32 %v5189, %v5201
    %v5203 = vpop.f32.mrf.mxu0
    %5204 = vdwg.mxu0
    %5205 = vmatpush.bf16.msra.mxu0 %v4816
    %5206 = vmatpush.bf16.msra.mxu0 %v4812
    %5207 = vmatpush.bf16.msra.mxu0 %v4808
    %5208 = vmatpush.bf16.msra.mxu0 %v4804
    %5209 = vmatpush.bf16.msra.mxu0 %v4800
    %5210 = vmatpush.bf16.msra.mxu0 %v4796
    %5211 = vmatpush.bf16.msra.mxu0 %v4792
    %5212 = vmatpush.bf16.msra.mxu0 %v4788
    %5213 = vmatmul.bf16.gmra.mxu0 %v3591
    %v5214 = vpop.f32.mrf.mxu0
    %v5215 = vadd.f32 %v5202, %v5214
    %v5216 = vpop.f32.mrf.mxu0
    %5217 = vdwg.mxu0
    %5218 = vmatpush.bf16.msra.mxu0 %v4848
    %5219 = vmatpush.bf16.msra.mxu0 %v4844
    %5220 = vmatpush.bf16.msra.mxu0 %v4840
    %5221 = vmatpush.bf16.msra.mxu0 %v4836
    %5222 = vmatpush.bf16.msra.mxu0 %v4832
    %5223 = vmatpush.bf16.msra.mxu0 %v4828
    %5224 = vmatpush.bf16.msra.mxu0 %v4824
    %5225 = vmatpush.bf16.msra.mxu0 %v4820
    %5226 = vmatmul.bf16.gmra.mxu0 %v3592
    %v5227 = vpop.f32.mrf.mxu0
    %v5228 = vadd.f32 %v5215, %v5227
    %v5229 = vpop.f32.mrf.mxu0
    %5230 = vdwg.mxu0
    %5231 = vmatpush.bf16.msra.mxu0 %v4880
    %5232 = vmatpush.bf16.msra.mxu0 %v4876
    %5233 = vmatpush.bf16.msra.mxu0 %v4872
    %5234 = vmatpush.bf16.msra.mxu0 %v4868
    %5235 = vmatpush.bf16.msra.mxu0 %v4864
    %5236 = vmatpush.bf16.msra.mxu0 %v4860
    %5237 = vmatpush.bf16.msra.mxu0 %v4856
    %5238 = vmatpush.bf16.msra.mxu0 %v4852
    %5239 = vmatmul.bf16.gmra.mxu0 %v3593
    %v5240 = vpop.f32.mrf.mxu0
    %v5241 = vadd.f32 %v5228, %v5240
    %v5242 = vpop.f32.mrf.mxu0
    %5243 = vdwg.mxu0
    %5244 = vmatpush.bf16.msra.mxu0 %v4657
    %5245 = vmatpush.bf16.msra.mxu0 %v4653
    %5246 = vmatpush.bf16.msra.mxu0 %v4649
    %5247 = vmatpush.bf16.msra.mxu0 %v4645
    %5248 = vmatpush.bf16.msra.mxu0 %v4641
    %5249 = vmatpush.bf16.msra.mxu0 %v4637
    %5250 = vmatpush.bf16.msra.mxu0 %v4633
    %5251 = vmatpush.bf16.msra.mxu0 %v4629
    %5252 = vmatmul.bf16.gmra.mxu0 %v3586
    %v5253 = vpop.f32.mrf.mxu0
    %v5254 = vadd.f32 %v3853, %v5253
    %v5255 = vpop.f32.mrf.mxu0
    %5256 = vdwg.mxu0
    %5257 = vmatpush.bf16.msra.mxu0 %v4689
    %5258 = vmatpush.bf16.msra.mxu0 %v4685
    %5259 = vmatpush.bf16.msra.mxu0 %v4681
    %5260 = vmatpush.bf16.msra.mxu0 %v4677
    %5261 = vmatpush.bf16.msra.mxu0 %v4673
    %5262 = vmatpush.bf16.msra.mxu0 %v4669
    %5263 = vmatpush.bf16.msra.mxu0 %v4665
    %5264 = vmatpush.bf16.msra.mxu0 %v4661
    %5265 = vmatmul.bf16.gmra.mxu0 %v3587
    %v5266 = vpop.f32.mrf.mxu0
    %v5267 = vadd.f32 %v5254, %v5266
    %v5268 = vpop.f32.mrf.mxu0
    %5269 = vdwg.mxu0
    %5270 = vmatpush.bf16.msra.mxu0 %v4721
    %5271 = vmatpush.bf16.msra.mxu0 %v4717
    %5272 = vmatpush.bf16.msra.mxu0 %v4713
    %5273 = vmatpush.bf16.msra.mxu0 %v4709
    %5274 = vmatpush.bf16.msra.mxu0 %v4705
    %5275 = vmatpush.bf16.msra.mxu0 %v4701
    %5276 = vmatpush.bf16.msra.mxu0 %v4697
    %5277 = vmatpush.bf16.msra.mxu0 %v4693
    %5278 = vmatmul.bf16.gmra.mxu0 %v3588
    %v5279 = vpop.f32.mrf.mxu0
    %v5280 = vadd.f32 %v5267, %v5279
    %v5281 = vpop.f32.mrf.mxu0
    %5282 = vdwg.mxu0
    %5283 = vmatpush.bf16.msra.mxu0 %v4753
    %5284 = vmatpush.bf16.msra.mxu0 %v4749
    %5285 = vmatpush.bf16.msra.mxu0 %v4745
    %5286 = vmatpush.bf16.msra.mxu0 %v4741
    %5287 = vmatpush.bf16.msra.mxu0 %v4737
    %5288 = vmatpush.bf16.msra.mxu0 %v4733
    %5289 = vmatpush.bf16.msra.mxu0 %v4729
    %5290 = vmatpush.bf16.msra.mxu0 %v4725
    %5291 = vmatmul.bf16.gmra.mxu0 %v3589
    %v5292 = vpop.f32.mrf.mxu0
    %v5293 = vadd.f32 %v5280, %v5292
    %v5294 = vpop.f32.mrf.mxu0
    %5295 = vdwg.mxu0
    %5296 = vmatpush.bf16.msra.mxu0 %v4785
    %5297 = vmatpush.bf16.msra.mxu0 %v4781
    %5298 = vmatpush.bf16.msra.mxu0 %v4777
    %5299 = vmatpush.bf16.msra.mxu0 %v4773
    %5300 = vmatpush.bf16.msra.mxu0 %v4769
    %5301 = vmatpush.bf16.msra.mxu0 %v4765
    %5302 = vmatpush.bf16.msra.mxu0 %v4761
    %5303 = vmatpush.bf16.msra.mxu0 %v4757
    %5304 = vmatmul.bf16.gmra.mxu0 %v3590
    %v5305 = vpop.f32.mrf.mxu0
    %v5306 = vadd.f32 %v5293, %v5305
    %v5307 = vpop.f32.mrf.mxu0
    %5308 = vdwg.mxu0
    %5309 = vmatpush.bf16.msra.mxu0 %v4817
    %5310 = vmatpush.bf16.msra.mxu0 %v4813
    %5311 = vmatpush.bf16.msra.mxu0 %v4809
    %5312 = vmatpush.bf16.msra.mxu0 %v4805
    %5313 = vmatpush.bf16.msra.mxu0 %v4801
    %5314 = vmatpush.bf16.msra.mxu0 %v4797
    %5315 = vmatpush.bf16.msra.mxu0 %v4793
    %5316 = vmatpush.bf16.msra.mxu0 %v4789
    %5317 = vmatmul.bf16.gmra.mxu0 %v3591
    %v5318 = vpop.f32.mrf.mxu0
    %v5319 = vadd.f32 %v5306, %v5318
    %v5320 = vpop.f32.mrf.mxu0
    %5321 = vdwg.mxu0
    %5322 = vmatpush.bf16.msra.mxu0 %v4849
    %5323 = vmatpush.bf16.msra.mxu0 %v4845
    %5324 = vmatpush.bf16.msra.mxu0 %v4841
    %5325 = vmatpush.bf16.msra.mxu0 %v4837
    %5326 = vmatpush.bf16.msra.mxu0 %v4833
    %5327 = vmatpush.bf16.msra.mxu0 %v4829
    %5328 = vmatpush.bf16.msra.mxu0 %v4825
    %5329 = vmatpush.bf16.msra.mxu0 %v4821
    %5330 = vmatmul.bf16.gmra.mxu0 %v3592
    %v5331 = vpop.f32.mrf.mxu0
    %v5332 = vadd.f32 %v5319, %v5331
    %v5333 = vpop.f32.mrf.mxu0
    %5334 = vdwg.mxu0
    %5335 = vmatpush.bf16.msra.mxu0 %v4881
    %5336 = vmatpush.bf16.msra.mxu0 %v4877
    %5337 = vmatpush.bf16.msra.mxu0 %v4873
    %5338 = vmatpush.bf16.msra.mxu0 %v4869
    %5339 = vmatpush.bf16.msra.mxu0 %v4865
    %5340 = vmatpush.bf16.msra.mxu0 %v4861
    %5341 = vmatpush.bf16.msra.mxu0 %v4857
    %5342 = vmatpush.bf16.msra.mxu0 %v4853
    %5343 = vmatmul.bf16.gmra.mxu0 %v3593
    %v5344 = vpop.f32.mrf.mxu0
    %v5345 = vadd.f32 %v5332, %v5344
    %v5346 = vpop.f32.mrf.mxu0
    %5347 = vdwg.mxu0
    %5348 = vmatpush.bf16.msra.mxu0 %v4658
    %5349 = vmatpush.bf16.msra.mxu0 %v4654
    %5350 = vmatpush.bf16.msra.mxu0 %v4650
    %5351 = vmatpush.bf16.msra.mxu0 %v4646
    %5352 = vmatpush.bf16.msra.mxu0 %v4642
    %5353 = vmatpush.bf16.msra.mxu0 %v4638
    %5354 = vmatpush.bf16.msra.mxu0 %v4634
    %5355 = vmatpush.bf16.msra.mxu0 %v4630
    %5356 = vmatmul.bf16.gmra.mxu0 %v3586
    %v5357 = vpop.f32.mrf.mxu0
    %v5358 = vadd.f32 %v3854, %v5357
    %v5359 = vpop.f32.mrf.mxu0
    %5360 = vdwg.mxu0
    %5361 = vmatpush.bf16.msra.mxu0 %v4690
    %5362 = vmatpush.bf16.msra.mxu0 %v4686
    %5363 = vmatpush.bf16.msra.mxu0 %v4682
    %5364 = vmatpush.bf16.msra.mxu0 %v4678
    %5365 = vmatpush.bf16.msra.mxu0 %v4674
    %5366 = vmatpush.bf16.msra.mxu0 %v4670
    %5367 = vmatpush.bf16.msra.mxu0 %v4666
    %5368 = vmatpush.bf16.msra.mxu0 %v4662
    %5369 = vmatmul.bf16.gmra.mxu0 %v3587
    %v5370 = vpop.f32.mrf.mxu0
    %v5371 = vadd.f32 %v5358, %v5370
    %v5372 = vpop.f32.mrf.mxu0
    %5373 = vdwg.mxu0
    %5374 = vmatpush.bf16.msra.mxu0 %v4722
    %5375 = vmatpush.bf16.msra.mxu0 %v4718
    %5376 = vmatpush.bf16.msra.mxu0 %v4714
    %5377 = vmatpush.bf16.msra.mxu0 %v4710
    %5378 = vmatpush.bf16.msra.mxu0 %v4706
    %5379 = vmatpush.bf16.msra.mxu0 %v4702
    %5380 = vmatpush.bf16.msra.mxu0 %v4698
    %5381 = vmatpush.bf16.msra.mxu0 %v4694
    %5382 = vmatmul.bf16.gmra.mxu0 %v3588
    %v5383 = vpop.f32.mrf.mxu0
    %v5384 = vadd.f32 %v5371, %v5383
    %v5385 = vpop.f32.mrf.mxu0
    %5386 = vdwg.mxu0
    %5387 = vmatpush.bf16.msra.mxu0 %v4754
    %5388 = vmatpush.bf16.msra.mxu0 %v4750
    %5389 = vmatpush.bf16.msra.mxu0 %v4746
    %5390 = vmatpush.bf16.msra.mxu0 %v4742
    %5391 = vmatpush.bf16.msra.mxu0 %v4738
    %5392 = vmatpush.bf16.msra.mxu0 %v4734
    %5393 = vmatpush.bf16.msra.mxu0 %v4730
    %5394 = vmatpush.bf16.msra.mxu0 %v4726
    %5395 = vmatmul.bf16.gmra.mxu0 %v3589
    %v5396 = vpop.f32.mrf.mxu0
    %v5397 = vadd.f32 %v5384, %v5396
    %v5398 = vpop.f32.mrf.mxu0
    %5399 = vdwg.mxu0
    %5400 = vmatpush.bf16.msra.mxu0 %v4786
    %5401 = vmatpush.bf16.msra.mxu0 %v4782
    %5402 = vmatpush.bf16.msra.mxu0 %v4778
    %5403 = vmatpush.bf16.msra.mxu0 %v4774
    %5404 = vmatpush.bf16.msra.mxu0 %v4770
    %5405 = vmatpush.bf16.msra.mxu0 %v4766
    %5406 = vmatpush.bf16.msra.mxu0 %v4762
    %5407 = vmatpush.bf16.msra.mxu0 %v4758
    %5408 = vmatmul.bf16.gmra.mxu0 %v3590
    %v5409 = vpop.f32.mrf.mxu0
    %v5410 = vadd.f32 %v5397, %v5409
    %v5411 = vpop.f32.mrf.mxu0
    %5412 = vdwg.mxu0
    %5413 = vmatpush.bf16.msra.mxu0 %v4818
    %5414 = vmatpush.bf16.msra.mxu0 %v4814
    %5415 = vmatpush.bf16.msra.mxu0 %v4810
    %5416 = vmatpush.bf16.msra.mxu0 %v4806
    %5417 = vmatpush.bf16.msra.mxu0 %v4802
    %5418 = vmatpush.bf16.msra.mxu0 %v4798
    %5419 = vmatpush.bf16.msra.mxu0 %v4794
    %5420 = vmatpush.bf16.msra.mxu0 %v4790
    %5421 = vmatmul.bf16.gmra.mxu0 %v3591
    %v5422 = vpop.f32.mrf.mxu0
    %v5423 = vadd.f32 %v5410, %v5422
    %v5424 = vpop.f32.mrf.mxu0
    %5425 = vdwg.mxu0
    %5426 = vmatpush.bf16.msra.mxu0 %v4850
    %5427 = vmatpush.bf16.msra.mxu0 %v4846
    %5428 = vmatpush.bf16.msra.mxu0 %v4842
    %5429 = vmatpush.bf16.msra.mxu0 %v4838
    %5430 = vmatpush.bf16.msra.mxu0 %v4834
    %5431 = vmatpush.bf16.msra.mxu0 %v4830
    %5432 = vmatpush.bf16.msra.mxu0 %v4826
    %5433 = vmatpush.bf16.msra.mxu0 %v4822
    %5434 = vmatmul.bf16.gmra.mxu0 %v3592
    %v5435 = vpop.f32.mrf.mxu0
    %v5436 = vadd.f32 %v5423, %v5435
    %v5437 = vpop.f32.mrf.mxu0
    %5438 = vdwg.mxu0
    %5439 = vmatpush.bf16.msra.mxu0 %v4882
    %5440 = vmatpush.bf16.msra.mxu0 %v4878
    %5441 = vmatpush.bf16.msra.mxu0 %v4874
    %5442 = vmatpush.bf16.msra.mxu0 %v4870
    %5443 = vmatpush.bf16.msra.mxu0 %v4866
    %5444 = vmatpush.bf16.msra.mxu0 %v4862
    %5445 = vmatpush.bf16.msra.mxu0 %v4858
    %5446 = vmatpush.bf16.msra.mxu0 %v4854
    %5447 = vmatmul.bf16.gmra.mxu0 %v3593
    %v5448 = vpop.f32.mrf.mxu0
    %v5449 = vadd.f32 %v5436, %v5448
    %v5450 = vpop.f32.mrf.mxu0
    %5451 = vdwg.mxu0
    %5452 = vmatpush.bf16.msra.mxu0 %v4659
    %5453 = vmatpush.bf16.msra.mxu0 %v4655
    %5454 = vmatpush.bf16.msra.mxu0 %v4651
    %5455 = vmatpush.bf16.msra.mxu0 %v4647
    %5456 = vmatpush.bf16.msra.mxu0 %v4643
    %5457 = vmatpush.bf16.msra.mxu0 %v4639
    %5458 = vmatpush.bf16.msra.mxu0 %v4635
    %5459 = vmatpush.bf16.msra.mxu0 %v4631
    %5460 = vmatmul.bf16.gmra.mxu0 %v3586
    %v5461 = vpop.f32.mrf.mxu0
    %v5462 = vadd.f32 %v3855, %v5461
    %v5463 = vpop.f32.mrf.mxu0
    %5464 = vdwg.mxu0
    %5465 = vmatpush.bf16.msra.mxu0 %v4691
    %5466 = vmatpush.bf16.msra.mxu0 %v4687
    %5467 = vmatpush.bf16.msra.mxu0 %v4683
    %5468 = vmatpush.bf16.msra.mxu0 %v4679
    %5469 = vmatpush.bf16.msra.mxu0 %v4675
    %5470 = vmatpush.bf16.msra.mxu0 %v4671
    %5471 = vmatpush.bf16.msra.mxu0 %v4667
    %5472 = vmatpush.bf16.msra.mxu0 %v4663
    %5473 = vmatmul.bf16.gmra.mxu0 %v3587
    %v5474 = vpop.f32.mrf.mxu0
    %v5475 = vadd.f32 %v5462, %v5474
    %v5476 = vpop.f32.mrf.mxu0
    %5477 = vdwg.mxu0
    %5478 = vmatpush.bf16.msra.mxu0 %v4723
    %5479 = vmatpush.bf16.msra.mxu0 %v4719
    %5480 = vmatpush.bf16.msra.mxu0 %v4715
    %5481 = vmatpush.bf16.msra.mxu0 %v4711
    %5482 = vmatpush.bf16.msra.mxu0 %v4707
    %5483 = vmatpush.bf16.msra.mxu0 %v4703
    %5484 = vmatpush.bf16.msra.mxu0 %v4699
    %5485 = vmatpush.bf16.msra.mxu0 %v4695
    %5486 = vmatmul.bf16.gmra.mxu0 %v3588
    %v5487 = vpop.f32.mrf.mxu0
    %v5488 = vadd.f32 %v5475, %v5487
    %v5489 = vpop.f32.mrf.mxu0
    %5490 = vdwg.mxu0
    %5491 = vmatpush.bf16.msra.mxu0 %v4755
    %5492 = vmatpush.bf16.msra.mxu0 %v4751
    %5493 = vmatpush.bf16.msra.mxu0 %v4747
    %5494 = vmatpush.bf16.msra.mxu0 %v4743
    %5495 = vmatpush.bf16.msra.mxu0 %v4739
    %5496 = vmatpush.bf16.msra.mxu0 %v4735
    %5497 = vmatpush.bf16.msra.mxu0 %v4731
    %5498 = vmatpush.bf16.msra.mxu0 %v4727
    %5499 = vmatmul.bf16.gmra.mxu0 %v3589
    %v5500 = vpop.f32.mrf.mxu0
    %v5501 = vadd.f32 %v5488, %v5500
    %v5502 = vpop.f32.mrf.mxu0
    %5503 = vdwg.mxu0
    %5504 = vmatpush.bf16.msra.mxu0 %v4787
    %5505 = vmatpush.bf16.msra.mxu0 %v4783
    %5506 = vmatpush.bf16.msra.mxu0 %v4779
    %5507 = vmatpush.bf16.msra.mxu0 %v4775
    %5508 = vmatpush.bf16.msra.mxu0 %v4771
    %5509 = vmatpush.bf16.msra.mxu0 %v4767
    %5510 = vmatpush.bf16.msra.mxu0 %v4763
    %5511 = vmatpush.bf16.msra.mxu0 %v4759
    %5512 = vmatmul.bf16.gmra.mxu0 %v3590
    %v5513 = vpop.f32.mrf.mxu0
    %v5514 = vadd.f32 %v5501, %v5513
    %v5515 = vpop.f32.mrf.mxu0
    %5516 = vdwg.mxu0
    %5517 = vmatpush.bf16.msra.mxu0 %v4819
    %5518 = vmatpush.bf16.msra.mxu0 %v4815
    %5519 = vmatpush.bf16.msra.mxu0 %v4811
    %5520 = vmatpush.bf16.msra.mxu0 %v4807
    %5521 = vmatpush.bf16.msra.mxu0 %v4803
    %5522 = vmatpush.bf16.msra.mxu0 %v4799
    %5523 = vmatpush.bf16.msra.mxu0 %v4795
    %5524 = vmatpush.bf16.msra.mxu0 %v4791
    %5525 = vmatmul.bf16.gmra.mxu0 %v3591
    %v5526 = vpop.f32.mrf.mxu0
    %v5527 = vadd.f32 %v5514, %v5526
    %v5528 = vpop.f32.mrf.mxu0
    %5529 = vdwg.mxu0
    %5530 = vmatpush.bf16.msra.mxu0 %v4851
    %5531 = vmatpush.bf16.msra.mxu0 %v4847
    %5532 = vmatpush.bf16.msra.mxu0 %v4843
    %5533 = vmatpush.bf16.msra.mxu0 %v4839
    %5534 = vmatpush.bf16.msra.mxu0 %v4835
    %5535 = vmatpush.bf16.msra.mxu0 %v4831
    %5536 = vmatpush.bf16.msra.mxu0 %v4827
    %5537 = vmatpush.bf16.msra.mxu0 %v4823
    %5538 = vmatmul.bf16.gmra.mxu0 %v3592
    %v5539 = vpop.f32.mrf.mxu0
    %v5540 = vadd.f32 %v5527, %v5539
    %v5541 = vpop.f32.mrf.mxu0
    %5542 = vdwg.mxu0
    %5543 = vmatpush.bf16.msra.mxu0 %v4883
    %5544 = vmatpush.bf16.msra.mxu0 %v4879
    %5545 = vmatpush.bf16.msra.mxu0 %v4875
    %5546 = vmatpush.bf16.msra.mxu0 %v4871
    %5547 = vmatpush.bf16.msra.mxu0 %v4867
    %5548 = vmatpush.bf16.msra.mxu0 %v4863
    %5549 = vmatpush.bf16.msra.mxu0 %v4859
    %5550 = vmatpush.bf16.msra.mxu0 %v4855
    %5551 = vmatmul.bf16.gmra.mxu0 %v3593
    %v5552 = vpop.f32.mrf.mxu0
    %v5553 = vadd.f32 %v5540, %v5552
    %v5554 = vpop.f32.mrf.mxu0
    %5555 = vdwg.mxu0
    %v5556 = vmax.f32 %v5241, 0.0
    %v5557 = vmax.f32 %v5345, 0.0
    %v5558 = vmax.f32 %v5449, 0.0
    %v5559 = vmax.f32 %v5553, 0.0
    %v5560 = vpack.c.bf16 %v5556, %v5556
    %v5561 = vpack.c.bf16 %v5557, %v5557
    %v5562 = vpack.c.bf16 %v5558, %v5558
    %v5563 = vpack.c.bf16 %v5559, %v5559
    %v5564 = vld [vmem:[#allocation10] sm:$0xf]
    %v5565 = vld [vmem:[#allocation10 + $0x4] sm:$0xf]
    %v5566 = vld [vmem:[#allocation10 + $0x8] sm:$0xf]
    %v5567 = vld [vmem:[#allocation10 + $0xc] sm:$0xf]
    %v5568 = vld [vmem:[#allocation10 + $0x10] sm:$0xf]
    %v5569 = vld [vmem:[#allocation10 + $0x14] sm:$0xf]
    %v5570 = vld [vmem:[#allocation10 + $0x18] sm:$0xf]
    %v5571 = vld [vmem:[#allocation10 + $0x1c] sm:$0xf]
    %v5572 = vld [vmem:[#allocation10 + $0x20] sm:$0xf]
    %v5573 = vld [vmem:[#allocation10 + $0x24] sm:$0xf]
    %v5574 = vld [vmem:[#allocation10 + $0x28] sm:$0xf]
    %v5575 = vld [vmem:[#allocation10 + $0x2c] sm:$0xf]
    %v5576 = vld [vmem:[#allocation10 + $0x30] sm:$0xf]
    %v5577 = vld [vmem:[#allocation10 + $0x34] sm:$0xf]
    %v5578 = vld [vmem:[#allocation10 + $0x38] sm:$0xf]
    %v5579 = vld [vmem:[#allocation10 + $0x3c] sm:$0xf]
    %v5580 = vld [vmem:[#allocation10 + $0x40] sm:$0xf]
    %v5581 = vld [vmem:[#allocation10 + $0x44] sm:$0xf]
    %v5582 = vld [vmem:[#allocation10 + $0x48] sm:$0xf]
    %v5583 = vld [vmem:[#allocation10 + $0x4c] sm:$0xf]
    %v5584 = vld [vmem:[#allocation10 + $0x50] sm:$0xf]
    %v5585 = vld [vmem:[#allocation10 + $0x54] sm:$0xf]
    %v5586 = vld [vmem:[#allocation10 + $0x58] sm:$0xf]
    %v5587 = vld [vmem:[#allocation10 + $0x5c] sm:$0xf]
    %v5588 = vld [vmem:[#allocation10 + $0x60] sm:$0xf]
    %v5589 = vld [vmem:[#allocation10 + $0x64] sm:$0xf]
    %v5590 = vld [vmem:[#allocation10 + $0x68] sm:$0xf]
    %v5591 = vld [vmem:[#allocation10 + $0x6c] sm:$0xf]
    %v5592 = vld [vmem:[#allocation10 + $0x70] sm:$0xf]
    %v5593 = vld [vmem:[#allocation10 + $0x74] sm:$0xf]
    %v5594 = vld [vmem:[#allocation10 + $0x78] sm:$0xf]
    %v5595 = vld [vmem:[#allocation10 + $0x7c] sm:$0xf]
    %v5596 = vld [vmem:[#allocation10 + $0x80] sm:$0xf]
    %v5597 = vld [vmem:[#allocation10 + $0x84] sm:$0xf]
    %v5598 = vld [vmem:[#allocation10 + $0x88] sm:$0xf]
    %v5599 = vld [vmem:[#allocation10 + $0x8c] sm:$0xf]
    %v5600 = vld [vmem:[#allocation10 + $0x90] sm:$0xf]
    %v5601 = vld [vmem:[#allocation10 + $0x94] sm:$0xf]
    %v5602 = vld [vmem:[#allocation10 + $0x98] sm:$0xf]
    %v5603 = vld [vmem:[#allocation10 + $0x9c] sm:$0xf]
    %v5604 = vld [vmem:[#allocation10 + $0xa0] sm:$0xf]
    %v5605 = vld [vmem:[#allocation10 + $0xa4] sm:$0xf]
    %v5606 = vld [vmem:[#allocation10 + $0xa8] sm:$0xf]
    %v5607 = vld [vmem:[#allocation10 + $0xac] sm:$0xf]
    %v5608 = vld [vmem:[#allocation10 + $0xb0] sm:$0xf]
    %v5609 = vld [vmem:[#allocation10 + $0xb4] sm:$0xf]
    %v5610 = vld [vmem:[#allocation10 + $0xb8] sm:$0xf]
    %v5611 = vld [vmem:[#allocation10 + $0xbc] sm:$0xf]
    %v5612 = vld [vmem:[#allocation10 + $0xc0] sm:$0xf]
    %v5613 = vld [vmem:[#allocation10 + $0xc4] sm:$0xf]
    %v5614 = vld [vmem:[#allocation10 + $0xc8] sm:$0xf]
    %v5615 = vld [vmem:[#allocation10 + $0xcc] sm:$0xf]
    %v5616 = vld [vmem:[#allocation10 + $0xd0] sm:$0xf]
    %v5617 = vld [vmem:[#allocation10 + $0xd4] sm:$0xf]
    %v5618 = vld [vmem:[#allocation10 + $0xd8] sm:$0xf]
    %v5619 = vld [vmem:[#allocation10 + $0xdc] sm:$0xf]
    %v5620 = vld [vmem:[#allocation10 + $0xe0] sm:$0xf]
    %v5621 = vld [vmem:[#allocation10 + $0xe4] sm:$0xf]
    %v5622 = vld [vmem:[#allocation10 + $0xe8] sm:$0xf]
    %v5623 = vld [vmem:[#allocation10 + $0xec] sm:$0xf]
    %v5624 = vld [vmem:[#allocation10 + $0xf0] sm:$0xf]
    %v5625 = vld [vmem:[#allocation10 + $0xf4] sm:$0xf]
    %v5626 = vld [vmem:[#allocation10 + $0xf8] sm:$0xf]
    %v5627 = vld [vmem:[#allocation10 + $0xfc] sm:$0xf]
    %v5628 = vld [vmem:[#allocation11] sm:$0x1]
    %v5630 = vperm.slane %v5628, 0
    %v5696 = vunpack.c.l.b16 %v5564
    %v5697 = vunpack.c.l.b16 %v5565
    %v5698 = vunpack.c.l.b16 %v5566
    %v5699 = vunpack.c.l.b16 %v5567
    %v5700 = vunpack.c.l.b16 %v5568
    %v5701 = vunpack.c.l.b16 %v5569
    %v5702 = vunpack.c.l.b16 %v5570
    %v5703 = vunpack.c.l.b16 %v5571
    %v5704 = vunpack.c.l.b16 %v5572
    %v5705 = vunpack.c.l.b16 %v5573
    %v5706 = vunpack.c.l.b16 %v5574
    %v5707 = vunpack.c.l.b16 %v5575
    %v5708 = vunpack.c.l.b16 %v5576
    %v5709 = vunpack.c.l.b16 %v5577
    %v5710 = vunpack.c.l.b16 %v5578
    %v5711 = vunpack.c.l.b16 %v5579
    %v5712 = vunpack.c.l.b16 %v5580
    %v5713 = vunpack.c.l.b16 %v5581
    %v5714 = vunpack.c.l.b16 %v5582
    %v5715 = vunpack.c.l.b16 %v5583
    %v5716 = vunpack.c.l.b16 %v5584
    %v5717 = vunpack.c.l.b16 %v5585
    %v5718 = vunpack.c.l.b16 %v5586
    %v5719 = vunpack.c.l.b16 %v5587
    %v5720 = vunpack.c.l.b16 %v5588
    %v5721 = vunpack.c.l.b16 %v5589
    %v5722 = vunpack.c.l.b16 %v5590
    %v5723 = vunpack.c.l.b16 %v5591
    %v5724 = vunpack.c.l.b16 %v5592
    %v5725 = vunpack.c.l.b16 %v5593
    %v5726 = vunpack.c.l.b16 %v5594
    %v5727 = vunpack.c.l.b16 %v5595
    %v5728 = vunpack.c.l.b16 %v5596
    %v5729 = vunpack.c.l.b16 %v5597
    %v5730 = vunpack.c.l.b16 %v5598
    %v5731 = vunpack.c.l.b16 %v5599
    %v5732 = vunpack.c.l.b16 %v5600
    %v5733 = vunpack.c.l.b16 %v5601
    %v5734 = vunpack.c.l.b16 %v5602
    %v5735 = vunpack.c.l.b16 %v5603
    %v5736 = vunpack.c.l.b16 %v5604
    %v5737 = vunpack.c.l.b16 %v5605
    %v5738 = vunpack.c.l.b16 %v5606
    %v5739 = vunpack.c.l.b16 %v5607
    %v5740 = vunpack.c.l.b16 %v5608
    %v5741 = vunpack.c.l.b16 %v5609
    %v5742 = vunpack.c.l.b16 %v5610
    %v5743 = vunpack.c.l.b16 %v5611
    %v5744 = vunpack.c.l.b16 %v5612
    %v5745 = vunpack.c.l.b16 %v5613
    %v5746 = vunpack.c.l.b16 %v5614
    %v5747 = vunpack.c.l.b16 %v5615
    %v5748 = vunpack.c.l.b16 %v5616
    %v5749 = vunpack.c.l.b16 %v5617
    %v5750 = vunpack.c.l.b16 %v5618
    %v5751 = vunpack.c.l.b16 %v5619
    %v5752 = vunpack.c.l.b16 %v5620
    %v5753 = vunpack.c.l.b16 %v5621
    %v5754 = vunpack.c.l.b16 %v5622
    %v5755 = vunpack.c.l.b16 %v5623
    %v5756 = vunpack.c.l.b16 %v5624
    %v5757 = vunpack.c.l.b16 %v5625
    %v5758 = vunpack.c.l.b16 %v5626
    %v5759 = vunpack.c.l.b16 %v5627
    %v5760 = vpack.c.b16 %v5697, %v5696
    %v5761 = vpack.c.b16 %v5699, %v5698
    %v5762 = vpack.c.b16 %v5701, %v5700
    %v5763 = vpack.c.b16 %v5703, %v5702
    %v5764 = vpack.c.b16 %v5705, %v5704
    %v5765 = vpack.c.b16 %v5707, %v5706
    %v5766 = vpack.c.b16 %v5709, %v5708
    %v5767 = vpack.c.b16 %v5711, %v5710
    %v5768 = vpack.c.b16 %v5713, %v5712
    %v5769 = vpack.c.b16 %v5715, %v5714
    %v5770 = vpack.c.b16 %v5717, %v5716
    %v5771 = vpack.c.b16 %v5719, %v5718
    %v5772 = vpack.c.b16 %v5721, %v5720
    %v5773 = vpack.c.b16 %v5723, %v5722
    %v5774 = vpack.c.b16 %v5725, %v5724
    %v5775 = vpack.c.b16 %v5727, %v5726
    %v5776 = vpack.c.b16 %v5729, %v5728
    %v5777 = vpack.c.b16 %v5731, %v5730
    %v5778 = vpack.c.b16 %v5733, %v5732
    %v5779 = vpack.c.b16 %v5735, %v5734
    %v5780 = vpack.c.b16 %v5737, %v5736
    %v5781 = vpack.c.b16 %v5739, %v5738
    %v5782 = vpack.c.b16 %v5741, %v5740
    %v5783 = vpack.c.b16 %v5743, %v5742
    %v5784 = vpack.c.b16 %v5745, %v5744
    %v5785 = vpack.c.b16 %v5747, %v5746
    %v5786 = vpack.c.b16 %v5749, %v5748
    %v5787 = vpack.c.b16 %v5751, %v5750
    %v5788 = vpack.c.b16 %v5753, %v5752
    %v5789 = vpack.c.b16 %v5755, %v5754
    %v5790 = vpack.c.b16 %v5757, %v5756
    %v5791 = vpack.c.b16 %v5759, %v5758
    %5824 = vmatpush.bf16.msra.mxu0 %v5767
    %5825 = vmatpush.bf16.msra.mxu0 %v5766
    %5826 = vmatpush.bf16.msra.mxu0 %v5765
    %5827 = vmatpush.bf16.msra.mxu0 %v5764
    %5828 = vmatpush.bf16.msra.mxu0 %v5763
    %5829 = vmatpush.bf16.msra.mxu0 %v5762
    %5830 = vmatpush.bf16.msra.mxu0 %v5761
    %5831 = vmatpush.bf16.msra.mxu0 %v5760
    %5832 = vmatmul.bf16.gmra.mxu0 %v5560
    %v5833 = vpop.f32.mrf.mxu0
    %v5834 = vadd.f32 %v5630, %v5833
    %v5835 = vpop.f32.mrf.mxu0
    %5836 = vdwg.mxu0
    %5837 = vmatpush.bf16.msra.mxu0 %v5775
    %5838 = vmatpush.bf16.msra.mxu0 %v5774
    %5839 = vmatpush.bf16.msra.mxu0 %v5773
    %5840 = vmatpush.bf16.msra.mxu0 %v5772
    %5841 = vmatpush.bf16.msra.mxu0 %v5771
    %5842 = vmatpush.bf16.msra.mxu0 %v5770
    %5843 = vmatpush.bf16.msra.mxu0 %v5769
    %5844 = vmatpush.bf16.msra.mxu0 %v5768
    %5845 = vmatmul.bf16.gmra.mxu0 %v5561
    %v5846 = vpop.f32.mrf.mxu0
    %v5847 = vadd.f32 %v5834, %v5846
    %v5848 = vpop.f32.mrf.mxu0
    %5849 = vdwg.mxu0
    %5850 = vmatpush.bf16.msra.mxu0 %v5783
    %5851 = vmatpush.bf16.msra.mxu0 %v5782
    %5852 = vmatpush.bf16.msra.mxu0 %v5781
    %5853 = vmatpush.bf16.msra.mxu0 %v5780
    %5854 = vmatpush.bf16.msra.mxu0 %v5779
    %5855 = vmatpush.bf16.msra.mxu0 %v5778
    %5856 = vmatpush.bf16.msra.mxu0 %v5777
    %5857 = vmatpush.bf16.msra.mxu0 %v5776
    %5858 = vmatmul.bf16.gmra.mxu0 %v5562
    %v5859 = vpop.f32.mrf.mxu0
    %v5860 = vadd.f32 %v5847, %v5859
    %v5861 = vpop.f32.mrf.mxu0
    %5862 = vdwg.mxu0
    %5863 = vmatpush.bf16.msra.mxu0 %v5791
    %5864 = vmatpush.bf16.msra.mxu0 %v5790
    %5865 = vmatpush.bf16.msra.mxu0 %v5789
    %5866 = vmatpush.bf16.msra.mxu0 %v5788
    %5867 = vmatpush.bf16.msra.mxu0 %v5787
    %5868 = vmatpush.bf16.msra.mxu0 %v5786
    %5869 = vmatpush.bf16.msra.mxu0 %v5785
    %5870 = vmatpush.bf16.msra.mxu0 %v5784
    %5871 = vmatmul.bf16.gmra.mxu0 %v5563
    %v5872 = vpop.f32.mrf.mxu0
    %v5873 = vadd.f32 %v5860, %v5872
    %v5874 = vpop.f32.mrf.mxu0
    %5875 = vdwg.mxu0
    %5876 = vst [vmem:[#allocation13] sm:$0xff] %v5873
    // Predicated region
    $region54: #{net_forward.1} parent=1 // pred_check
      _
    $region55: #{net_forward.1} parent=1 // pred_check_branch
      %5878 = sbr.rel (0) target = $region57
    $region56: #{net_forward.1} parent=1 // pred_region
      %5880 = vsyncadd [#allocation4], 0
      %s5882 = sshll.u32 [#allocation13], 4
      %s5883 = int_to_ptr.vmem [resolvable:$true] %s5882
      %s5884 = sshll.u32 %s7, 4
      %s5885 = int_to_ptr.hbm [resolvable:$true] %s5884
      %5887 = dma.vmem_to_hbm [thread:$0]  %s5883, 128, %s5885, [#allocation4]
    $region57: #{net_forward.1} parent=1 // pred_fallthru
      _
    // Predicated region
    $region58: #{net_forward.1} parent=1 // pred_check
      _
    $region59: #{net_forward.1} parent=1 // pred_check_branch
      %5889 = sbr.rel (0) target = $region61
    $region60: #{net_forward.1} parent=1 // pred_region
      %5891 = dma.done [#allocation4], 128
    $region61: #{net_forward.1} parent=1 // pred_fallthru
      _
    %5892 = vsyncpa [#allocation3], 1
    %5893 = vsyncpa [#allocation6], 1
    %5894 = vsyncpa [#allocation9], 1
    %5895 = vsyncpa [#allocation12], 1
    %5896 = vsyncpa [#allocation4], 1

</llo_original>
